<compile_context>
chip_gen: v7x
topology: tpu7x:2x2x1
jax: 0.10.0
libtpu: 0.0.40
codegen_flags: <defaults>
</compile_context>

<pallas_src>
from functools import partial

import jax
import jax.numpy as jnp
from jax.experimental import pallas as pl
from jax.experimental.pallas import tpu as pltpu


def _round_up(x, m):
    return ((x + m - 1) // m) * m


# ----------------------------------------------------------------------------
# Pallas kernel: the full beam-search decode loop (all positions) in one call.
# ----------------------------------------------------------------------------
def _beam_decode_kernel(emb_ref, kt_ref, kv_ref, tmask_ref, wcat_ref, bg_ref,
                        wout_ref, bout_ref, h0_ref, c0_ref,
                        words_ref, bptr_ref,
                        h_scr, c_scr, tok_scr, psc_scr, xcat_scr,
                        *, batch, beam, hp, vp, max_length, sos_idx):
    BB = batch * beam
    NEG = jnp.float32(-1e30)

    # resident decoder state (persists across the in-kernel time loop)
    h_scr[...] = h0_ref[...]
    c_scr[...] = c0_ref[...]
    tok_scr[...] = jnp.full((BB, 1), sos_idx, dtype=jnp.int32)
    psc_scr[...] = jnp.zeros((BB, 1), dtype=jnp.float32)

    vid = jax.lax.broadcasted_iota(jnp.int32, (BB, vp), 1)    # vocab lane ids
    vid_f = vid.astype(jnp.float32)
    rid = jax.lax.broadcasted_iota(jnp.int32, (BB, vp), 0)    # row ids
    sub1 = jax.lax.broadcasted_iota(jnp.int32, (BB, 1), 0)    # row ids (column)
    row1 = jax.lax.broadcasted_iota(jnp.int32, (1, BB), 1)    # row ids (row)
    beam_col = jnp.mod(sub1, beam)

    def step(pos, carry):
        h = h_scr[...]                 # (BB, Hp) f32
        c = c_scr[...]                 # (BB, Hp) f32
        cur_tok = tok_scr[...]         # (BB, 1) int32
        prev_sc = psc_scr[...]         # (BB, 1) f32

        # ---- token embedding: one-hot @ table (exact for 0/1, runs on MXU) ----
        onehot = (vid == cur_tok).astype(jnp.bfloat16)              # (BB, Vp)
        emb = jnp.dot(onehot, emb_ref[...],
                      preferred_element_type=jnp.float32)           # (BB, Hp)

        hq = h.astype(jnp.bfloat16)[:, None, :]                     # (BB,1,Hp)

        # ---- textual attention (length mask folded into additive tmask) ----
        kt = kt_ref[...]                                            # (BB,S,Hp) bf16
        sc_t = jnp.einsum('bqh,bsh->bqs', hq, kt,
                          preferred_element_type=jnp.float32)[:, 0, :]
        sc_t = sc_t + tmask_ref[...]
        sc_t = sc_t - jnp.max(sc_t, axis=-1, keepdims=True)
        p_t = jnp.exp(sc_t)
        p_t = p_t * pl.reciprocal(jnp.sum(p_t, axis=-1, keepdims=True),
                                  approx=True)
        ctx_t = jnp.einsum('bqs,bsh->bqh',
                           p_t[:, None, :].astype(jnp.bfloat16), kt,
                           preferred_element_type=jnp.float32)[:, 0, :]

        # ---- visual attention ----
        kv = kv_ref[...]                                            # (BB,Vv,Hp) bf16
        sc_v = jnp.einsum('bqh,bvh->bqv', hq, kv,
                          preferred_element_type=jnp.float32)[:, 0, :]
        sc_v = sc_v - jnp.max(sc_v, axis=-1, keepdims=True)
        p_v = jnp.exp(sc_v)
        p_v = p_v * pl.reciprocal(jnp.sum(p_v, axis=-1, keepdims=True),
                                  approx=True)
        ctx_v = jnp.einsum('bqv,bvh->bqh',
                           p_v[:, None, :].astype(jnp.bfloat16), kv,
                           preferred_element_type=jnp.float32)[:, 0, :]

        # ---- fused LSTM cell: single [emb|ctx_t|ctx_v|h] @ Wcat matmul ----
        xcat_scr[:, 0 * hp:1 * hp] = emb.astype(jnp.bfloat16)
        xcat_scr[:, 1 * hp:2 * hp] = ctx_t.astype(jnp.bfloat16)
        xcat_scr[:, 2 * hp:3 * hp] = ctx_v.astype(jnp.bfloat16)
        xcat_scr[:, 3 * hp:4 * hp] = h.astype(jnp.bfloat16)
        gates = jnp.dot(xcat_scr[...], wcat_ref[...],
                        preferred_element_type=jnp.float32) + bg_ref[...]
        i_g = jax.nn.sigmoid(gates[:, 0 * hp:1 * hp])
        f_g = jax.nn.sigmoid(gates[:, 1 * hp:2 * hp])
        g_g = jnp.tanh(gates[:, 2 * hp:3 * hp])
        o_g = jax.nn.sigmoid(gates[:, 3 * hp:4 * hp])
        c_new = f_g * c + i_g * g_g
        h_new = o_g * jnp.tanh(c_new)

        # ---- vocab projection + log-softmax (special-token mask folded in bias) ----
        logits = jnp.dot(h_new.astype(jnp.bfloat16), wout_ref[...],
                         preferred_element_type=jnp.float32) + bout_ref[...]
        m = jnp.max(logits, axis=-1, keepdims=True)
        lse = jnp.log(jnp.sum(jnp.exp(logits - m), axis=-1, keepdims=True)) + m
        logp = logits - lse                                         # (BB, Vp)

        # ---- beam search: per batch, top-`beam` over (beam rows x vocab) ----
        wp = logp + prev_sc
        allow = jnp.logical_or(pos > 0, beam_col == 0)   # step 0: only beam-0 rows
        wp = jnp.where(allow, wp, NEG)

        sel_w = [None] * BB   # chosen word per destination row       (1,1) i32
        sel_r = [None] * BB   # source row (backpointer) per dst row  (1,1) i32
        sel_s = [None] * BB   # cumulative score per dst row          (1,1) f32
        for k in range(beam):
            row_max = jnp.max(wp, axis=-1, keepdims=True)                  # (BB,1)
            row_arg = jnp.min(jnp.where(wp >= row_max, vid_f, float(vp)),
                              axis=-1, keepdims=True).astype(jnp.int32)    # (BB,1)
            for b in range(batch):
                base = b * beam
                best_v = row_max[base:base + 1, :]
                best_w = row_arg[base:base + 1, :]
                best_r = jnp.full((1, 1), base, dtype=jnp.int32)
                for j in range(1, beam):
                    vj = row_max[base + j:base + j + 1, :]
                    better = vj > best_v
                    best_v = jnp.where(better, vj, best_v)
                    best_w = jnp.where(better,
                                       row_arg[base + j:base + j + 1, :], best_w)
                    best_r = jnp.where(better,
                                       jnp.full((1, 1), base + j, jnp.int32),
                                       best_r)
                dst = base + k
                sel_w[dst], sel_r[dst], sel_s[dst] = best_w, best_r, best_v
                # knock out the chosen (row, word) cell before the next pick
                hit = jnp.logical_and(rid == best_r, vid == best_w)
                wp = jnp.where(hit, NEG, wp)

        # assemble per-row vectors from the (1,1) selections
        new_word = jnp.zeros((BB, 1), jnp.int32)
        src_col = jnp.zeros((BB, 1), jnp.int32)
        new_sc = jnp.zeros((BB, 1), jnp.float32)
        word_row = jnp.zeros((1, BB), jnp.int32)
        bptr_row = jnp.zeros((1, BB), jnp.int32)
        for r in range(BB):
            new_word = jnp.where(sub1 == r, sel_w[r], new_word)
            src_col = jnp.where(sub1 == r, sel_r[r], src_col)
            new_sc = jnp.where(sub1 == r, sel_s[r], new_sc)
            word_row = jnp.where(row1 == r, sel_w[r], word_row)
            bptr_row = jnp.where(row1 == r, sel_r[r], bptr_row)

        # re-order decoder state to candidate order (exact select-based gather)
        h_perm = jnp.zeros_like(h_new)
        c_perm = jnp.zeros_like(c_new)
        for s in range(BB):
            pick = src_col == s                                     # (BB,1)
            h_perm = h_perm + jnp.where(pick, h_new[s:s + 1, :], 0.0)
            c_perm = c_perm + jnp.where(pick, c_new[s:s + 1, :], 0.0)

        h_scr[...] = h_perm
        c_scr[...] = c_perm
        tok_scr[...] = new_word
        psc_scr[...] = new_sc
        words_ref[pl.ds(pos, 1), :] = word_row
        bptr_ref[pl.ds(pos, 1), :] = bptr_row
        return carry

    jax.lax.fori_loop(0, max_length, step, 0)


def _beam_decode(emb, kt, kv, tmask, wcat, bg, wout, bout, h0, c0, *,
                 batch, beam, max_length, sos_idx):
    BB, hp = h0.shape
    vp = wout.shape[1]
    assert BB == batch * beam
    kernel = partial(_beam_decode_kernel, batch=batch, beam=beam, hp=hp, vp=vp,
                     max_length=max_length, sos_idx=sos_idx)
    vmem = pl.BlockSpec(memory_space=pltpu.MemorySpace.VMEM)
    operands = (emb, kt, kv, tmask, wcat, bg, wout, bout, h0, c0)
    op_bytes = sum(int(a.size) * a.dtype.itemsize for a in operands)
    vmem_limit = int(min(96 * 1024 * 1024, max(8 * 1024 * 1024, 4 * op_bytes)))
    return pl.pallas_call(
        kernel,
        out_shape=(jax.ShapeDtypeStruct((max_length, BB), jnp.int32),   # words
                   jax.ShapeDtypeStruct((max_length, BB), jnp.int32)),  # backptrs
        in_specs=[vmem] * len(operands),
        out_specs=(vmem, vmem),
        scratch_shapes=[
            pltpu.VMEM((BB, hp), jnp.float32),       # h
            pltpu.VMEM((BB, hp), jnp.float32),       # c
            pltpu.VMEM((BB, 1), jnp.int32),          # current token per row
            pltpu.VMEM((BB, 1), jnp.float32),        # running beam score per row
            pltpu.VMEM((BB, 4 * hp), jnp.bfloat16),  # fused LSTM input [e|t|v|h]
        ],
        compiler_params=pltpu.CompilerParams(vmem_limit_bytes=vmem_limit),
    )(*operands)


# ----------------------------------------------------------------------------
# Synthetic model (plain-JAX glue; the abstract `self.model` of the module).
# ----------------------------------------------------------------------------
def init_params(key, vocab, H, d_sit):
    ks = jax.random.split(key, 16)
    s = 0.1
    n = jax.random.normal
    return dict(
        embedding=n(ks[0], (vocab, H), jnp.float32) * s,
        w_enc=n(ks[1], (H, H), jnp.float32) * s,
        w_sit=n(ks[2], (d_sit, H), jnp.float32) * s,
        w_key_t=n(ks[3], (H, H), jnp.float32) * s,
        w_key_v=n(ks[4], (H, H), jnp.float32) * s,
        w_e2d=n(ks[5], (H, H), jnp.float32) * s,
        b_e2d=jnp.zeros((H,), jnp.float32),
        w_e=n(ks[6], (H, 4 * H), jnp.float32) * s,
        w_t=n(ks[7], (H, 4 * H), jnp.float32) * s,
        w_v=n(ks[8], (H, 4 * H), jnp.float32) * s,
        w_hh=n(ks[9], (H, 4 * H), jnp.float32) * s,
        b_g=jnp.zeros((1, 4 * H), jnp.float32),
        w_out=n(ks[10], (H, vocab), jnp.float32) * s,
        b_out=jnp.zeros((1, vocab), jnp.float32),
    )


def encode_input(params, input_seq, input_lengths, situation):
    # commands -> (B, S, H); situations -> (B, Vv, H); pooled hidden -> (B, H)
    cmd_emb = params["embedding"][input_seq]
    enc_cmds = jnp.tanh(cmd_emb @ params["w_enc"])
    enc_sit = jnp.tanh(situation @ params["w_sit"])
    S = input_seq.shape[1]
    mask = (jnp.arange(S)[None, :] < input_lengths[:, None]).astype(jnp.float32)
    hidden_states = (enc_cmds * mask[..., None]).sum(axis=1) / \
        jnp.maximum(input_lengths[:, None].astype(jnp.float32), 1.0)
    return enc_cmds, enc_sit, hidden_states


# ----------------------------------------------------------------------------
# SequenceGenerator.forward equivalent.
# ----------------------------------------------------------------------------
def sequence_generator_forward(params, batch_data, *, beam_size, max_length,
                               pad_idx=0, sos_idx=1, eos_idx=2,
                               required_length_list=(), force_align=True):
    (input_sequence, input_lengths, _derivation_spec, situation,
     _situation_spec, _target_sequence, _target_lengths,
     _agent_positions, _target_positions) = batch_data

    input_lengths = jnp.asarray(input_lengths, dtype=jnp.int32)
    batch_size, seq_len = input_sequence.shape
    BB = batch_size * beam_size
    H = params["w_hh"].shape[0]
    vocab = params["w_out"].shape[1]
    Hp = _round_up(H, 128)
    Vp = _round_up(vocab, 128)

    # ---- one-time encoder + key projections (the abstract `self.model`) ----
    enc_cmds, enc_sit, hidden_states = encode_input(
        params, input_sequence, input_lengths, situation)
    kt = enc_cmds @ params["w_key_t"]                            # (B, S, H)
    kv = enc_sit @ params["w_key_v"]                             # (B, Vv, H)
    h0 = jnp.tanh(hidden_states @ params["w_e2d"] + params["b_e2d"])   # (B, H)

    new_order = jnp.repeat(jnp.arange(batch_size), beam_size)
    kt = kt[new_order]
    kv = kv[new_order]
    h0 = h0[new_order]
    lens = input_lengths[new_order]

    # ---- one-time padding to TPU tiles (zero pad -> numerically identical) ----
    def pad_last(x, to):
        return jnp.pad(x, [(0, 0)] * (x.ndim - 1) + [(0, to - x.shape[-1])])

    kt_p = pad_last(kt, Hp).astype(jnp.bfloat16)                 # (BB, S, Hp)
    kv_p = pad_last(kv, Hp).astype(jnp.bfloat16)                 # (BB, Vv, Hp)
    h0_p = pad_last(h0, Hp).astype(jnp.float32)                  # (BB, Hp)
    c0_p = jnp.zeros_like(h0_p)
    tmask = jnp.where(jnp.arange(seq_len)[None, :] < lens[:, None],
                      0.0, -1e9).astype(jnp.float32)             # (BB, S), finite

    emb_p = jnp.zeros((Vp, Hp), jnp.float32).at[:vocab, :H].set(
        params["embedding"]).astype(jnp.bfloat16)

    # fused + padded gate weights: row blocks = [emb|ctx_t|ctx_v|h], cols = [i|f|g|o]
    wcat = jnp.zeros((4 * Hp, 4 * Hp), jnp.float32)
    for a, name in enumerate(("w_e", "w_t", "w_v", "w_hh")):
        W = params[name]                                          # (H, 4H)
        for g in range(4):
            wcat = wcat.at[a * Hp:a * Hp + H, g * Hp:g * Hp + H].set(
                W[:, g * H:(g + 1) * H])
    wcat = wcat.astype(jnp.bfloat16)
    bg = jnp.zeros((1, 4 * Hp), jnp.float32)
    for g in range(4):
        bg = bg.at[0, g * Hp:g * Hp + H].set(params["b_g"][0, g * H:(g + 1) * H])

    # output projection; pad/sos/eos (+vocab padding) masks folded into the bias
    wout_p = jnp.zeros((Hp, Vp), jnp.float32).at[:H, :vocab].set(
        params["w_out"]).astype(jnp.bfloat16)
    bout_p = jnp.full((1, Vp), -1e30, jnp.float32).at[0, :vocab].set(
        params["b_out"][0])
    masked_tokens = [pad_idx, sos_idx] + ([eos_idx] if force_align else [])
    for t in masked_tokens:
        bout_p = bout_p.at[0, t].set(-1e30)

    # ---- single fused Pallas kernel: all decode steps + in-kernel beam search ----
    words, bptr = _beam_decode(
        emb_p, kt_p, kv_p, tmask, wcat, bg, wout_p, bout_p, h0_p, c0_p,
        batch=batch_size, beam=beam_size, max_length=max_length,
        sos_idx=sos_idx)

    # ---- backtrace (tiny, plain JAX): rebuild the permuted token histories ----
    def reconstruct(upto):
        cur = jnp.arange(BB)
        cols = [jnp.full((BB,), sos_idx, jnp.int32)] + [None] * upto
        for p in range(upto - 1, -1, -1):
            cols[p + 1] = words[p][cur]
            cur = bptr[p][cur]
        return jnp.stack(cols, axis=1)                           # (BB, upto+1)

    generated_tokens = reconstruct(max_length)
    decode_dict = {}
    for L in required_length_list:
        if 1 <= L <= max_length:
            decode_dict[L] = reconstruct(L)[:, 1:].reshape(
                batch_size, beam_size, -1)

    # PyTorch quirk kept: `final_scores = scores[:, position + 1]` reads a column
    # never written inside the loop -> zeros, so argmax picks beam 0 (which is
    # also the top-ranked candidate from top-k).
    final_scores = jnp.zeros((BB,), jnp.float32)
    best_beam = jnp.argmax(final_scores.reshape(batch_size, beam_size), axis=-1)
    gen = generated_tokens.reshape(batch_size, beam_size, -1)
    best_sentences = gen[jnp.arange(batch_size), best_beam]
    # TODO(synk): the all-EOS early-exit of the PyTorch loop is not replicated in
    # the fused kernel; with force_align=True (EOS masked out) it is unreachable.
    return best_sentences[:, 1:], decode_dict


# ----------------------------------------------------------------------------
if __name__ == "__main__":
    key = jax.random.PRNGKey(0)
    kp, kseq, ksit = jax.random.split(key, 3)

    # small shapes consistent with the module; beam_size=4 -> BB=8 (sublane aligned)
    batch_size, beam_size, max_length = 2, 4, 8
    vocab, H, S, Vv, d_sit = 20, 32, 8, 4, 16

    params = init_params(kp, vocab, H, d_sit)

    input_sequence = jax.random.randint(kseq, (batch_size, S), 3, vocab,
                                        dtype=jnp.int32)
    input_lengths = [8, 5]
    situation = jax.random.normal(ksit, (batch_size, Vv, d_sit), jnp.float32)

    batch_data = (input_sequence, input_lengths, None, situation, None,
                  None, None, None, None)

    best_sentences, decode_dict = sequence_generator_forward(
        params, batch_data, beam_size=beam_size, max_length=max_length,
        pad_idx=0, sos_idx=1, eos_idx=2,
        required_length_list=(), force_align=True)

    jax.block_until_ready(best_sentences)
    assert best_sentences.shape == (batch_size, max_length)
    print("KERNEL_OK")
</pallas_src>

<mosaic_0001>
module attributes {stable_mosaic.version = 11 : i64} {
  func.func @_beam_decode_kernel(%arg0: memref<128x128xbf16, #tpu.memory_space<vmem>>, %arg1: memref<8x8x128xbf16, #tpu.memory_space<vmem>>, %arg2: memref<8x4x128xbf16, #tpu.memory_space<vmem>>, %arg3: memref<8x8xf32, #tpu.memory_space<vmem>>, %arg4: memref<512x512xbf16, #tpu.memory_space<vmem>>, %arg5: memref<1x512xf32, #tpu.memory_space<vmem>>, %arg6: memref<128x128xbf16, #tpu.memory_space<vmem>>, %arg7: memref<1x128xf32, #tpu.memory_space<vmem>>, %arg8: memref<8x128xf32, #tpu.memory_space<vmem>>, %arg9: memref<8x128xf32, #tpu.memory_space<vmem>>, %arg10: memref<8x8xi32, #tpu.memory_space<vmem>>, %arg11: memref<8x8xi32, #tpu.memory_space<vmem>>, %arg12: memref<8x128xf32, #tpu.memory_space<vmem>>, %arg13: memref<8x128xf32, #tpu.memory_space<vmem>>, %arg14: memref<8x1xi32, #tpu.memory_space<vmem>>, %arg15: memref<8x1xf32, #tpu.memory_space<vmem>>, %arg16: memref<8x512xbf16, #tpu.memory_space<vmem>>) attributes {dimension_semantics = [], scalar_prefetch = 0 : i64, scratch_operands = 5 : i64, tpu.core_type = #tpu.core_type<tc>} {
    %c0 = arith.constant 0 : index
    %c0_0 = arith.constant 0 : index
    %0 = vector.load %arg8[%c0, %c0_0] : memref<8x128xf32, #tpu.memory_space<vmem>>, vector<8x128xf32>
    %c0_1 = arith.constant 0 : index
    %c0_2 = arith.constant 0 : index
    %1 = vector.load %arg12[%c0_1, %c0_2] : memref<8x128xf32, #tpu.memory_space<vmem>>, vector<8x128xf32>
    tpu.vector_store %arg12[%c0_1, %c0_2], %0 {strides = array<i32>} : memref<8x128xf32, #tpu.memory_space<vmem>>, vector<8x128xf32>,
    %c0_3 = arith.constant 0 : index
    %c0_4 = arith.constant 0 : index
    %2 = vector.load %arg9[%c0_3, %c0_4] : memref<8x128xf32, #tpu.memory_space<vmem>>, vector<8x128xf32>
    %c0_5 = arith.constant 0 : index
    %c0_6 = arith.constant 0 : index
    %3 = vector.load %arg13[%c0_5, %c0_6] : memref<8x128xf32, #tpu.memory_space<vmem>>, vector<8x128xf32>
    tpu.vector_store %arg13[%c0_5, %c0_6], %2 {strides = array<i32>} : memref<8x128xf32, #tpu.memory_space<vmem>>, vector<8x128xf32>,
    %c1_i32 = arith.constant 1 : i32
    %4 = vector.broadcast %c1_i32 : i32 to vector<8x1xi32>
    %c0_7 = arith.constant 0 : index
    %c0_8 = arith.constant 0 : index
    %5 = vector.load %arg14[%c0_7, %c0_8] : memref<8x1xi32, #tpu.memory_space<vmem>>, vector<8x1xi32>
    tpu.vector_store %arg14[%c0_7, %c0_8], %4 {strides = array<i32>} : memref<8x1xi32, #tpu.memory_space<vmem>>, vector<8x1xi32>,
    %cst = arith.constant 0.000000e+00 : f32
    %6 = vector.broadcast %cst : f32 to vector<8x1xf32>
    %c0_9 = arith.constant 0 : index
    %c0_10 = arith.constant 0 : index
    %7 = vector.load %arg15[%c0_9, %c0_10] : memref<8x1xf32, #tpu.memory_space<vmem>>, vector<8x1xf32>
    tpu.vector_store %arg15[%c0_9, %c0_10], %6 {strides = array<i32>} : memref<8x1xf32, #tpu.memory_space<vmem>>, vector<8x1xf32>,
    %8 = tpu.iota {dimensions = array<i32: 1>} : vector<8x128xi32>
    %9 = arith.sitofp %8 : vector<8x128xi32> to vector<8x128xf32>
    %10 = tpu.iota {dimensions = array<i32: 0>} : vector<8x128xi32>
    %11 = tpu.iota {dimensions = array<i32: 0>} : vector<8x1xi32>
    %12 = tpu.iota {dimensions = array<i32: 1>} : vector<1x8xi32>
    %c4_i32 = arith.constant 4 : i32
    %c0_i32 = arith.constant 0 : i32
    %13 = arith.cmpi eq, %c4_i32, %c0_i32 : i32
    %c1_i32_11 = arith.constant 1 : i32
    %14 = arith.select %13, %c1_i32_11, %c4_i32 : i32
    %15 = vector.broadcast %14 : i32 to vector<8x1xi32>
    %16 = arith.remsi %11, %15 : vector<8x1xi32>
    %c0_i32_12 = arith.constant 0 : i32
    %17 = vector.broadcast %c0_i32_12 : i32 to vector<8x1xi32>
    %18 = arith.cmpi ne, %16, %17 : vector<8x1xi32>
    %c0_i32_13 = arith.constant 0 : i32
    %19 = vector.broadcast %c0_i32_13 : i32 to vector<8x1xi32>
    %20 = arith.cmpi slt, %16, %19 : vector<8x1xi32>
    %c0_i32_14 = arith.constant 0 : i32
    %21 = arith.cmpi slt, %14, %c0_i32_14 : i32
    %22 = vector.broadcast %21 : i1 to vector<8x1xi1>
    %23 = vector.broadcast %22 : vector<8x1xi1> to vector<8x1xi1>
    %24 = arith.xori %20, %23 : vector<8x1xi1>
    %25 = arith.andi %24, %18 : vector<8x1xi1>
    %26 = vector.broadcast %14 : i32 to vector<8x1xi32>
    %27 = arith.addi %16, %26 : vector<8x1xi32>
    %28 = arith.select %25, %27, %16 : vector<8x1xi1>, vector<8x1xi32>
    %cst_15 = arith.constant -1.000000e+30 : f32
    %c0_i32_16 = arith.constant 0 : i32
    %c8_i32 = arith.constant 8 : i32
    %29 = arith.addi %c0_i32_16, %c8_i32 : i32
    %c1_i32_17 = arith.constant 1 : i32
    scf.for %arg17 = %c0_i32_16 to %29 step %c1_i32_17  : i32 {
      %c0_19 = arith.constant 0 : index
      %c0_20 = arith.constant 0 : index
      %30 = vector.load %arg12[%c0_19, %c0_20] : memref<8x128xf32, #tpu.memory_space<vmem>>, vector<8x128xf32>
      %c0_21 = arith.constant 0 : index
      %c0_22 = arith.constant 0 : index
      %31 = vector.load %arg13[%c0_21, %c0_22] : memref<8x128xf32, #tpu.memory_space<vmem>>, vector<8x128xf32>
      %c0_23 = arith.constant 0 : index
      %c0_24 = arith.constant 0 : index
      %32 = vector.load %arg14[%c0_23, %c0_24] : memref<8x1xi32, #tpu.memory_space<vmem>>, vector<8x1xi32>
      %c0_25 = arith.constant 0 : index
      %c0_26 = arith.constant 0 : index
      %33 = vector.load %arg15[%c0_25, %c0_26] : memref<8x1xf32, #tpu.memory_space<vmem>>, vector<8x1xf32>
      %34 = vector.broadcast %32 : vector<8x1xi32> to vector<8x128xi32>
      %35 = arith.cmpi eq, %8, %34 : vector<8x128xi32>
      %36 = arith.extui %35 : vector<8x128xi1> to vector<8x128xi32>
      %37 = arith.sitofp %36 : vector<8x128xi32> to vector<8x128xf32>
      %38 = arith.truncf %37 : vector<8x128xf32> to vector<8x128xbf16>
      %c0_27 = arith.constant 0 : index
      %c0_28 = arith.constant 0 : index
      %39 = vector.load %arg0[%c0_27, %c0_28] : memref<128x128xbf16, #tpu.memory_space<vmem>>, vector<128x128xbf16>
      %cst_29 = arith.constant dense<0.000000e+00> : vector<8x128xf32>
      %40 = tpu.matmul %38, %39, %cst_29 {dimension_numbers = #tpu.dot_dimension_numbers<[1], [0], [0], [1], [0, 0, 1, 1], [], []>} : vector<8x128xbf16>, vector<128x128xbf16>, vector<8x128xf32> -> vector<8x128xf32>
      %41 = arith.truncf %30 : vector<8x128xf32> to vector<8x128xbf16>
      %42 = vector.shape_cast %41 : vector<8x128xbf16> to vector<8x1x128xbf16>
      %c0_30 = arith.constant 0 : index
      %c0_31 = arith.constant 0 : index
      %c0_32 = arith.constant 0 : index
      %43 = vector.load %arg1[%c0_30, %c0_31, %c0_32] : memref<8x8x128xbf16, #tpu.memory_space<vmem>>, vector<8x8x128xbf16>
      "tpu.trace_start"() <{level = 10 : i32, message = "bqh,bsh->bqs"}> : () -> ()
      %cst_33 = arith.constant dense<0.000000e+00> : vector<8x1x8xf32>
      %44 = tpu.matmul %42, %43, %cst_33 {dimension_numbers = #tpu.dot_dimension_numbers<[2], [2], [1], [1], [0, 0, 0, 1, 1, 1], [0], [0]>} : vector<8x1x128xbf16>, vector<8x8x128xbf16>, vector<8x1x8xf32> -> vector<8x1x8xf32>
      "tpu.trace_stop"() : () -> ()
      %45 = vector.shape_cast %44 : vector<8x1x8xf32> to vector<8x8xf32>
      %c0_34 = arith.constant 0 : index
      %c0_35 = arith.constant 0 : index
      %46 = vector.load %arg3[%c0_34, %c0_35] : memref<8x8xf32, #tpu.memory_space<vmem>>, vector<8x8xf32>
      %47 = arith.addf %45, %46 : vector<8x8xf32>
      %cst_36 = arith.constant dense<0xFF800000> : vector<8xf32>
      %48 = vector.multi_reduction <maximumf>, %47, %cst_36 [1] : vector<8x8xf32> to vector<8xf32>
      %49 = vector.shape_cast %48 : vector<8xf32> to vector<8x1xf32>
      %50 = vector.broadcast %49 : vector<8x1xf32> to vector<8x8xf32>
      %51 = arith.subf %47, %50 : vector<8x8xf32>
      %52 = math.exp %51 : vector<8x8xf32>
      %cst_37 = arith.constant dense<0.000000e+00> : vector<8xf32>
      %53 = vector.multi_reduction <add>, %52, %cst_37 [1] : vector<8x8xf32> to vector<8xf32>
      %54 = vector.shape_cast %53 : vector<8xf32> to vector<8x1xf32>
      %55 = tpu.reciprocal %54 {approx = true} : vector<8x1xf32> -> vector<8x1xf32>
      %56 = vector.broadcast %55 : vector<8x1xf32> to vector<8x8xf32>
      %57 = arith.mulf %52, %56 : vector<8x8xf32>
      %58 = vector.shape_cast %57 : vector<8x8xf32> to vector<8x1x8xf32>
      %59 = arith.truncf %58 : vector<8x1x8xf32> to vector<8x1x8xbf16>
      "tpu.trace_start"() <{level = 10 : i32, message = "bqs,bsh->bqh"}> : () -> ()
      %cst_38 = arith.constant dense<0.000000e+00> : vector<8x1x128xf32>
      %60 = tpu.matmul %59, %43, %cst_38 {dimension_numbers = #tpu.dot_dimension_numbers<[2], [1], [1], [2], [0, 0, 0, 1, 1, 2], [0], [0]>} : vector<8x1x8xbf16>, vector<8x8x128xbf16>, vector<8x1x128xf32> -> vector<8x1x128xf32>
      "tpu.trace_stop"() : () -> ()
      %61 = vector.shape_cast %60 : vector<8x1x128xf32> to vector<8x128xf32>
      %c0_39 = arith.constant 0 : index
      %c0_40 = arith.constant 0 : index
      %c0_41 = arith.constant 0 : index
      %62 = vector.load %arg2[%c0_39, %c0_40, %c0_41] : memref<8x4x128xbf16, #tpu.memory_space<vmem>>, vector<8x4x128xbf16>
      "tpu.trace_start"() <{level = 10 : i32, message = "bqh,bvh->bqv"}> : () -> ()
      %cst_42 = arith.constant dense<0.000000e+00> : vector<8x1x4xf32>
      %63 = tpu.matmul %42, %62, %cst_42 {dimension_numbers = #tpu.dot_dimension_numbers<[2], [2], [1], [1], [0, 0, 0, 1, 1, 1], [0], [0]>} : vector<8x1x128xbf16>, vector<8x4x128xbf16>, vector<8x1x4xf32> -> vector<8x1x4xf32>
      "tpu.trace_stop"() : () -> ()
      %64 = vector.shape_cast %63 : vector<8x1x4xf32> to vector<8x4xf32>
      %cst_43 = arith.constant dense<0xFF800000> : vector<8xf32>
      %65 = vector.multi_reduction <maximumf>, %64, %cst_43 [1] : vector<8x4xf32> to vector<8xf32>
      %66 = vector.shape_cast %65 : vector<8xf32> to vector<8x1xf32>
      %67 = vector.broadcast %66 : vector<8x1xf32> to vector<8x4xf32>
      %68 = arith.subf %64, %67 : vector<8x4xf32>
      %69 = math.exp %68 : vector<8x4xf32>
      %cst_44 = arith.constant dense<0.000000e+00> : vector<8xf32>
      %70 = vector.multi_reduction <add>, %69, %cst_44 [1] : vector<8x4xf32> to vector<8xf32>
      %71 = vector.shape_cast %70 : vector<8xf32> to vector<8x1xf32>
      %72 = tpu.reciprocal %71 {approx = true} : vector<8x1xf32> -> vector<8x1xf32>
      %73 = vector.broadcast %72 : vector<8x1xf32> to vector<8x4xf32>
      %74 = arith.mulf %69, %73 : vector<8x4xf32>
      %75 = vector.shape_cast %74 : vector<8x4xf32> to vector<8x1x4xf32>
      %76 = arith.truncf %75 : vector<8x1x4xf32> to vector<8x1x4xbf16>
      "tpu.trace_start"() <{level = 10 : i32, message = "bqv,bvh->bqh"}> : () -> ()
      %cst_45 = arith.constant dense<0.000000e+00> : vector<8x1x128xf32>
      %77 = tpu.matmul %76, %62, %cst_45 {dimension_numbers = #tpu.dot_dimension_numbers<[2], [1], [1], [2], [0, 0, 0, 1, 1, 2], [0], [0]>} : vector<8x1x4xbf16>, vector<8x4x128xbf16>, vector<8x1x128xf32> -> vector<8x1x128xf32>
      "tpu.trace_stop"() : () -> ()
      %78 = vector.shape_cast %77 : vector<8x1x128xf32> to vector<8x128xf32>
      %79 = arith.truncf %40 : vector<8x128xf32> to vector<8x128xbf16>
      %c0_46 = arith.constant 0 : index
      %c0_47 = arith.constant 0 : index
      %80 = vector.load %arg16[%c0_46, %c0_47] : memref<8x512xbf16, #tpu.memory_space<vmem>>, vector<8x128xbf16>
      tpu.vector_store %arg16[%c0_46, %c0_47], %79 {strides = array<i32>} : memref<8x512xbf16, #tpu.memory_space<vmem>>, vector<8x128xbf16>,
      %81 = arith.truncf %61 : vector<8x128xf32> to vector<8x128xbf16>
      %c0_48 = arith.constant 0 : index
      %c128 = arith.constant 128 : index
      %82 = vector.load %arg16[%c0_48, %c128] : memref<8x512xbf16, #tpu.memory_space<vmem>>, vector<8x128xbf16>
      tpu.vector_store %arg16[%c0_48, %c128], %81 {strides = array<i32>} : memref<8x512xbf16, #tpu.memory_space<vmem>>, vector<8x128xbf16>,
      %83 = arith.truncf %78 : vector<8x128xf32> to vector<8x128xbf16>
      %c0_49 = arith.constant 0 : index
      %c256 = arith.constant 256 : index
      %84 = vector.load %arg16[%c0_49, %c256] : memref<8x512xbf16, #tpu.memory_space<vmem>>, vector<8x128xbf16>
      tpu.vector_store %arg16[%c0_49, %c256], %83 {strides = array<i32>} : memref<8x512xbf16, #tpu.memory_space<vmem>>, vector<8x128xbf16>,
      %85 = arith.truncf %30 : vector<8x128xf32> to vector<8x128xbf16>
      %c0_50 = arith.constant 0 : index
      %c384 = arith.constant 384 : index
      %86 = vector.load %arg16[%c0_50, %c384] : memref<8x512xbf16, #tpu.memory_space<vmem>>, vector<8x128xbf16>
      tpu.vector_store %arg16[%c0_50, %c384], %85 {strides = array<i32>} : memref<8x512xbf16, #tpu.memory_space<vmem>>, vector<8x128xbf16>,
      %c0_51 = arith.constant 0 : index
      %c0_52 = arith.constant 0 : index
      %87 = vector.load %arg16[%c0_51, %c0_52] : memref<8x512xbf16, #tpu.memory_space<vmem>>, vector<8x512xbf16>
      %c0_53 = arith.constant 0 : index
      %c0_54 = arith.constant 0 : index
      %88 = vector.load %arg4[%c0_53, %c0_54] : memref<512x512xbf16, #tpu.memory_space<vmem>>, vector<512x512xbf16>
      %cst_55 = arith.constant dense<0.000000e+00> : vector<8x512xf32>
      %89 = tpu.matmul %87, %88, %cst_55 {dimension_numbers = #tpu.dot_dimension_numbers<[1], [0], [0], [1], [0, 0, 1, 1], [], []>} : vector<8x512xbf16>, vector<512x512xbf16>, vector<8x512xf32> -> vector<8x512xf32>
      %c0_56 = arith.constant 0 : index
      %c0_57 = arith.constant 0 : index
      %90 = vector.load %arg5[%c0_56, %c0_57] : memref<1x512xf32, #tpu.memory_space<vmem>>, vector<1x512xf32>
      %91 = vector.broadcast %90 : vector<1x512xf32> to vector<8x512xf32>
      %92 = arith.addf %89, %91 : vector<8x512xf32>
      %93 = vector.extract_strided_slice %92 {offsets = [0, 0], sizes = [8, 128], strides = [1, 1]} : vector<8x512xf32> to vector<8x128xf32>
      %94 = arith.negf %93 : vector<8x128xf32>
      %95 = math.exp %94 : vector<8x128xf32>
      %cst_58 = arith.constant 1.000000e+00 : f32
      %96 = vector.broadcast %cst_58 : f32 to vector<8x128xf32>
      %97 = arith.addf %96, %95 : vector<8x128xf32>
      %98 = arith.divf %96, %97 : vector<8x128xf32>
      %99 = vector.extract_strided_slice %92 {offsets = [0, 128], sizes = [8, 128], strides = [1, 1]} : vector<8x512xf32> to vector<8x128xf32>
      %100 = arith.negf %99 : vector<8x128xf32>
      %101 = math.exp %100 : vector<8x128xf32>
      %cst_59 = arith.constant 1.000000e+00 : f32
      %102 = vector.broadcast %cst_59 : f32 to vector<8x128xf32>
      %103 = arith.addf %102, %101 : vector<8x128xf32>
      %104 = arith.divf %102, %103 : vector<8x128xf32>
      %105 = vector.extract_strided_slice %92 {offsets = [0, 256], sizes = [8, 128], strides = [1, 1]} : vector<8x512xf32> to vector<8x128xf32>
      %106 = math.tanh %105 : vector<8x128xf32>
      %107 = vector.extract_strided_slice %92 {offsets = [0, 384], sizes = [8, 128], strides = [1, 1]} : vector<8x512xf32> to vector<8x128xf32>
      %108 = arith.negf %107 : vector<8x128xf32>
      %109 = math.exp %108 : vector<8x128xf32>
      %cst_60 = arith.constant 1.000000e+00 : f32
      %110 = vector.broadcast %cst_60 : f32 to vector<8x128xf32>
      %111 = arith.addf %110, %109 : vector<8x128xf32>
      %112 = arith.divf %110, %111 : vector<8x128xf32>
      %113 = arith.mulf %104, %31 : vector<8x128xf32>
      %114 = arith.mulf %98, %106 : vector<8x128xf32>
      %115 = arith.addf %113, %114 : vector<8x128xf32>
      %116 = math.tanh %115 : vector<8x128xf32>
      %117 = arith.mulf %112, %116 : vector<8x128xf32>
      %118 = arith.truncf %117 : vector<8x128xf32> to vector<8x128xbf16>
      %c0_61 = arith.constant 0 : index
      %c0_62 = arith.constant 0 : index
      %119 = vector.load %arg6[%c0_61, %c0_62] : memref<128x128xbf16, #tpu.memory_space<vmem>>, vector<128x128xbf16>
      %cst_63 = arith.constant dense<0.000000e+00> : vector<8x128xf32>
      %120 = tpu.matmul %118, %119, %cst_63 {dimension_numbers = #tpu.dot_dimension_numbers<[1], [0], [0], [1], [0, 0, 1, 1], [], []>} : vector<8x128xbf16>, vector<128x128xbf16>, vector<8x128xf32> -> vector<8x128xf32>
      %c0_64 = arith.constant 0 : index
      %c0_65 = arith.constant 0 : index
      %121 = vector.load %arg7[%c0_64, %c0_65] : memref<1x128xf32, #tpu.memory_space<vmem>>, vector<1x128xf32>
      %122 = vector.broadcast %121 : vector<1x128xf32> to vector<8x128xf32>
      %123 = arith.addf %120, %122 : vector<8x128xf32>
      %cst_66 = arith.constant dense<0xFF800000> : vector<8xf32>
      %124 = vector.multi_reduction <maximumf>, %123, %cst_66 [1] : vector<8x128xf32> to vector<8xf32>
      %125 = vector.shape_cast %124 : vector<8xf32> to vector<8x1xf32>
      %126 = vector.broadcast %125 : vector<8x1xf32> to vector<8x128xf32>
      %127 = arith.subf %123, %126 : vector<8x128xf32>
      %128 = math.exp %127 : vector<8x128xf32>
      %cst_67 = arith.constant dense<0.000000e+00> : vector<8xf32>
      %129 = vector.multi_reduction <add>, %128, %cst_67 [1] : vector<8x128xf32> to vector<8xf32>
      %130 = vector.shape_cast %129 : vector<8xf32> to vector<8x1xf32>
      %131 = math.log %130 : vector<8x1xf32>
      %132 = arith.addf %131, %125 : vector<8x1xf32>
      %133 = vector.broadcast %132 : vector<8x1xf32> to vector<8x128xf32>
      %134 = arith.subf %123, %133 : vector<8x128xf32>
      %135 = vector.broadcast %33 : vector<8x1xf32> to vector<8x128xf32>
      %136 = arith.addf %134, %135 : vector<8x128xf32>
      %c0_i32_68 = arith.constant 0 : i32
      %137 = arith.cmpi sgt, %arg17, %c0_i32_68 : i32
      %c0_i32_69 = arith.constant 0 : i32
      %138 = vector.broadcast %c0_i32_69 : i32 to vector<8x1xi32>
      %139 = arith.cmpi eq, %28, %138 : vector<8x1xi32>
      %140 = vector.broadcast %137 : i1 to vector<8x1xi1>
      %141 = arith.ori %140, %139 : vector<8x1xi1>
      %142 = vector.shape_cast %141 : vector<8x1xi1> to vector<8x1xi1>
      %143 = vector.broadcast %142 : vector<8x1xi1> to vector<8x128xi1>
      %144 = vector.broadcast %cst_15 : f32 to vector<8x128xf32>
      %145 = arith.select %143, %136, %144 : vector<8x128xi1>, vector<8x128xf32>
      %cst_70 = arith.constant dense<0xFF800000> : vector<8xf32>
      %146 = vector.multi_reduction <maximumf>, %145, %cst_70 [1] : vector<8x128xf32> to vector<8xf32>
      %147 = vector.shape_cast %146 : vector<8xf32> to vector<8x1xf32>
      %148 = vector.broadcast %147 : vector<8x1xf32> to vector<8x128xf32>
      %149 = arith.cmpf oge, %145, %148 : vector<8x128xf32>
      %cst_71 = arith.constant 1.280000e+02 : f32
      %150 = vector.broadcast %cst_71 : f32 to vector<8x128xf32>
      %151 = arith.select %149, %9, %150 : vector<8x128xi1>, vector<8x128xf32>
      %cst_72 = arith.constant dense<0x7F800000> : vector<8xf32>
      %152 = vector.multi_reduction <minimumf>, %151, %cst_72 [1] : vector<8x128xf32> to vector<8xf32>
      %153 = vector.shape_cast %152 : vector<8xf32> to vector<8x1xf32>
      %154 = arith.fptosi %153 : vector<8x1xf32> to vector<8x1xi32>
      %155 = vector.extract_strided_slice %147 {offsets = [0, 0], sizes = [1, 1], strides = [1, 1]} : vector<8x1xf32> to vector<1x1xf32>
      %156 = vector.extract_strided_slice %154 {offsets = [0, 0], sizes = [1, 1], strides = [1, 1]} : vector<8x1xi32> to vector<1x1xi32>
      %c0_i32_73 = arith.constant 0 : i32
      %157 = vector.broadcast %c0_i32_73 : i32 to vector<1x1xi32>
      %158 = vector.extract_strided_slice %147 {offsets = [1, 0], sizes = [1, 1], strides = [1, 1]} : vector<8x1xf32> to vector<1x1xf32>
      %159 = arith.cmpf ogt, %158, %155 : vector<1x1xf32>
      %160 = arith.select %159, %158, %155 : vector<1x1xi1>, vector<1x1xf32>
      %161 = vector.extract_strided_slice %154 {offsets = [1, 0], sizes = [1, 1], strides = [1, 1]} : vector<8x1xi32> to vector<1x1xi32>
      %162 = arith.select %159, %161, %156 : vector<1x1xi1>, vector<1x1xi32>
      %c1_i32_74 = arith.constant 1 : i32
      %163 = vector.broadcast %c1_i32_74 : i32 to vector<1x1xi32>
      %164 = arith.select %159, %163, %157 : vector<1x1xi1>, vector<1x1xi32>
      %165 = vector.extract_strided_slice %147 {offsets = [2, 0], sizes = [1, 1], strides = [1, 1]} : vector<8x1xf32> to vector<1x1xf32>
      %166 = arith.cmpf ogt, %165, %160 : vector<1x1xf32>
      %167 = arith.select %166, %165, %160 : vector<1x1xi1>, vector<1x1xf32>
      %168 = vector.extract_strided_slice %154 {offsets = [2, 0], sizes = [1, 1], strides = [1, 1]} : vector<8x1xi32> to vector<1x1xi32>
      %169 = arith.select %166, %168, %162 : vector<1x1xi1>, vector<1x1xi32>
      %c2_i32 = arith.constant 2 : i32
      %170 = vector.broadcast %c2_i32 : i32 to vector<1x1xi32>
      %171 = arith.select %166, %170, %164 : vector<1x1xi1>, vector<1x1xi32>
      %172 = vector.extract_strided_slice %147 {offsets = [3, 0], sizes = [1, 1], strides = [1, 1]} : vector<8x1xf32> to vector<1x1xf32>
      %173 = arith.cmpf ogt, %172, %167 : vector<1x1xf32>
      %174 = arith.select %173, %172, %167 : vector<1x1xi1>, vector<1x1xf32>
      %175 = vector.extract_strided_slice %154 {offsets = [3, 0], sizes = [1, 1], strides = [1, 1]} : vector<8x1xi32> to vector<1x1xi32>
      %176 = arith.select %173, %175, %169 : vector<1x1xi1>, vector<1x1xi32>
      %c3_i32 = arith.constant 3 : i32
      %177 = vector.broadcast %c3_i32 : i32 to vector<1x1xi32>
      %178 = arith.select %173, %177, %171 : vector<1x1xi1>, vector<1x1xi32>
      %179 = vector.broadcast %178 : vector<1x1xi32> to vector<8x128xi32>
      %180 = arith.cmpi eq, %10, %179 : vector<8x128xi32>
      %181 = vector.broadcast %176 : vector<1x1xi32> to vector<8x128xi32>
      %182 = arith.cmpi eq, %8, %181 : vector<8x128xi32>
      %183 = arith.andi %180, %182 : vector<8x128xi1>
      %184 = vector.broadcast %cst_15 : f32 to vector<8x128xf32>
      %185 = arith.select %183, %184, %145 : vector<8x128xi1>, vector<8x128xf32>
      %186 = vector.extract_strided_slice %147 {offsets = [4, 0], sizes = [1, 1], strides = [1, 1]} : vector<8x1xf32> to vector<1x1xf32>
      %187 = vector.extract_strided_slice %154 {offsets = [4, 0], sizes = [1, 1], strides = [1, 1]} : vector<8x1xi32> to vector<1x1xi32>
      %c4_i32_75 = arith.constant 4 : i32
      %188 = vector.broadcast %c4_i32_75 : i32 to vector<1x1xi32>
      %189 = vector.extract_strided_slice %147 {offsets = [5, 0], sizes = [1, 1], strides = [1, 1]} : vector<8x1xf32> to vector<1x1xf32>
      %190 = arith.cmpf ogt, %189, %186 : vector<1x1xf32>
      %191 = arith.select %190, %189, %186 : vector<1x1xi1>, vector<1x1xf32>
      %192 = vector.extract_strided_slice %154 {offsets = [5, 0], sizes = [1, 1], strides = [1, 1]} : vector<8x1xi32> to vector<1x1xi32>
      %193 = arith.select %190, %192, %187 : vector<1x1xi1>, vector<1x1xi32>
      %c5_i32 = arith.constant 5 : i32
      %194 = vector.broadcast %c5_i32 : i32 to vector<1x1xi32>
      %195 = arith.select %190, %194, %188 : vector<1x1xi1>, vector<1x1xi32>
      %196 = vector.extract_strided_slice %147 {offsets = [6, 0], sizes = [1, 1], strides = [1, 1]} : vector<8x1xf32> to vector<1x1xf32>
      %197 = arith.cmpf ogt, %196, %191 : vector<1x1xf32>
      %198 = arith.select %197, %196, %191 : vector<1x1xi1>, vector<1x1xf32>
      %199 = vector.extract_strided_slice %154 {offsets = [6, 0], sizes = [1, 1], strides = [1, 1]} : vector<8x1xi32> to vector<1x1xi32>
      %200 = arith.select %197, %199, %193 : vector<1x1xi1>, vector<1x1xi32>
      %c6_i32 = arith.constant 6 : i32
      %201 = vector.broadcast %c6_i32 : i32 to vector<1x1xi32>
      %202 = arith.select %197, %201, %195 : vector<1x1xi1>, vector<1x1xi32>
      %203 = vector.extract_strided_slice %147 {offsets = [7, 0], sizes = [1, 1], strides = [1, 1]} : vector<8x1xf32> to vector<1x1xf32>
      %204 = arith.cmpf ogt, %203, %198 : vector<1x1xf32>
      %205 = arith.select %204, %203, %198 : vector<1x1xi1>, vector<1x1xf32>
      %206 = vector.extract_strided_slice %154 {offsets = [7, 0], sizes = [1, 1], strides = [1, 1]} : vector<8x1xi32> to vector<1x1xi32>
      %207 = arith.select %204, %206, %200 : vector<1x1xi1>, vector<1x1xi32>
      %c7_i32 = arith.constant 7 : i32
      %208 = vector.broadcast %c7_i32 : i32 to vector<1x1xi32>
      %209 = arith.select %204, %208, %202 : vector<1x1xi1>, vector<1x1xi32>
      %210 = vector.broadcast %209 : vector<1x1xi32> to vector<8x128xi32>
      %211 = arith.cmpi eq, %10, %210 : vector<8x128xi32>
      %212 = vector.broadcast %207 : vector<1x1xi32> to vector<8x128xi32>
      %213 = arith.cmpi eq, %8, %212 : vector<8x128xi32>
      %214 = arith.andi %211, %213 : vector<8x128xi1>
      %215 = vector.broadcast %cst_15 : f32 to vector<8x128xf32>
      %216 = arith.select %214, %215, %185 : vector<8x128xi1>, vector<8x128xf32>
      %cst_76 = arith.constant dense<0xFF800000> : vector<8xf32>
      %217 = vector.multi_reduction <maximumf>, %216, %cst_76 [1] : vector<8x128xf32> to vector<8xf32>
      %218 = vector.shape_cast %217 : vector<8xf32> to vector<8x1xf32>
      %219 = vector.broadcast %218 : vector<8x1xf32> to vector<8x128xf32>
      %220 = arith.cmpf oge, %216, %219 : vector<8x128xf32>
      %cst_77 = arith.constant 1.280000e+02 : f32
      %221 = vector.broadcast %cst_77 : f32 to vector<8x128xf32>
      %222 = arith.select %220, %9, %221 : vector<8x128xi1>, vector<8x128xf32>
      %cst_78 = arith.constant dense<0x7F800000> : vector<8xf32>
      %223 = vector.multi_reduction <minimumf>, %222, %cst_78 [1] : vector<8x128xf32> to vector<8xf32>
      %224 = vector.shape_cast %223 : vector<8xf32> to vector<8x1xf32>
      %225 = arith.fptosi %224 : vector<8x1xf32> to vector<8x1xi32>
      %226 = vector.extract_strided_slice %218 {offsets = [0, 0], sizes = [1, 1], strides = [1, 1]} : vector<8x1xf32> to vector<1x1xf32>
      %227 = vector.extract_strided_slice %225 {offsets = [0, 0], sizes = [1, 1], strides = [1, 1]} : vector<8x1xi32> to vector<1x1xi32>
      %c0_i32_79 = arith.constant 0 : i32
      %228 = vector.broadcast %c0_i32_79 : i32 to vector<1x1xi32>
      %229 = vector.extract_strided_slice %218 {offsets = [1, 0], sizes = [1, 1], strides = [1, 1]} : vector<8x1xf32> to vector<1x1xf32>
      %230 = arith.cmpf ogt, %229, %226 : vector<1x1xf32>
      %231 = arith.select %230, %229, %226 : vector<1x1xi1>, vector<1x1xf32>
      %232 = vector.extract_strided_slice %225 {offsets = [1, 0], sizes = [1, 1], strides = [1, 1]} : vector<8x1xi32> to vector<1x1xi32>
      %233 = arith.select %230, %232, %227 : vector<1x1xi1>, vector<1x1xi32>
      %c1_i32_80 = arith.constant 1 : i32
      %234 = vector.broadcast %c1_i32_80 : i32 to vector<1x1xi32>
      %235 = arith.select %230, %234, %228 : vector<1x1xi1>, vector<1x1xi32>
      %236 = vector.extract_strided_slice %218 {offsets = [2, 0], sizes = [1, 1], strides = [1, 1]} : vector<8x1xf32> to vector<1x1xf32>
      %237 = arith.cmpf ogt, %236, %231 : vector<1x1xf32>
      %238 = arith.select %237, %236, %231 : vector<1x1xi1>, vector<1x1xf32>
      %239 = vector.extract_strided_slice %225 {offsets = [2, 0], sizes = [1, 1], strides = [1, 1]} : vector<8x1xi32> to vector<1x1xi32>
      %240 = arith.select %237, %239, %233 : vector<1x1xi1>, vector<1x1xi32>
      %c2_i32_81 = arith.constant 2 : i32
      %241 = vector.broadcast %c2_i32_81 : i32 to vector<1x1xi32>
      %242 = arith.select %237, %241, %235 : vector<1x1xi1>, vector<1x1xi32>
      %243 = vector.extract_strided_slice %218 {offsets = [3, 0], sizes = [1, 1], strides = [1, 1]} : vector<8x1xf32> to vector<1x1xf32>
      %244 = arith.cmpf ogt, %243, %238 : vector<1x1xf32>
      %245 = arith.select %244, %243, %238 : vector<1x1xi1>, vector<1x1xf32>
      %246 = vector.extract_strided_slice %225 {offsets = [3, 0], sizes = [1, 1], strides = [1, 1]} : vector<8x1xi32> to vector<1x1xi32>
      %247 = arith.select %244, %246, %240 : vector<1x1xi1>, vector<1x1xi32>
      %c3_i32_82 = arith.constant 3 : i32
      %248 = vector.broadcast %c3_i32_82 : i32 to vector<1x1xi32>
      %249 = arith.select %244, %248, %242 : vector<1x1xi1>, vector<1x1xi32>
      %250 = vector.broadcast %249 : vector<1x1xi32> to vector<8x128xi32>
      %251 = arith.cmpi eq, %10, %250 : vector<8x128xi32>
      %252 = vector.broadcast %247 : vector<1x1xi32> to vector<8x128xi32>
      %253 = arith.cmpi eq, %8, %252 : vector<8x128xi32>
      %254 = arith.andi %251, %253 : vector<8x128xi1>
      %255 = vector.broadcast %cst_15 : f32 to vector<8x128xf32>
      %256 = arith.select %254, %255, %216 : vector<8x128xi1>, vector<8x128xf32>
      %257 = vector.extract_strided_slice %218 {offsets = [4, 0], sizes = [1, 1], strides = [1, 1]} : vector<8x1xf32> to vector<1x1xf32>
      %258 = vector.extract_strided_slice %225 {offsets = [4, 0], sizes = [1, 1], strides = [1, 1]} : vector<8x1xi32> to vector<1x1xi32>
      %c4_i32_83 = arith.constant 4 : i32
      %259 = vector.broadcast %c4_i32_83 : i32 to vector<1x1xi32>
      %260 = vector.extract_strided_slice %218 {offsets = [5, 0], sizes = [1, 1], strides = [1, 1]} : vector<8x1xf32> to vector<1x1xf32>
      %261 = arith.cmpf ogt, %260, %257 : vector<1x1xf32>
      %262 = arith.select %261, %260, %257 : vector<1x1xi1>, vector<1x1xf32>
      %263 = vector.extract_strided_slice %225 {offsets = [5, 0], sizes = [1, 1], strides = [1, 1]} : vector<8x1xi32> to vector<1x1xi32>
      %264 = arith.select %261, %263, %258 : vector<1x1xi1>, vector<1x1xi32>
      %c5_i32_84 = arith.constant 5 : i32
      %265 = vector.broadcast %c5_i32_84 : i32 to vector<1x1xi32>
      %266 = arith.select %261, %265, %259 : vector<1x1xi1>, vector<1x1xi32>
      %267 = vector.extract_strided_slice %218 {offsets = [6, 0], sizes = [1, 1], strides = [1, 1]} : vector<8x1xf32> to vector<1x1xf32>
      %268 = arith.cmpf ogt, %267, %262 : vector<1x1xf32>
      %269 = arith.select %268, %267, %262 : vector<1x1xi1>, vector<1x1xf32>
      %270 = vector.extract_strided_slice %225 {offsets = [6, 0], sizes = [1, 1], strides = [1, 1]} : vector<8x1xi32> to vector<1x1xi32>
      %271 = arith.select %268, %270, %264 : vector<1x1xi1>, vector<1x1xi32>
      %c6_i32_85 = arith.constant 6 : i32
      %272 = vector.broadcast %c6_i32_85 : i32 to vector<1x1xi32>
      %273 = arith.select %268, %272, %266 : vector<1x1xi1>, vector<1x1xi32>
      %274 = vector.extract_strided_slice %218 {offsets = [7, 0], sizes = [1, 1], strides = [1, 1]} : vector<8x1xf32> to vector<1x1xf32>
      %275 = arith.cmpf ogt, %274, %269 : vector<1x1xf32>
      %276 = arith.select %275, %274, %269 : vector<1x1xi1>, vector<1x1xf32>
      %277 = vector.extract_strided_slice %225 {offsets = [7, 0], sizes = [1, 1], strides = [1, 1]} : vector<8x1xi32> to vector<1x1xi32>
      %278 = arith.select %275, %277, %271 : vector<1x1xi1>, vector<1x1xi32>
      %c7_i32_86 = arith.constant 7 : i32
      %279 = vector.broadcast %c7_i32_86 : i32 to vector<1x1xi32>
      %280 = arith.select %275, %279, %273 : vector<1x1xi1>, vector<1x1xi32>
      %281 = vector.broadcast %280 : vector<1x1xi32> to vector<8x128xi32>
      %282 = arith.cmpi eq, %10, %281 : vector<8x128xi32>
      %283 = vector.broadcast %278 : vector<1x1xi32> to vector<8x128xi32>
      %284 = arith.cmpi eq, %8, %283 : vector<8x128xi32>
      %285 = arith.andi %282, %284 : vector<8x128xi1>
      %286 = vector.broadcast %cst_15 : f32 to vector<8x128xf32>
      %287 = arith.select %285, %286, %256 : vector<8x128xi1>, vector<8x128xf32>
      %cst_87 = arith.constant dense<0xFF800000> : vector<8xf32>
      %288 = vector.multi_reduction <maximumf>, %287, %cst_87 [1] : vector<8x128xf32> to vector<8xf32>
      %289 = vector.shape_cast %288 : vector<8xf32> to vector<8x1xf32>
      %290 = vector.broadcast %289 : vector<8x1xf32> to vector<8x128xf32>
      %291 = arith.cmpf oge, %287, %290 : vector<8x128xf32>
      %cst_88 = arith.constant 1.280000e+02 : f32
      %292 = vector.broadcast %cst_88 : f32 to vector<8x128xf32>
      %293 = arith.select %291, %9, %292 : vector<8x128xi1>, vector<8x128xf32>
      %cst_89 = arith.constant dense<0x7F800000> : vector<8xf32>
      %294 = vector.multi_reduction <minimumf>, %293, %cst_89 [1] : vector<8x128xf32> to vector<8xf32>
      %295 = vector.shape_cast %294 : vector<8xf32> to vector<8x1xf32>
      %296 = arith.fptosi %295 : vector<8x1xf32> to vector<8x1xi32>
      %297 = vector.extract_strided_slice %289 {offsets = [0, 0], sizes = [1, 1], strides = [1, 1]} : vector<8x1xf32> to vector<1x1xf32>
      %298 = vector.extract_strided_slice %296 {offsets = [0, 0], sizes = [1, 1], strides = [1, 1]} : vector<8x1xi32> to vector<1x1xi32>
      %c0_i32_90 = arith.constant 0 : i32
      %299 = vector.broadcast %c0_i32_90 : i32 to vector<1x1xi32>
      %300 = vector.extract_strided_slice %289 {offsets = [1, 0], sizes = [1, 1], strides = [1, 1]} : vector<8x1xf32> to vector<1x1xf32>
      %301 = arith.cmpf ogt, %300, %297 : vector<1x1xf32>
      %302 = arith.select %301, %300, %297 : vector<1x1xi1>, vector<1x1xf32>
      %303 = vector.extract_strided_slice %296 {offsets = [1, 0], sizes = [1, 1], strides = [1, 1]} : vector<8x1xi32> to vector<1x1xi32>
      %304 = arith.select %301, %303, %298 : vector<1x1xi1>, vector<1x1xi32>
      %c1_i32_91 = arith.constant 1 : i32
      %305 = vector.broadcast %c1_i32_91 : i32 to vector<1x1xi32>
      %306 = arith.select %301, %305, %299 : vector<1x1xi1>, vector<1x1xi32>
      %307 = vector.extract_strided_slice %289 {offsets = [2, 0], sizes = [1, 1], strides = [1, 1]} : vector<8x1xf32> to vector<1x1xf32>
      %308 = arith.cmpf ogt, %307, %302 : vector<1x1xf32>
      %309 = arith.select %308, %307, %302 : vector<1x1xi1>, vector<1x1xf32>
      %310 = vector.extract_strided_slice %296 {offsets = [2, 0], sizes = [1, 1], strides = [1, 1]} : vector<8x1xi32> to vector<1x1xi32>
      %311 = arith.select %308, %310, %304 : vector<1x1xi1>, vector<1x1xi32>
      %c2_i32_92 = arith.constant 2 : i32
      %312 = vector.broadcast %c2_i32_92 : i32 to vector<1x1xi32>
      %313 = arith.select %308, %312, %306 : vector<1x1xi1>, vector<1x1xi32>
      %314 = vector.extract_strided_slice %289 {offsets = [3, 0], sizes = [1, 1], strides = [1, 1]} : vector<8x1xf32> to vector<1x1xf32>
      %315 = arith.cmpf ogt, %314, %309 : vector<1x1xf32>
      %316 = arith.select %315, %314, %309 : vector<1x1xi1>, vector<1x1xf32>
      %317 = vector.extract_strided_slice %296 {offsets = [3, 0], sizes = [1, 1], strides = [1, 1]} : vector<8x1xi32> to vector<1x1xi32>
      %318 = arith.select %315, %317, %311 : vector<1x1xi1>, vector<1x1xi32>
      %c3_i32_93 = arith.constant 3 : i32
      %319 = vector.broadcast %c3_i32_93 : i32 to vector<1x1xi32>
      %320 = arith.select %315, %319, %313 : vector<1x1xi1>, vector<1x1xi32>
      %321 = vector.broadcast %320 : vector<1x1xi32> to vector<8x128xi32>
      %322 = arith.cmpi eq, %10, %321 : vector<8x128xi32>
      %323 = vector.broadcast %318 : vector<1x1xi32> to vector<8x128xi32>
      %324 = arith.cmpi eq, %8, %323 : vector<8x128xi32>
      %325 = arith.andi %322, %324 : vector<8x128xi1>
      %326 = vector.broadcast %cst_15 : f32 to vector<8x128xf32>
      %327 = arith.select %325, %326, %287 : vector<8x128xi1>, vector<8x128xf32>
      %328 = vector.extract_strided_slice %289 {offsets = [4, 0], sizes = [1, 1], strides = [1, 1]} : vector<8x1xf32> to vector<1x1xf32>
      %329 = vector.extract_strided_slice %296 {offsets = [4, 0], sizes = [1, 1], strides = [1, 1]} : vector<8x1xi32> to vector<1x1xi32>
      %c4_i32_94 = arith.constant 4 : i32
      %330 = vector.broadcast %c4_i32_94 : i32 to vector<1x1xi32>
      %331 = vector.extract_strided_slice %289 {offsets = [5, 0], sizes = [1, 1], strides = [1, 1]} : vector<8x1xf32> to vector<1x1xf32>
      %332 = arith.cmpf ogt, %331, %328 : vector<1x1xf32>
      %333 = arith.select %332, %331, %328 : vector<1x1xi1>, vector<1x1xf32>
      %334 = vector.extract_strided_slice %296 {offsets = [5, 0], sizes = [1, 1], strides = [1, 1]} : vector<8x1xi32> to vector<1x1xi32>
      %335 = arith.select %332, %334, %329 : vector<1x1xi1>, vector<1x1xi32>
      %c5_i32_95 = arith.constant 5 : i32
      %336 = vector.broadcast %c5_i32_95 : i32 to vector<1x1xi32>
      %337 = arith.select %332, %336, %330 : vector<1x1xi1>, vector<1x1xi32>
      %338 = vector.extract_strided_slice %289 {offsets = [6, 0], sizes = [1, 1], strides = [1, 1]} : vector<8x1xf32> to vector<1x1xf32>
      %339 = arith.cmpf ogt, %338, %333 : vector<1x1xf32>
      %340 = arith.select %339, %338, %333 : vector<1x1xi1>, vector<1x1xf32>
      %341 = vector.extract_strided_slice %296 {offsets = [6, 0], sizes = [1, 1], strides = [1, 1]} : vector<8x1xi32> to vector<1x1xi32>
      %342 = arith.select %339, %341, %335 : vector<1x1xi1>, vector<1x1xi32>
      %c6_i32_96 = arith.constant 6 : i32
      %343 = vector.broadcast %c6_i32_96 : i32 to vector<1x1xi32>
      %344 = arith.select %339, %343, %337 : vector<1x1xi1>, vector<1x1xi32>
      %345 = vector.extract_strided_slice %289 {offsets = [7, 0], sizes = [1, 1], strides = [1, 1]} : vector<8x1xf32> to vector<1x1xf32>
      %346 = arith.cmpf ogt, %345, %340 : vector<1x1xf32>
      %347 = arith.select %346, %345, %340 : vector<1x1xi1>, vector<1x1xf32>
      %348 = vector.extract_strided_slice %296 {offsets = [7, 0], sizes = [1, 1], strides = [1, 1]} : vector<8x1xi32> to vector<1x1xi32>
      %349 = arith.select %346, %348, %342 : vector<1x1xi1>, vector<1x1xi32>
      %c7_i32_97 = arith.constant 7 : i32
      %350 = vector.broadcast %c7_i32_97 : i32 to vector<1x1xi32>
      %351 = arith.select %346, %350, %344 : vector<1x1xi1>, vector<1x1xi32>
      %352 = vector.broadcast %351 : vector<1x1xi32> to vector<8x128xi32>
      %353 = arith.cmpi eq, %10, %352 : vector<8x128xi32>
      %354 = vector.broadcast %349 : vector<1x1xi32> to vector<8x128xi32>
      %355 = arith.cmpi eq, %8, %354 : vector<8x128xi32>
      %356 = arith.andi %353, %355 : vector<8x128xi1>
      %357 = vector.broadcast %cst_15 : f32 to vector<8x128xf32>
      %358 = arith.select %356, %357, %327 : vector<8x128xi1>, vector<8x128xf32>
      %cst_98 = arith.constant dense<0xFF800000> : vector<8xf32>
      %359 = vector.multi_reduction <maximumf>, %358, %cst_98 [1] : vector<8x128xf32> to vector<8xf32>
      %360 = vector.shape_cast %359 : vector<8xf32> to vector<8x1xf32>
      %361 = vector.broadcast %360 : vector<8x1xf32> to vector<8x128xf32>
      %362 = arith.cmpf oge, %358, %361 : vector<8x128xf32>
      %cst_99 = arith.constant 1.280000e+02 : f32
      %363 = vector.broadcast %cst_99 : f32 to vector<8x128xf32>
      %364 = arith.select %362, %9, %363 : vector<8x128xi1>, vector<8x128xf32>
      %cst_100 = arith.constant dense<0x7F800000> : vector<8xf32>
      %365 = vector.multi_reduction <minimumf>, %364, %cst_100 [1] : vector<8x128xf32> to vector<8xf32>
      %366 = vector.shape_cast %365 : vector<8xf32> to vector<8x1xf32>
      %367 = arith.fptosi %366 : vector<8x1xf32> to vector<8x1xi32>
      %368 = vector.extract_strided_slice %360 {offsets = [0, 0], sizes = [1, 1], strides = [1, 1]} : vector<8x1xf32> to vector<1x1xf32>
      %369 = vector.extract_strided_slice %367 {offsets = [0, 0], sizes = [1, 1], strides = [1, 1]} : vector<8x1xi32> to vector<1x1xi32>
      %c0_i32_101 = arith.constant 0 : i32
      %370 = vector.broadcast %c0_i32_101 : i32 to vector<1x1xi32>
      %371 = vector.extract_strided_slice %360 {offsets = [1, 0], sizes = [1, 1], strides = [1, 1]} : vector<8x1xf32> to vector<1x1xf32>
      %372 = arith.cmpf ogt, %371, %368 : vector<1x1xf32>
      %373 = arith.select %372, %371, %368 : vector<1x1xi1>, vector<1x1xf32>
      %374 = vector.extract_strided_slice %367 {offsets = [1, 0], sizes = [1, 1], strides = [1, 1]} : vector<8x1xi32> to vector<1x1xi32>
      %375 = arith.select %372, %374, %369 : vector<1x1xi1>, vector<1x1xi32>
      %c1_i32_102 = arith.constant 1 : i32
      %376 = vector.broadcast %c1_i32_102 : i32 to vector<1x1xi32>
      %377 = arith.select %372, %376, %370 : vector<1x1xi1>, vector<1x1xi32>
      %378 = vector.extract_strided_slice %360 {offsets = [2, 0], sizes = [1, 1], strides = [1, 1]} : vector<8x1xf32> to vector<1x1xf32>
      %379 = arith.cmpf ogt, %378, %373 : vector<1x1xf32>
      %380 = arith.select %379, %378, %373 : vector<1x1xi1>, vector<1x1xf32>
      %381 = vector.extract_strided_slice %367 {offsets = [2, 0], sizes = [1, 1], strides = [1, 1]} : vector<8x1xi32> to vector<1x1xi32>
      %382 = arith.select %379, %381, %375 : vector<1x1xi1>, vector<1x1xi32>
      %c2_i32_103 = arith.constant 2 : i32
      %383 = vector.broadcast %c2_i32_103 : i32 to vector<1x1xi32>
      %384 = arith.select %379, %383, %377 : vector<1x1xi1>, vector<1x1xi32>
      %385 = vector.extract_strided_slice %360 {offsets = [3, 0], sizes = [1, 1], strides = [1, 1]} : vector<8x1xf32> to vector<1x1xf32>
      %386 = arith.cmpf ogt, %385, %380 : vector<1x1xf32>
      %387 = arith.select %386, %385, %380 : vector<1x1xi1>, vector<1x1xf32>
      %388 = vector.extract_strided_slice %367 {offsets = [3, 0], sizes = [1, 1], strides = [1, 1]} : vector<8x1xi32> to vector<1x1xi32>
      %389 = arith.select %386, %388, %382 : vector<1x1xi1>, vector<1x1xi32>
      %c3_i32_104 = arith.constant 3 : i32
      %390 = vector.broadcast %c3_i32_104 : i32 to vector<1x1xi32>
      %391 = arith.select %386, %390, %384 : vector<1x1xi1>, vector<1x1xi32>
      %392 = vector.extract_strided_slice %360 {offsets = [4, 0], sizes = [1, 1], strides = [1, 1]} : vector<8x1xf32> to vector<1x1xf32>
      %393 = vector.extract_strided_slice %367 {offsets = [4, 0], sizes = [1, 1], strides = [1, 1]} : vector<8x1xi32> to vector<1x1xi32>
      %c4_i32_105 = arith.constant 4 : i32
      %394 = vector.broadcast %c4_i32_105 : i32 to vector<1x1xi32>
      %395 = vector.extract_strided_slice %360 {offsets = [5, 0], sizes = [1, 1], strides = [1, 1]} : vector<8x1xf32> to vector<1x1xf32>
      %396 = arith.cmpf ogt, %395, %392 : vector<1x1xf32>
      %397 = arith.select %396, %395, %392 : vector<1x1xi1>, vector<1x1xf32>
      %398 = vector.extract_strided_slice %367 {offsets = [5, 0], sizes = [1, 1], strides = [1, 1]} : vector<8x1xi32> to vector<1x1xi32>
      %399 = arith.select %396, %398, %393 : vector<1x1xi1>, vector<1x1xi32>
      %c5_i32_106 = arith.constant 5 : i32
      %400 = vector.broadcast %c5_i32_106 : i32 to vector<1x1xi32>
      %401 = arith.select %396, %400, %394 : vector<1x1xi1>, vector<1x1xi32>
      %402 = vector.extract_strided_slice %360 {offsets = [6, 0], sizes = [1, 1], strides = [1, 1]} : vector<8x1xf32> to vector<1x1xf32>
      %403 = arith.cmpf ogt, %402, %397 : vector<1x1xf32>
      %404 = arith.select %403, %402, %397 : vector<1x1xi1>, vector<1x1xf32>
      %405 = vector.extract_strided_slice %367 {offsets = [6, 0], sizes = [1, 1], strides = [1, 1]} : vector<8x1xi32> to vector<1x1xi32>
      %406 = arith.select %403, %405, %399 : vector<1x1xi1>, vector<1x1xi32>
      %c6_i32_107 = arith.constant 6 : i32
      %407 = vector.broadcast %c6_i32_107 : i32 to vector<1x1xi32>
      %408 = arith.select %403, %407, %401 : vector<1x1xi1>, vector<1x1xi32>
      %409 = vector.extract_strided_slice %360 {offsets = [7, 0], sizes = [1, 1], strides = [1, 1]} : vector<8x1xf32> to vector<1x1xf32>
      %410 = arith.cmpf ogt, %409, %404 : vector<1x1xf32>
      %411 = arith.select %410, %409, %404 : vector<1x1xi1>, vector<1x1xf32>
      %412 = vector.extract_strided_slice %367 {offsets = [7, 0], sizes = [1, 1], strides = [1, 1]} : vector<8x1xi32> to vector<1x1xi32>
      %413 = arith.select %410, %412, %406 : vector<1x1xi1>, vector<1x1xi32>
      %c7_i32_108 = arith.constant 7 : i32
      %414 = vector.broadcast %c7_i32_108 : i32 to vector<1x1xi32>
      %415 = arith.select %410, %414, %408 : vector<1x1xi1>, vector<1x1xi32>
      %c0_i32_109 = arith.constant 0 : i32
      %416 = vector.broadcast %c0_i32_109 : i32 to vector<8x1xi32>
      %c0_i32_110 = arith.constant 0 : i32
      %417 = vector.broadcast %c0_i32_110 : i32 to vector<8x1xi32>
      %cst_111 = arith.constant 0.000000e+00 : f32
      %418 = vector.broadcast %cst_111 : f32 to vector<8x1xf32>
      %c0_i32_112 = arith.constant 0 : i32
      %419 = vector.broadcast %c0_i32_112 : i32 to vector<1x8xi32>
      %c0_i32_113 = arith.constant 0 : i32
      %420 = vector.broadcast %c0_i32_113 : i32 to vector<1x8xi32>
      %c0_i32_114 = arith.constant 0 : i32
      %421 = vector.broadcast %c0_i32_114 : i32 to vector<8x1xi32>
      %422 = arith.cmpi eq, %11, %421 : vector<8x1xi32>
      %423 = vector.shape_cast %176 : vector<1x1xi32> to vector<1x1xi32>
      %424 = vector.broadcast %423 : vector<1x1xi32> to vector<8x1xi32>
      %425 = arith.select %422, %424, %416 : vector<8x1xi1>, vector<8x1xi32>
      %c0_i32_115 = arith.constant 0 : i32
      %426 = vector.broadcast %c0_i32_115 : i32 to vector<8x1xi32>
      %427 = arith.cmpi eq, %11, %426 : vector<8x1xi32>
      %428 = vector.shape_cast %178 : vector<1x1xi32> to vector<1x1xi32>
      %429 = vector.broadcast %428 : vector<1x1xi32> to vector<8x1xi32>
      %430 = arith.select %427, %429, %417 : vector<8x1xi1>, vector<8x1xi32>
      %c0_i32_116 = arith.constant 0 : i32
      %431 = vector.broadcast %c0_i32_116 : i32 to vector<8x1xi32>
      %432 = arith.cmpi eq, %11, %431 : vector<8x1xi32>
      %433 = vector.shape_cast %174 : vector<1x1xf32> to vector<1x1xf32>
      %434 = vector.broadcast %433 : vector<1x1xf32> to vector<8x1xf32>
      %435 = arith.select %432, %434, %418 : vector<8x1xi1>, vector<8x1xf32>
      %c0_i32_117 = arith.constant 0 : i32
      %436 = vector.broadcast %c0_i32_117 : i32 to vector<1x8xi32>
      %437 = arith.cmpi eq, %12, %436 : vector<1x8xi32>
      %438 = vector.shape_cast %176 : vector<1x1xi32> to vector<1x1xi32>
      %439 = vector.broadcast %438 : vector<1x1xi32> to vector<1x8xi32>
      %440 = arith.select %437, %439, %419 : vector<1x8xi1>, vector<1x8xi32>
      %c0_i32_118 = arith.constant 0 : i32
      %441 = vector.broadcast %c0_i32_118 : i32 to vector<1x8xi32>
      %442 = arith.cmpi eq, %12, %441 : vector<1x8xi32>
      %443 = vector.shape_cast %178 : vector<1x1xi32> to vector<1x1xi32>
      %444 = vector.broadcast %443 : vector<1x1xi32> to vector<1x8xi32>
      %445 = arith.select %442, %444, %420 : vector<1x8xi1>, vector<1x8xi32>
      %c1_i32_119 = arith.constant 1 : i32
      %446 = vector.broadcast %c1_i32_119 : i32 to vector<8x1xi32>
      %447 = arith.cmpi eq, %11, %446 : vector<8x1xi32>
      %448 = vector.shape_cast %247 : vector<1x1xi32> to vector<1x1xi32>
      %449 = vector.broadcast %448 : vector<1x1xi32> to vector<8x1xi32>
      %450 = arith.select %447, %449, %425 : vector<8x1xi1>, vector<8x1xi32>
      %c1_i32_120 = arith.constant 1 : i32
      %451 = vector.broadcast %c1_i32_120 : i32 to vector<8x1xi32>
      %452 = arith.cmpi eq, %11, %451 : vector<8x1xi32>
      %453 = vector.shape_cast %249 : vector<1x1xi32> to vector<1x1xi32>
      %454 = vector.broadcast %453 : vector<1x1xi32> to vector<8x1xi32>
      %455 = arith.select %452, %454, %430 : vector<8x1xi1>, vector<8x1xi32>
      %c1_i32_121 = arith.constant 1 : i32
      %456 = vector.broadcast %c1_i32_121 : i32 to vector<8x1xi32>
      %457 = arith.cmpi eq, %11, %456 : vector<8x1xi32>
      %458 = vector.shape_cast %245 : vector<1x1xf32> to vector<1x1xf32>
      %459 = vector.broadcast %458 : vector<1x1xf32> to vector<8x1xf32>
      %460 = arith.select %457, %459, %435 : vector<8x1xi1>, vector<8x1xf32>
      %c1_i32_122 = arith.constant 1 : i32
      %461 = vector.broadcast %c1_i32_122 : i32 to vector<1x8xi32>
      %462 = arith.cmpi eq, %12, %461 : vector<1x8xi32>
      %463 = vector.shape_cast %247 : vector<1x1xi32> to vector<1x1xi32>
      %464 = vector.broadcast %463 : vector<1x1xi32> to vector<1x8xi32>
      %465 = arith.select %462, %464, %440 : vector<1x8xi1>, vector<1x8xi32>
      %c1_i32_123 = arith.constant 1 : i32
      %466 = vector.broadcast %c1_i32_123 : i32 to vector<1x8xi32>
      %467 = arith.cmpi eq, %12, %466 : vector<1x8xi32>
      %468 = vector.shape_cast %249 : vector<1x1xi32> to vector<1x1xi32>
      %469 = vector.broadcast %468 : vector<1x1xi32> to vector<1x8xi32>
      %470 = arith.select %467, %469, %445 : vector<1x8xi1>, vector<1x8xi32>
      %c2_i32_124 = arith.constant 2 : i32
      %471 = vector.broadcast %c2_i32_124 : i32 to vector<8x1xi32>
      %472 = arith.cmpi eq, %11, %471 : vector<8x1xi32>
      %473 = vector.shape_cast %318 : vector<1x1xi32> to vector<1x1xi32>
      %474 = vector.broadcast %473 : vector<1x1xi32> to vector<8x1xi32>
      %475 = arith.select %472, %474, %450 : vector<8x1xi1>, vector<8x1xi32>
      %c2_i32_125 = arith.constant 2 : i32
      %476 = vector.broadcast %c2_i32_125 : i32 to vector<8x1xi32>
      %477 = arith.cmpi eq, %11, %476 : vector<8x1xi32>
      %478 = vector.shape_cast %320 : vector<1x1xi32> to vector<1x1xi32>
      %479 = vector.broadcast %478 : vector<1x1xi32> to vector<8x1xi32>
      %480 = arith.select %477, %479, %455 : vector<8x1xi1>, vector<8x1xi32>
      %c2_i32_126 = arith.constant 2 : i32
      %481 = vector.broadcast %c2_i32_126 : i32 to vector<8x1xi32>
      %482 = arith.cmpi eq, %11, %481 : vector<8x1xi32>
      %483 = vector.shape_cast %316 : vector<1x1xf32> to vector<1x1xf32>
      %484 = vector.broadcast %483 : vector<1x1xf32> to vector<8x1xf32>
      %485 = arith.select %482, %484, %460 : vector<8x1xi1>, vector<8x1xf32>
      %c2_i32_127 = arith.constant 2 : i32
      %486 = vector.broadcast %c2_i32_127 : i32 to vector<1x8xi32>
      %487 = arith.cmpi eq, %12, %486 : vector<1x8xi32>
      %488 = vector.shape_cast %318 : vector<1x1xi32> to vector<1x1xi32>
      %489 = vector.broadcast %488 : vector<1x1xi32> to vector<1x8xi32>
      %490 = arith.select %487, %489, %465 : vector<1x8xi1>, vector<1x8xi32>
      %c2_i32_128 = arith.constant 2 : i32
      %491 = vector.broadcast %c2_i32_128 : i32 to vector<1x8xi32>
      %492 = arith.cmpi eq, %12, %491 : vector<1x8xi32>
      %493 = vector.shape_cast %320 : vector<1x1xi32> to vector<1x1xi32>
      %494 = vector.broadcast %493 : vector<1x1xi32> to vector<1x8xi32>
      %495 = arith.select %492, %494, %470 : vector<1x8xi1>, vector<1x8xi32>
      %c3_i32_129 = arith.constant 3 : i32
      %496 = vector.broadcast %c3_i32_129 : i32 to vector<8x1xi32>
      %497 = arith.cmpi eq, %11, %496 : vector<8x1xi32>
      %498 = vector.shape_cast %389 : vector<1x1xi32> to vector<1x1xi32>
      %499 = vector.broadcast %498 : vector<1x1xi32> to vector<8x1xi32>
      %500 = arith.select %497, %499, %475 : vector<8x1xi1>, vector<8x1xi32>
      %c3_i32_130 = arith.constant 3 : i32
      %501 = vector.broadcast %c3_i32_130 : i32 to vector<8x1xi32>
      %502 = arith.cmpi eq, %11, %501 : vector<8x1xi32>
      %503 = vector.shape_cast %391 : vector<1x1xi32> to vector<1x1xi32>
      %504 = vector.broadcast %503 : vector<1x1xi32> to vector<8x1xi32>
      %505 = arith.select %502, %504, %480 : vector<8x1xi1>, vector<8x1xi32>
      %c3_i32_131 = arith.constant 3 : i32
      %506 = vector.broadcast %c3_i32_131 : i32 to vector<8x1xi32>
      %507 = arith.cmpi eq, %11, %506 : vector<8x1xi32>
      %508 = vector.shape_cast %387 : vector<1x1xf32> to vector<1x1xf32>
      %509 = vector.broadcast %508 : vector<1x1xf32> to vector<8x1xf32>
      %510 = arith.select %507, %509, %485 : vector<8x1xi1>, vector<8x1xf32>
      %c3_i32_132 = arith.constant 3 : i32
      %511 = vector.broadcast %c3_i32_132 : i32 to vector<1x8xi32>
      %512 = arith.cmpi eq, %12, %511 : vector<1x8xi32>
      %513 = vector.shape_cast %389 : vector<1x1xi32> to vector<1x1xi32>
      %514 = vector.broadcast %513 : vector<1x1xi32> to vector<1x8xi32>
      %515 = arith.select %512, %514, %490 : vector<1x8xi1>, vector<1x8xi32>
      %c3_i32_133 = arith.constant 3 : i32
      %516 = vector.broadcast %c3_i32_133 : i32 to vector<1x8xi32>
      %517 = arith.cmpi eq, %12, %516 : vector<1x8xi32>
      %518 = vector.shape_cast %391 : vector<1x1xi32> to vector<1x1xi32>
      %519 = vector.broadcast %518 : vector<1x1xi32> to vector<1x8xi32>
      %520 = arith.select %517, %519, %495 : vector<1x8xi1>, vector<1x8xi32>
      %c4_i32_134 = arith.constant 4 : i32
      %521 = vector.broadcast %c4_i32_134 : i32 to vector<8x1xi32>
      %522 = arith.cmpi eq, %11, %521 : vector<8x1xi32>
      %523 = vector.shape_cast %207 : vector<1x1xi32> to vector<1x1xi32>
      %524 = vector.broadcast %523 : vector<1x1xi32> to vector<8x1xi32>
      %525 = arith.select %522, %524, %500 : vector<8x1xi1>, vector<8x1xi32>
      %c4_i32_135 = arith.constant 4 : i32
      %526 = vector.broadcast %c4_i32_135 : i32 to vector<8x1xi32>
      %527 = arith.cmpi eq, %11, %526 : vector<8x1xi32>
      %528 = vector.shape_cast %209 : vector<1x1xi32> to vector<1x1xi32>
      %529 = vector.broadcast %528 : vector<1x1xi32> to vector<8x1xi32>
      %530 = arith.select %527, %529, %505 : vector<8x1xi1>, vector<8x1xi32>
      %c4_i32_136 = arith.constant 4 : i32
      %531 = vector.broadcast %c4_i32_136 : i32 to vector<8x1xi32>
      %532 = arith.cmpi eq, %11, %531 : vector<8x1xi32>
      %533 = vector.shape_cast %205 : vector<1x1xf32> to vector<1x1xf32>
      %534 = vector.broadcast %533 : vector<1x1xf32> to vector<8x1xf32>
      %535 = arith.select %532, %534, %510 : vector<8x1xi1>, vector<8x1xf32>
      %c4_i32_137 = arith.constant 4 : i32
      %536 = vector.broadcast %c4_i32_137 : i32 to vector<1x8xi32>
      %537 = arith.cmpi eq, %12, %536 : vector<1x8xi32>
      %538 = vector.shape_cast %207 : vector<1x1xi32> to vector<1x1xi32>
      %539 = vector.broadcast %538 : vector<1x1xi32> to vector<1x8xi32>
      %540 = arith.select %537, %539, %515 : vector<1x8xi1>, vector<1x8xi32>
      %c4_i32_138 = arith.constant 4 : i32
      %541 = vector.broadcast %c4_i32_138 : i32 to vector<1x8xi32>
      %542 = arith.cmpi eq, %12, %541 : vector<1x8xi32>
      %543 = vector.shape_cast %209 : vector<1x1xi32> to vector<1x1xi32>
      %544 = vector.broadcast %543 : vector<1x1xi32> to vector<1x8xi32>
      %545 = arith.select %542, %544, %520 : vector<1x8xi1>, vector<1x8xi32>
      %c5_i32_139 = arith.constant 5 : i32
      %546 = vector.broadcast %c5_i32_139 : i32 to vector<8x1xi32>
      %547 = arith.cmpi eq, %11, %546 : vector<8x1xi32>
      %548 = vector.shape_cast %278 : vector<1x1xi32> to vector<1x1xi32>
      %549 = vector.broadcast %548 : vector<1x1xi32> to vector<8x1xi32>
      %550 = arith.select %547, %549, %525 : vector<8x1xi1>, vector<8x1xi32>
      %c5_i32_140 = arith.constant 5 : i32
      %551 = vector.broadcast %c5_i32_140 : i32 to vector<8x1xi32>
      %552 = arith.cmpi eq, %11, %551 : vector<8x1xi32>
      %553 = vector.shape_cast %280 : vector<1x1xi32> to vector<1x1xi32>
      %554 = vector.broadcast %553 : vector<1x1xi32> to vector<8x1xi32>
      %555 = arith.select %552, %554, %530 : vector<8x1xi1>, vector<8x1xi32>
      %c5_i32_141 = arith.constant 5 : i32
      %556 = vector.broadcast %c5_i32_141 : i32 to vector<8x1xi32>
      %557 = arith.cmpi eq, %11, %556 : vector<8x1xi32>
      %558 = vector.shape_cast %276 : vector<1x1xf32> to vector<1x1xf32>
      %559 = vector.broadcast %558 : vector<1x1xf32> to vector<8x1xf32>
      %560 = arith.select %557, %559, %535 : vector<8x1xi1>, vector<8x1xf32>
      %c5_i32_142 = arith.constant 5 : i32
      %561 = vector.broadcast %c5_i32_142 : i32 to vector<1x8xi32>
      %562 = arith.cmpi eq, %12, %561 : vector<1x8xi32>
      %563 = vector.shape_cast %278 : vector<1x1xi32> to vector<1x1xi32>
      %564 = vector.broadcast %563 : vector<1x1xi32> to vector<1x8xi32>
      %565 = arith.select %562, %564, %540 : vector<1x8xi1>, vector<1x8xi32>
      %c5_i32_143 = arith.constant 5 : i32
      %566 = vector.broadcast %c5_i32_143 : i32 to vector<1x8xi32>
      %567 = arith.cmpi eq, %12, %566 : vector<1x8xi32>
      %568 = vector.shape_cast %280 : vector<1x1xi32> to vector<1x1xi32>
      %569 = vector.broadcast %568 : vector<1x1xi32> to vector<1x8xi32>
      %570 = arith.select %567, %569, %545 : vector<1x8xi1>, vector<1x8xi32>
      %c6_i32_144 = arith.constant 6 : i32
      %571 = vector.broadcast %c6_i32_144 : i32 to vector<8x1xi32>
      %572 = arith.cmpi eq, %11, %571 : vector<8x1xi32>
      %573 = vector.shape_cast %349 : vector<1x1xi32> to vector<1x1xi32>
      %574 = vector.broadcast %573 : vector<1x1xi32> to vector<8x1xi32>
      %575 = arith.select %572, %574, %550 : vector<8x1xi1>, vector<8x1xi32>
      %c6_i32_145 = arith.constant 6 : i32
      %576 = vector.broadcast %c6_i32_145 : i32 to vector<8x1xi32>
      %577 = arith.cmpi eq, %11, %576 : vector<8x1xi32>
      %578 = vector.shape_cast %351 : vector<1x1xi32> to vector<1x1xi32>
      %579 = vector.broadcast %578 : vector<1x1xi32> to vector<8x1xi32>
      %580 = arith.select %577, %579, %555 : vector<8x1xi1>, vector<8x1xi32>
      %c6_i32_146 = arith.constant 6 : i32
      %581 = vector.broadcast %c6_i32_146 : i32 to vector<8x1xi32>
      %582 = arith.cmpi eq, %11, %581 : vector<8x1xi32>
      %583 = vector.shape_cast %347 : vector<1x1xf32> to vector<1x1xf32>
      %584 = vector.broadcast %583 : vector<1x1xf32> to vector<8x1xf32>
      %585 = arith.select %582, %584, %560 : vector<8x1xi1>, vector<8x1xf32>
      %c6_i32_147 = arith.constant 6 : i32
      %586 = vector.broadcast %c6_i32_147 : i32 to vector<1x8xi32>
      %587 = arith.cmpi eq, %12, %586 : vector<1x8xi32>
      %588 = vector.shape_cast %349 : vector<1x1xi32> to vector<1x1xi32>
      %589 = vector.broadcast %588 : vector<1x1xi32> to vector<1x8xi32>
      %590 = arith.select %587, %589, %565 : vector<1x8xi1>, vector<1x8xi32>
      %c6_i32_148 = arith.constant 6 : i32
      %591 = vector.broadcast %c6_i32_148 : i32 to vector<1x8xi32>
      %592 = arith.cmpi eq, %12, %591 : vector<1x8xi32>
      %593 = vector.shape_cast %351 : vector<1x1xi32> to vector<1x1xi32>
      %594 = vector.broadcast %593 : vector<1x1xi32> to vector<1x8xi32>
      %595 = arith.select %592, %594, %570 : vector<1x8xi1>, vector<1x8xi32>
      %c7_i32_149 = arith.constant 7 : i32
      %596 = vector.broadcast %c7_i32_149 : i32 to vector<8x1xi32>
      %597 = arith.cmpi eq, %11, %596 : vector<8x1xi32>
      %598 = vector.shape_cast %413 : vector<1x1xi32> to vector<1x1xi32>
      %599 = vector.broadcast %598 : vector<1x1xi32> to vector<8x1xi32>
      %600 = arith.select %597, %599, %575 : vector<8x1xi1>, vector<8x1xi32>
      %c7_i32_150 = arith.constant 7 : i32
      %601 = vector.broadcast %c7_i32_150 : i32 to vector<8x1xi32>
      %602 = arith.cmpi eq, %11, %601 : vector<8x1xi32>
      %603 = vector.shape_cast %415 : vector<1x1xi32> to vector<1x1xi32>
      %604 = vector.broadcast %603 : vector<1x1xi32> to vector<8x1xi32>
      %605 = arith.select %602, %604, %580 : vector<8x1xi1>, vector<8x1xi32>
      %c7_i32_151 = arith.constant 7 : i32
      %606 = vector.broadcast %c7_i32_151 : i32 to vector<8x1xi32>
      %607 = arith.cmpi eq, %11, %606 : vector<8x1xi32>
      %608 = vector.shape_cast %411 : vector<1x1xf32> to vector<1x1xf32>
      %609 = vector.broadcast %608 : vector<1x1xf32> to vector<8x1xf32>
      %610 = arith.select %607, %609, %585 : vector<8x1xi1>, vector<8x1xf32>
      %c7_i32_152 = arith.constant 7 : i32
      %611 = vector.broadcast %c7_i32_152 : i32 to vector<1x8xi32>
      %612 = arith.cmpi eq, %12, %611 : vector<1x8xi32>
      %613 = vector.shape_cast %413 : vector<1x1xi32> to vector<1x1xi32>
      %614 = vector.broadcast %613 : vector<1x1xi32> to vector<1x8xi32>
      %615 = arith.select %612, %614, %590 : vector<1x8xi1>, vector<1x8xi32>
      %c7_i32_153 = arith.constant 7 : i32
      %616 = vector.broadcast %c7_i32_153 : i32 to vector<1x8xi32>
      %617 = arith.cmpi eq, %12, %616 : vector<1x8xi32>
      %618 = vector.shape_cast %415 : vector<1x1xi32> to vector<1x1xi32>
      %619 = vector.broadcast %618 : vector<1x1xi32> to vector<1x8xi32>
      %620 = arith.select %617, %619, %595 : vector<1x8xi1>, vector<1x8xi32>
      %cst_154 = arith.constant 0.000000e+00 : f32
      %621 = vector.broadcast %cst_154 : f32 to vector<8x128xf32>
      %cst_155 = arith.constant 0.000000e+00 : f32
      %622 = vector.broadcast %cst_155 : f32 to vector<8x128xf32>
      %c0_i32_156 = arith.constant 0 : i32
      %623 = vector.broadcast %c0_i32_156 : i32 to vector<8x1xi32>
      %624 = arith.cmpi eq, %605, %623 : vector<8x1xi32>
      %625 = vector.extract_strided_slice %117 {offsets = [0, 0], sizes = [1, 128], strides = [1, 1]} : vector<8x128xf32> to vector<1x128xf32>
      %cst_157 = arith.constant 0.000000e+00 : f32
      %626 = vector.shape_cast %624 : vector<8x1xi1> to vector<8x1xi1>
      %627 = vector.broadcast %626 : vector<8x1xi1> to vector<8x128xi1>
      %628 = vector.shape_cast %625 : vector<1x128xf32> to vector<1x128xf32>
      %629 = vector.broadcast %628 : vector<1x128xf32> to vector<8x128xf32>
      %630 = vector.broadcast %cst_157 : f32 to vector<8x128xf32>
      %631 = arith.select %627, %629, %630 : vector<8x128xi1>, vector<8x128xf32>
      %632 = arith.addf %621, %631 : vector<8x128xf32>
      %633 = vector.extract_strided_slice %115 {offsets = [0, 0], sizes = [1, 128], strides = [1, 1]} : vector<8x128xf32> to vector<1x128xf32>
      %cst_158 = arith.constant 0.000000e+00 : f32
      %634 = vector.shape_cast %624 : vector<8x1xi1> to vector<8x1xi1>
      %635 = vector.broadcast %634 : vector<8x1xi1> to vector<8x128xi1>
      %636 = vector.shape_cast %633 : vector<1x128xf32> to vector<1x128xf32>
      %637 = vector.broadcast %636 : vector<1x128xf32> to vector<8x128xf32>
      %638 = vector.broadcast %cst_158 : f32 to vector<8x128xf32>
      %639 = arith.select %635, %637, %638 : vector<8x128xi1>, vector<8x128xf32>
      %640 = arith.addf %622, %639 : vector<8x128xf32>
      %c1_i32_159 = arith.constant 1 : i32
      %641 = vector.broadcast %c1_i32_159 : i32 to vector<8x1xi32>
      %642 = arith.cmpi eq, %605, %641 : vector<8x1xi32>
      %643 = vector.extract_strided_slice %117 {offsets = [1, 0], sizes = [1, 128], strides = [1, 1]} : vector<8x128xf32> to vector<1x128xf32>
      %cst_160 = arith.constant 0.000000e+00 : f32
      %644 = vector.shape_cast %642 : vector<8x1xi1> to vector<8x1xi1>
      %645 = vector.broadcast %644 : vector<8x1xi1> to vector<8x128xi1>
      %646 = vector.shape_cast %643 : vector<1x128xf32> to vector<1x128xf32>
      %647 = vector.broadcast %646 : vector<1x128xf32> to vector<8x128xf32>
      %648 = vector.broadcast %cst_160 : f32 to vector<8x128xf32>
      %649 = arith.select %645, %647, %648 : vector<8x128xi1>, vector<8x128xf32>
      %650 = arith.addf %632, %649 : vector<8x128xf32>
      %651 = vector.extract_strided_slice %115 {offsets = [1, 0], sizes = [1, 128], strides = [1, 1]} : vector<8x128xf32> to vector<1x128xf32>
      %cst_161 = arith.constant 0.000000e+00 : f32
      %652 = vector.shape_cast %642 : vector<8x1xi1> to vector<8x1xi1>
      %653 = vector.broadcast %652 : vector<8x1xi1> to vector<8x128xi1>
      %654 = vector.shape_cast %651 : vector<1x128xf32> to vector<1x128xf32>
      %655 = vector.broadcast %654 : vector<1x128xf32> to vector<8x128xf32>
      %656 = vector.broadcast %cst_161 : f32 to vector<8x128xf32>
      %657 = arith.select %653, %655, %656 : vector<8x128xi1>, vector<8x128xf32>
      %658 = arith.addf %640, %657 : vector<8x128xf32>
      %c2_i32_162 = arith.constant 2 : i32
      %659 = vector.broadcast %c2_i32_162 : i32 to vector<8x1xi32>
      %660 = arith.cmpi eq, %605, %659 : vector<8x1xi32>
      %661 = vector.extract_strided_slice %117 {offsets = [2, 0], sizes = [1, 128], strides = [1, 1]} : vector<8x128xf32> to vector<1x128xf32>
      %cst_163 = arith.constant 0.000000e+00 : f32
      %662 = vector.shape_cast %660 : vector<8x1xi1> to vector<8x1xi1>
      %663 = vector.broadcast %662 : vector<8x1xi1> to vector<8x128xi1>
      %664 = vector.shape_cast %661 : vector<1x128xf32> to vector<1x128xf32>
      %665 = vector.broadcast %664 : vector<1x128xf32> to vector<8x128xf32>
      %666 = vector.broadcast %cst_163 : f32 to vector<8x128xf32>
      %667 = arith.select %663, %665, %666 : vector<8x128xi1>, vector<8x128xf32>
      %668 = arith.addf %650, %667 : vector<8x128xf32>
      %669 = vector.extract_strided_slice %115 {offsets = [2, 0], sizes = [1, 128], strides = [1, 1]} : vector<8x128xf32> to vector<1x128xf32>
      %cst_164 = arith.constant 0.000000e+00 : f32
      %670 = vector.shape_cast %660 : vector<8x1xi1> to vector<8x1xi1>
      %671 = vector.broadcast %670 : vector<8x1xi1> to vector<8x128xi1>
      %672 = vector.shape_cast %669 : vector<1x128xf32> to vector<1x128xf32>
      %673 = vector.broadcast %672 : vector<1x128xf32> to vector<8x128xf32>
      %674 = vector.broadcast %cst_164 : f32 to vector<8x128xf32>
      %675 = arith.select %671, %673, %674 : vector<8x128xi1>, vector<8x128xf32>
      %676 = arith.addf %658, %675 : vector<8x128xf32>
      %c3_i32_165 = arith.constant 3 : i32
      %677 = vector.broadcast %c3_i32_165 : i32 to vector<8x1xi32>
      %678 = arith.cmpi eq, %605, %677 : vector<8x1xi32>
      %679 = vector.extract_strided_slice %117 {offsets = [3, 0], sizes = [1, 128], strides = [1, 1]} : vector<8x128xf32> to vector<1x128xf32>
      %cst_166 = arith.constant 0.000000e+00 : f32
      %680 = vector.shape_cast %678 : vector<8x1xi1> to vector<8x1xi1>
      %681 = vector.broadcast %680 : vector<8x1xi1> to vector<8x128xi1>
      %682 = vector.shape_cast %679 : vector<1x128xf32> to vector<1x128xf32>
      %683 = vector.broadcast %682 : vector<1x128xf32> to vector<8x128xf32>
      %684 = vector.broadcast %cst_166 : f32 to vector<8x128xf32>
      %685 = arith.select %681, %683, %684 : vector<8x128xi1>, vector<8x128xf32>
      %686 = arith.addf %668, %685 : vector<8x128xf32>
      %687 = vector.extract_strided_slice %115 {offsets = [3, 0], sizes = [1, 128], strides = [1, 1]} : vector<8x128xf32> to vector<1x128xf32>
      %cst_167 = arith.constant 0.000000e+00 : f32
      %688 = vector.shape_cast %678 : vector<8x1xi1> to vector<8x1xi1>
      %689 = vector.broadcast %688 : vector<8x1xi1> to vector<8x128xi1>
      %690 = vector.shape_cast %687 : vector<1x128xf32> to vector<1x128xf32>
      %691 = vector.broadcast %690 : vector<1x128xf32> to vector<8x128xf32>
      %692 = vector.broadcast %cst_167 : f32 to vector<8x128xf32>
      %693 = arith.select %689, %691, %692 : vector<8x128xi1>, vector<8x128xf32>
      %694 = arith.addf %676, %693 : vector<8x128xf32>
      %c4_i32_168 = arith.constant 4 : i32
      %695 = vector.broadcast %c4_i32_168 : i32 to vector<8x1xi32>
      %696 = arith.cmpi eq, %605, %695 : vector<8x1xi32>
      %697 = vector.extract_strided_slice %117 {offsets = [4, 0], sizes = [1, 128], strides = [1, 1]} : vector<8x128xf32> to vector<1x128xf32>
      %cst_169 = arith.constant 0.000000e+00 : f32
      %698 = vector.shape_cast %696 : vector<8x1xi1> to vector<8x1xi1>
      %699 = vector.broadcast %698 : vector<8x1xi1> to vector<8x128xi1>
      %700 = vector.shape_cast %697 : vector<1x128xf32> to vector<1x128xf32>
      %701 = vector.broadcast %700 : vector<1x128xf32> to vector<8x128xf32>
      %702 = vector.broadcast %cst_169 : f32 to vector<8x128xf32>
      %703 = arith.select %699, %701, %702 : vector<8x128xi1>, vector<8x128xf32>
      %704 = arith.addf %686, %703 : vector<8x128xf32>
      %705 = vector.extract_strided_slice %115 {offsets = [4, 0], sizes = [1, 128], strides = [1, 1]} : vector<8x128xf32> to vector<1x128xf32>
      %cst_170 = arith.constant 0.000000e+00 : f32
      %706 = vector.shape_cast %696 : vector<8x1xi1> to vector<8x1xi1>
      %707 = vector.broadcast %706 : vector<8x1xi1> to vector<8x128xi1>
      %708 = vector.shape_cast %705 : vector<1x128xf32> to vector<1x128xf32>
      %709 = vector.broadcast %708 : vector<1x128xf32> to vector<8x128xf32>
      %710 = vector.broadcast %cst_170 : f32 to vector<8x128xf32>
      %711 = arith.select %707, %709, %710 : vector<8x128xi1>, vector<8x128xf32>
      %712 = arith.addf %694, %711 : vector<8x128xf32>
      %c5_i32_171 = arith.constant 5 : i32
      %713 = vector.broadcast %c5_i32_171 : i32 to vector<8x1xi32>
      %714 = arith.cmpi eq, %605, %713 : vector<8x1xi32>
      %715 = vector.extract_strided_slice %117 {offsets = [5, 0], sizes = [1, 128], strides = [1, 1]} : vector<8x128xf32> to vector<1x128xf32>
      %cst_172 = arith.constant 0.000000e+00 : f32
      %716 = vector.shape_cast %714 : vector<8x1xi1> to vector<8x1xi1>
      %717 = vector.broadcast %716 : vector<8x1xi1> to vector<8x128xi1>
      %718 = vector.shape_cast %715 : vector<1x128xf32> to vector<1x128xf32>
      %719 = vector.broadcast %718 : vector<1x128xf32> to vector<8x128xf32>
      %720 = vector.broadcast %cst_172 : f32 to vector<8x128xf32>
      %721 = arith.select %717, %719, %720 : vector<8x128xi1>, vector<8x128xf32>
      %722 = arith.addf %704, %721 : vector<8x128xf32>
      %723 = vector.extract_strided_slice %115 {offsets = [5, 0], sizes = [1, 128], strides = [1, 1]} : vector<8x128xf32> to vector<1x128xf32>
      %cst_173 = arith.constant 0.000000e+00 : f32
      %724 = vector.shape_cast %714 : vector<8x1xi1> to vector<8x1xi1>
      %725 = vector.broadcast %724 : vector<8x1xi1> to vector<8x128xi1>
      %726 = vector.shape_cast %723 : vector<1x128xf32> to vector<1x128xf32>
      %727 = vector.broadcast %726 : vector<1x128xf32> to vector<8x128xf32>
      %728 = vector.broadcast %cst_173 : f32 to vector<8x128xf32>
      %729 = arith.select %725, %727, %728 : vector<8x128xi1>, vector<8x128xf32>
      %730 = arith.addf %712, %729 : vector<8x128xf32>
      %c6_i32_174 = arith.constant 6 : i32
      %731 = vector.broadcast %c6_i32_174 : i32 to vector<8x1xi32>
      %732 = arith.cmpi eq, %605, %731 : vector<8x1xi32>
      %733 = vector.extract_strided_slice %117 {offsets = [6, 0], sizes = [1, 128], strides = [1, 1]} : vector<8x128xf32> to vector<1x128xf32>
      %cst_175 = arith.constant 0.000000e+00 : f32
      %734 = vector.shape_cast %732 : vector<8x1xi1> to vector<8x1xi1>
      %735 = vector.broadcast %734 : vector<8x1xi1> to vector<8x128xi1>
      %736 = vector.shape_cast %733 : vector<1x128xf32> to vector<1x128xf32>
      %737 = vector.broadcast %736 : vector<1x128xf32> to vector<8x128xf32>
      %738 = vector.broadcast %cst_175 : f32 to vector<8x128xf32>
      %739 = arith.select %735, %737, %738 : vector<8x128xi1>, vector<8x128xf32>
      %740 = arith.addf %722, %739 : vector<8x128xf32>
      %741 = vector.extract_strided_slice %115 {offsets = [6, 0], sizes = [1, 128], strides = [1, 1]} : vector<8x128xf32> to vector<1x128xf32>
      %cst_176 = arith.constant 0.000000e+00 : f32
      %742 = vector.shape_cast %732 : vector<8x1xi1> to vector<8x1xi1>
      %743 = vector.broadcast %742 : vector<8x1xi1> to vector<8x128xi1>
      %744 = vector.shape_cast %741 : vector<1x128xf32> to vector<1x128xf32>
      %745 = vector.broadcast %744 : vector<1x128xf32> to vector<8x128xf32>
      %746 = vector.broadcast %cst_176 : f32 to vector<8x128xf32>
      %747 = arith.select %743, %745, %746 : vector<8x128xi1>, vector<8x128xf32>
      %748 = arith.addf %730, %747 : vector<8x128xf32>
      %c7_i32_177 = arith.constant 7 : i32
      %749 = vector.broadcast %c7_i32_177 : i32 to vector<8x1xi32>
      %750 = arith.cmpi eq, %605, %749 : vector<8x1xi32>
      %751 = vector.extract_strided_slice %117 {offsets = [7, 0], sizes = [1, 128], strides = [1, 1]} : vector<8x128xf32> to vector<1x128xf32>
      %cst_178 = arith.constant 0.000000e+00 : f32
      %752 = vector.shape_cast %750 : vector<8x1xi1> to vector<8x1xi1>
      %753 = vector.broadcast %752 : vector<8x1xi1> to vector<8x128xi1>
      %754 = vector.shape_cast %751 : vector<1x128xf32> to vector<1x128xf32>
      %755 = vector.broadcast %754 : vector<1x128xf32> to vector<8x128xf32>
      %756 = vector.broadcast %cst_178 : f32 to vector<8x128xf32>
      %757 = arith.select %753, %755, %756 : vector<8x128xi1>, vector<8x128xf32>
      %758 = arith.addf %740, %757 : vector<8x128xf32>
      %759 = vector.extract_strided_slice %115 {offsets = [7, 0], sizes = [1, 128], strides = [1, 1]} : vector<8x128xf32> to vector<1x128xf32>
      %cst_179 = arith.constant 0.000000e+00 : f32
      %760 = vector.shape_cast %750 : vector<8x1xi1> to vector<8x1xi1>
      %761 = vector.broadcast %760 : vector<8x1xi1> to vector<8x128xi1>
      %762 = vector.shape_cast %759 : vector<1x128xf32> to vector<1x128xf32>
      %763 = vector.broadcast %762 : vector<1x128xf32> to vector<8x128xf32>
      %764 = vector.broadcast %cst_179 : f32 to vector<8x128xf32>
      %765 = arith.select %761, %763, %764 : vector<8x128xi1>, vector<8x128xf32>
      %766 = arith.addf %748, %765 : vector<8x128xf32>
      %c0_180 = arith.constant 0 : index
      %c0_181 = arith.constant 0 : index
      %767 = vector.load %arg12[%c0_180, %c0_181] : memref<8x128xf32, #tpu.memory_space<vmem>>, vector<8x128xf32>
      tpu.vector_store %arg12[%c0_180, %c0_181], %758 {strides = array<i32>} : memref<8x128xf32, #tpu.memory_space<vmem>>, vector<8x128xf32>,
      %c0_182 = arith.constant 0 : index
      %c0_183 = arith.constant 0 : index
      %768 = vector.load %arg13[%c0_182, %c0_183] : memref<8x128xf32, #tpu.memory_space<vmem>>, vector<8x128xf32>
      tpu.vector_store %arg13[%c0_182, %c0_183], %766 {strides = array<i32>} : memref<8x128xf32, #tpu.memory_space<vmem>>, vector<8x128xf32>,
      %c0_184 = arith.constant 0 : index
      %c0_185 = arith.constant 0 : index
      %769 = vector.load %arg14[%c0_184, %c0_185] : memref<8x1xi32, #tpu.memory_space<vmem>>, vector<8x1xi32>
      tpu.vector_store %arg14[%c0_184, %c0_185], %600 {strides = array<i32>} : memref<8x1xi32, #tpu.memory_space<vmem>>, vector<8x1xi32>,
      %c0_186 = arith.constant 0 : index
      %c0_187 = arith.constant 0 : index
      %770 = vector.load %arg15[%c0_186, %c0_187] : memref<8x1xf32, #tpu.memory_space<vmem>>, vector<8x1xf32>
      tpu.vector_store %arg15[%c0_186, %c0_187], %610 {strides = array<i32>} : memref<8x1xf32, #tpu.memory_space<vmem>>, vector<8x1xf32>,
      %771 = arith.index_cast %arg17 : i32 to index
      %c0_188 = arith.constant 0 : index
      %772 = vector.load %arg10[%771, %c0_188] : memref<8x8xi32, #tpu.memory_space<vmem>>, vector<1x8xi32>
      tpu.vector_store %arg10[%771, %c0_188], %615 {strides = array<i32>} : memref<8x8xi32, #tpu.memory_space<vmem>>, vector<1x8xi32>,
      %773 = arith.index_cast %arg17 : i32 to index
      %c0_189 = arith.constant 0 : index
      %774 = vector.load %arg11[%773, %c0_189] : memref<8x8xi32, #tpu.memory_space<vmem>>, vector<1x8xi32>
      tpu.vector_store %arg11[%773, %c0_189], %620 {strides = array<i32>} : memref<8x8xi32, #tpu.memory_space<vmem>>, vector<1x8xi32>,
    }
    %c8_i32_18 = arith.constant 8 : i32
    return
  }
}

</mosaic_0001>

<llo_original>
// kernel: tpu_custom_call.1
$region0: #{tpu_custom_call.1}
  #allocation0 [shape = 'u32[]', space=smem, size = 0x4, offset = 0x4, fixed_abs, tag = 'smem constant byte address 0x4 - core index']
  #allocation1 [shape = 'u32[144,128]{1,0:T(1,128)}', space=vmem, size = 0x12000, scoped, tag = 'internal scratch']
  #allocation2 [shape = 'f32[8,128]{1,0:T(8,128)}', space=vmem, size = 0x1000, scoped, tag = 'scratch operand']
  #allocation3 [shape = 'f32[8,128]{1,0:T(8,128)}', space=vmem, size = 0x1000, scoped, tag = 'scratch operand']
  #allocation4 [shape = 's32[8,1]{1,0:T(8,128)}', space=vmem, size = 0x1000, scoped, tag = 'scratch operand']
  #allocation5 [shape = 'f32[8,1]{1,0:T(8,128)}', space=vmem, size = 0x1000, scoped, tag = 'scratch operand']
  #allocation6 [shape = 'bf16[8,512]{1,0:T(8,128)(2,1)}', space=vmem, size = 0x2000, scoped, tag = 'scratch operand']
  %s0 = inlined_call_operand.hbm [shape: bf16[128,128], index: 0, kind: input, shape index: {}]
  %s1 = inlined_call_operand.hbm [shape: bf16[8,8,128], index: 1, kind: input, shape index: {}]
  %s2 = inlined_call_operand.hbm [shape: bf16[8,4,128], index: 2, kind: input, shape index: {}]
  %s3 = inlined_call_operand.vmem [shape: f32[8,8], index: 3, kind: input, shape index: {}]
  %s4 = inlined_call_operand.hbm [shape: bf16[512,512], index: 4, kind: input, shape index: {}]
  %s5 = inlined_call_operand.hbm [shape: f32[1,512], index: 5, kind: input, shape index: {}]
  %s6 = inlined_call_operand.hbm [shape: bf16[128,128], index: 6, kind: input, shape index: {}]
  %s7 = inlined_call_operand.vmem [shape: f32[1,128], index: 7, kind: input, shape index: {}]
  %s8 = inlined_call_operand.vmem [shape: f32[8,128], index: 8, kind: input, shape index: {}]
  %s9 = inlined_call_operand.vmem [shape: f32[8,128], index: 9, kind: input, shape index: {}]
  %s10 = inlined_call_operand.hbm [shape: s32[8,8], index: 10, kind: output, shape index: {0}]
  %s11 = inlined_call_operand.hbm [shape: s32[8,8], index: 11, kind: output, shape index: {1}]
  %12 = xla_tuple %s10, %s11
  %s13 = sld [smem:[#allocation0]]
  $region89: #{tpu_custom_call.1} parent=0
    _
  %s15 = ssub.s32 1, %s13
  %s16 = scalar_select 0, %s15, %s13
  $region1: #{tpu_custom_call.1} parent=0
    #allocation7 [shape = 'u8[32768]{0}', space=vmem, size = 0x8000, scoped, tag = 'input window, operand 0, single buffered']
    #allocation8 [shape = 's32[1]{0}', space=sflag, size = 0x4, scoped, tag = 'scoped memory for tpu_custom_call.1']
    #allocation9 [shape = 's32[1]{0}', space=sflag, size = 0x4, scoped, tag = 'scoped memory for tpu_custom_call.1']
    #allocation10 [shape = 'u8[16384]{0}', space=vmem, size = 0x4000, scoped, tag = 'input window, operand 1, single buffered']
    #allocation11 [shape = 's32[1]{0}', space=sflag, size = 0x4, scoped, tag = 'scoped memory for tpu_custom_call.1']
    #allocation12 [shape = 'u8[8192]{0}', space=vmem, size = 0x2000, scoped, tag = 'input window, operand 2, single buffered']
    #allocation13 [shape = 'u8[524288]{0}', space=vmem, size = 0x80000, scoped, tag = 'input window, operand 4, single buffered']
    #allocation14 [shape = 's32[1]{0}', space=sflag, size = 0x4, scoped, tag = 'scoped memory for tpu_custom_call.1']
    #allocation15 [shape = 'u8[2048]{0}', space=vmem, size = 0x800, scoped, tag = 'input window, operand 5, single buffered']
    #allocation16 [shape = 'u8[32768]{0}', space=vmem, size = 0x8000, scoped, tag = 'input window, operand 6, single buffered']
    #allocation17 [shape = 's32[1]{0}', space=sflag, size = 0x4, scoped, tag = 'scoped memory for tpu_custom_call.1']
    #allocation18 [shape = 'u8[4096]{0}', space=vmem, size = 0x1000, scoped, tag = 'output window, operand 0, single buffered']
    #allocation19 [shape = 'u8[4096]{0}', space=vmem, size = 0x1000, scoped, tag = 'output window, operand 1, single buffered']
    #allocation20 [shape = 's32[1]{0}', space=sflag, size = 0x4, scoped, tag = 'scoped memory for tpu_custom_call.1']
    %17 = vsyncpa [#allocation8], 0
    %18 = vsyncpa [#allocation11], 0
    %19 = vsyncpa [#allocation14], 0
    %20 = vsyncpa [#allocation17], 0
    %21 = vsyncpa [#allocation9], 0
    %22 = vsyncpa [#allocation20], 0
    // Predicated region
    $region2: #{tpu_custom_call.1} parent=1 // pred_check
      _
    $region3: #{tpu_custom_call.1} parent=1 // pred_check_branch
      %24 = sbr.rel (0) target = $region5
    $region4: #{tpu_custom_call.1} parent=1 // pred_region
      %s26 = ssub.s32 1024, 1024
      %27 = vsyncadd [#allocation8], %s26
      %s28 = sshll.u32 [#allocation7], 4
      %s29 = int_to_ptr.vmem [resolvable:$true] %s28
      %34 = dma.hbm_to_vmem [thread:$0]  %s0, 1024, %s29, [#allocation8], 64, 64, 4
    $region5: #{tpu_custom_call.1} parent=1 // pred_fallthru
      _
    // Predicated region
    $region6: #{tpu_custom_call.1} parent=1 // pred_check
      _
    $region7: #{tpu_custom_call.1} parent=1 // pred_check_branch
      %36 = sbr.rel (0) target = $region9
    $region8: #{tpu_custom_call.1} parent=1 // pred_region
      %s38 = ssub.s32 512, 512
      %39 = vsyncadd [#allocation11], %s38
      %s40 = sshll.u32 [#allocation10], 4
      %s41 = int_to_ptr.vmem [resolvable:$true] %s40
      %46 = dma.hbm_to_vmem [thread:$0]  %s1, 512, %s41, [#allocation11], 64, 64, 4
    $region9: #{tpu_custom_call.1} parent=1 // pred_fallthru
      _
    // Predicated region
    $region10: #{tpu_custom_call.1} parent=1 // pred_check
      _
    $region11: #{tpu_custom_call.1} parent=1 // pred_check_branch
      %48 = sbr.rel (0) target = $region13
    $region12: #{tpu_custom_call.1} parent=1 // pred_region
      %s50 = ssub.s32 256, 256
      %51 = vsyncadd [#allocation11], %s50
      %s52 = sshll.u32 [#allocation12], 4
      %s53 = int_to_ptr.vmem [resolvable:$true] %s52
      %58 = dma.hbm_to_vmem [thread:$0]  %s2, 256, %s53, [#allocation11], 32, 32, 2
    $region13: #{tpu_custom_call.1} parent=1 // pred_fallthru
      _
    // Predicated region
    $region14: #{tpu_custom_call.1} parent=1 // pred_check
      _
    $region15: #{tpu_custom_call.1} parent=1 // pred_check_branch
      %60 = sbr.rel (0) target = $region17
    $region16: #{tpu_custom_call.1} parent=1 // pred_region
      _
    $region17: #{tpu_custom_call.1} parent=1 // pred_fallthru
      _
    // Predicated region
    $region18: #{tpu_custom_call.1} parent=1 // pred_check
      _
    $region19: #{tpu_custom_call.1} parent=1 // pred_check_branch
      %62 = sbr.rel (0) target = $region21
    $region20: #{tpu_custom_call.1} parent=1 // pred_region
      %s64 = ssub.s32 16384, 16384
      %65 = vsyncadd [#allocation14], %s64
      %s66 = sshll.u32 [#allocation13], 4
      %s67 = int_to_ptr.vmem [resolvable:$true] %s66
      %72 = dma.hbm_to_vmem [thread:$0]  %s4, 16384, %s67, [#allocation14], 256, 256, 16
    $region21: #{tpu_custom_call.1} parent=1 // pred_fallthru
      _
    // Predicated region
    $region22: #{tpu_custom_call.1} parent=1 // pred_check
      _
    $region23: #{tpu_custom_call.1} parent=1 // pred_check_branch
      %74 = sbr.rel (0) target = $region25
    $region24: #{tpu_custom_call.1} parent=1 // pred_region
      %s76 = ssub.s32 64, 64
      %77 = vsyncadd [#allocation14], %s76
      %s79 = sshll.u32 [#allocation15], 4
      %s80 = int_to_ptr.vmem [resolvable:$true] %s79
      %82 = dma.hbm_to_vmem [thread:$0]  %s5, 64, %s80, [#allocation14]
    $region25: #{tpu_custom_call.1} parent=1 // pred_fallthru
      _
    // Predicated region
    $region26: #{tpu_custom_call.1} parent=1 // pred_check
      _
    $region27: #{tpu_custom_call.1} parent=1 // pred_check_branch
      %84 = sbr.rel (0) target = $region29
    $region28: #{tpu_custom_call.1} parent=1 // pred_region
      %s86 = ssub.s32 1024, 1024
      %87 = vsyncadd [#allocation17], %s86
      %s88 = sshll.u32 [#allocation16], 4
      %s89 = int_to_ptr.vmem [resolvable:$true] %s88
      %94 = dma.hbm_to_vmem [thread:$0]  %s6, 1024, %s89, [#allocation17], 64, 64, 4
    $region29: #{tpu_custom_call.1} parent=1 // pred_fallthru
      _
    // Predicated region
    $region30: #{tpu_custom_call.1} parent=1 // pred_check
      _
    $region31: #{tpu_custom_call.1} parent=1 // pred_check_branch
      %96 = sbr.rel (0) target = $region33
    $region32: #{tpu_custom_call.1} parent=1 // pred_region
      _
    $region33: #{tpu_custom_call.1} parent=1 // pred_fallthru
      _
    // Predicated region
    $region34: #{tpu_custom_call.1} parent=1 // pred_check
      _
    $region35: #{tpu_custom_call.1} parent=1 // pred_check_branch
      %98 = sbr.rel (0) target = $region37
    $region36: #{tpu_custom_call.1} parent=1 // pred_region
      _
    $region37: #{tpu_custom_call.1} parent=1 // pred_fallthru
      _
    // Predicated region
    $region38: #{tpu_custom_call.1} parent=1 // pred_check
      _
    $region39: #{tpu_custom_call.1} parent=1 // pred_check_branch
      %100 = sbr.rel (0) target = $region41
    $region40: #{tpu_custom_call.1} parent=1 // pred_region
      _
    $region41: #{tpu_custom_call.1} parent=1 // pred_fallthru
      _
    // Predicated region
    $region42: #{tpu_custom_call.1} parent=1 // pred_check
      _
    $region43: #{tpu_custom_call.1} parent=1 // pred_check_branch
      %102 = sbr.rel (0) target = $region45
    $region44: #{tpu_custom_call.1} parent=1 // pred_region
      %103 = dma.done [#allocation8], 1024
    $region45: #{tpu_custom_call.1} parent=1 // pred_fallthru
      _
    // Predicated region
    $region46: #{tpu_custom_call.1} parent=1 // pred_check
      _
    $region47: #{tpu_custom_call.1} parent=1 // pred_check_branch
      %105 = sbr.rel (0) target = $region49
    $region48: #{tpu_custom_call.1} parent=1 // pred_region
      %106 = dma.done [#allocation11], 512
    $region49: #{tpu_custom_call.1} parent=1 // pred_fallthru
      _
    // Predicated region
    $region50: #{tpu_custom_call.1} parent=1 // pred_check
      _
    $region51: #{tpu_custom_call.1} parent=1 // pred_check_branch
      %108 = sbr.rel (0) target = $region53
    $region52: #{tpu_custom_call.1} parent=1 // pred_region
      %109 = dma.done [#allocation11], 256
    $region53: #{tpu_custom_call.1} parent=1 // pred_fallthru
      _
    // Predicated region
    $region54: #{tpu_custom_call.1} parent=1 // pred_check
      _
    $region55: #{tpu_custom_call.1} parent=1 // pred_check_branch
      %111 = sbr.rel (0) target = $region57
    $region56: #{tpu_custom_call.1} parent=1 // pred_region
      %112 = dma.done [#allocation14], 16384
    $region57: #{tpu_custom_call.1} parent=1 // pred_fallthru
      _
    // Predicated region
    $region58: #{tpu_custom_call.1} parent=1 // pred_check
      _
    $region59: #{tpu_custom_call.1} parent=1 // pred_check_branch
      %114 = sbr.rel (0) target = $region61
    $region60: #{tpu_custom_call.1} parent=1 // pred_region
      %115 = dma.done [#allocation14], 64
    $region61: #{tpu_custom_call.1} parent=1 // pred_fallthru
      _
    // Predicated region
    $region62: #{tpu_custom_call.1} parent=1 // pred_check
      _
    $region63: #{tpu_custom_call.1} parent=1 // pred_check_branch
      %117 = sbr.rel (0) target = $region65
    $region64: #{tpu_custom_call.1} parent=1 // pred_region
      %118 = dma.done [#allocation17], 1024
    $region65: #{tpu_custom_call.1} parent=1 // pred_fallthru
      _
    %v120 = vld [vmem:[%s8] sm:$0xff]
    %121 = vst [vmem:[#allocation2] sm:$0xff] %v120
    %v122 = vld [vmem:[%s9] sm:$0xff]
    %123 = vst [vmem:[#allocation3] sm:$0xff] %v122
    %vm124 = vcmask 7168
    %125 = vst.msk [vmem:[#allocation4] sm:$0xff] %vm124, 1
    %126 = vst.msk [vmem:[#allocation5] sm:$0xff] %vm124, 0.0
    %v127 = vlaneseq
    %v128 = vand.u32 %v127, 127
    %v129 = vcvt.s32.f32 %v128
    %v130 = vlaneseq
    %v131 = vshrl.u32 %v130, 7
    %vm132 = vcmp.lt.s32.totalorder %v131, 0
    %v133 = vsub.s32 0, %v131
    %v134 = vsel %vm132, %v133, %v131
    %v135 = vshrl.u32 %v134, 2
    %v136 = vand.u32 %v134, 3
    %v137 = vsub.s32 0, %v136
    %v138 = vsel %vm132, %v137, %v136
    %vm139 = vcmp.ne.s32.totalorder %v138, 0
    %vm140 = vcmp.lt.s32.totalorder %v138, 0
    %vm141 = vmand %vm140, %vm139
    %v142 = vadd.s32 %v138, 4
    %v143 = vsel %vm141, %v142, %v138
    loop: start=0, step=1, limit=8
    $region66: #{tpu_custom_call.1} parent=1 // loop_pre_header
      _
    $region67: #{tpu_custom_call.1} parent=1 // loop_header
      %s145 = sphi 0, %s149
      %p146 = scmp.ge.s32.totalorder %s145, 8
    $region68: #{tpu_custom_call.1} parent=1 // loop_header_branch
      %148 = sbr.rel (%p146) target = $region72
    $region69: #{tpu_custom_call.1} parent=1 // loop_body
      %v150 = vld [vmem:[#allocation2] sm:$0xff]
      %v151 = vld [vmem:[#allocation3] sm:$0xff]
      %v152 = vld [vmem:[#allocation4] sm:$0xff]
      %v153 = vld [vmem:[#allocation5] sm:$0xff]
      %154 = vset.pattern.permute.xlu0 0
      %155 = vperm.xlu0 %154, %v152
      %v156 = vpop.permute.xlu0 %155
      %vm157 = vcmp.eq.s32.totalorder %v128, %v156
      %v158 = vsel %vm157, 1, 0
      %v159 = vcvt.s32.f32 %v158
      %v160 = vpack.c.bf16 %v159, %v159
      %v161 = vld [vmem:[#allocation7] sm:$0xf]
      %v162 = vld [vmem:[#allocation7 + $0x4] sm:$0xf]
      %v163 = vld [vmem:[#allocation7 + $0x8] sm:$0xf]
      %v164 = vld [vmem:[#allocation7 + $0xc] sm:$0xf]
      %v165 = vld [vmem:[#allocation7 + $0x10] sm:$0xf]
      %v166 = vld [vmem:[#allocation7 + $0x14] sm:$0xf]
      %v167 = vld [vmem:[#allocation7 + $0x18] sm:$0xf]
      %v168 = vld [vmem:[#allocation7 + $0x1c] sm:$0xf]
      %v169 = vld [vmem:[#allocation7 + $0x20] sm:$0xf]
      %v170 = vld [vmem:[#allocation7 + $0x24] sm:$0xf]
      %v171 = vld [vmem:[#allocation7 + $0x28] sm:$0xf]
      %v172 = vld [vmem:[#allocation7 + $0x2c] sm:$0xf]
      %v173 = vld [vmem:[#allocation7 + $0x30] sm:$0xf]
      %v174 = vld [vmem:[#allocation7 + $0x34] sm:$0xf]
      %v175 = vld [vmem:[#allocation7 + $0x38] sm:$0xf]
      %v176 = vld [vmem:[#allocation7 + $0x3c] sm:$0xf]
      %v193 = vunpack.c.l.b16 %v161
      %v194 = vunpack.c.l.b16 %v162
      %v195 = vunpack.c.l.b16 %v163
      %v196 = vunpack.c.l.b16 %v164
      %v197 = vunpack.c.l.b16 %v165
      %v198 = vunpack.c.l.b16 %v166
      %v199 = vunpack.c.l.b16 %v167
      %v200 = vunpack.c.l.b16 %v168
      %v201 = vunpack.c.l.b16 %v169
      %v202 = vunpack.c.l.b16 %v170
      %v203 = vunpack.c.l.b16 %v171
      %v204 = vunpack.c.l.b16 %v172
      %v205 = vunpack.c.l.b16 %v173
      %v206 = vunpack.c.l.b16 %v174
      %v207 = vunpack.c.l.b16 %v175
      %v208 = vunpack.c.l.b16 %v176
      %v209 = vpack.c.b16 %v194, %v193
      %v210 = vpack.c.b16 %v196, %v195
      %v211 = vpack.c.b16 %v198, %v197
      %v212 = vpack.c.b16 %v200, %v199
      %v213 = vpack.c.b16 %v202, %v201
      %v214 = vpack.c.b16 %v204, %v203
      %v215 = vpack.c.b16 %v206, %v205
      %v216 = vpack.c.b16 %v208, %v207
      %225 = vmatprep.subr.bf16.mxu0 0
      %226 = vmatpush1.bf16.msra.mxu0 %v209
      %227 = vmatprep.subr.bf16.mxu0 0
      %228 = vmatpush1.bf16.msra.mxu0 %v210
      %229 = vmatprep.subr.bf16.mxu0 0
      %230 = vmatpush1.bf16.msra.mxu0 %v211
      %231 = vmatprep.subr.bf16.mxu0 0
      %232 = vmatpush1.bf16.msra.mxu0 %v212
      %233 = vmatprep.subr.bf16.mxu0 0
      %234 = vmatpush1.bf16.msra.mxu0 %v213
      %235 = vmatprep.subr.bf16.mxu0 0
      %236 = vmatpush1.bf16.msra.mxu0 %v214
      %237 = vmatprep.subr.bf16.mxu0 0
      %238 = vmatpush1.bf16.msra.mxu0 %v215
      %239 = vmatprep.subr.bf16.mxu0 0
      %240 = vmatpush1.bf16.msra.mxu0 %v216
      %241 = vmatprep.subr.bf16.mxu0 0
      %242 = vmatpush1.bf16.msra.mxu0 0
      %243 = vmatprep.subr.bf16.mxu0 0
      %244 = vmatpush1.bf16.msra.mxu0 0
      %245 = vmatprep.subr.bf16.mxu0 0
      %246 = vmatpush1.bf16.msra.mxu0 0
      %247 = vmatprep.subr.bf16.mxu0 0
      %248 = vmatpush1.bf16.msra.mxu0 0
      %249 = vmatprep.subr.bf16.mxu0 0
      %250 = vmatpush1.bf16.msra.mxu0 0
      %251 = vmatprep.subr.bf16.mxu0 0
      %252 = vmatpush1.bf16.msra.mxu0 0
      %253 = vmatprep.subr.bf16.mxu0 0
      %254 = vmatpush1.bf16.msra.mxu0 0
      %255 = vmatprep.subr.bf16.mxu0 0
      %256 = vmatpush1.bf16.msra.mxu0 0
      %257 = vmatprep.mubr.bf16.mxu0 0
      %258 = vmatmul.mubr.bf16.gmra.mrb[0].mxu0 %v160
      %v259 = vpop.f32.mrb[0].mxu0
      %v260 = vadd.f32 0.0, %v259
      %v261 = vpop.f32.mrb[0].mxu0
      %v262 = vpop.f32.mrb[0].mxu0
      %v263 = vpop.f32.mrb[0].mxu0
      %264 = vdwg.mxu0
      %v265 = vpack.c.bf16 %v150, %v150
      %v268 = vunpack.c.l.s4 1966171168
      %v269 = vunpack.c.0.s8 %v268
      %v270 = vlaneseq
      %v271 = vshrl.u32 %v270, 7
      %v272 = vsub.s32 %v269, %v271
      %v273 = vrot.slane %v265, %v272
      %v274 = vcombine.high %v273, %v273
      %v276 = vunpack.c.l.s4 1966171168
      %v277 = vunpack.c.0.s8 %v276
      %v278 = vlaneseq
      %v279 = vshrl.u32 %v278, 7
      %v280 = vsub.s32 %v277, %v279
      %v281 = vrot.slane %v273, %v280
      %v283 = vunpack.c.l.s4 1966171168
      %v284 = vunpack.c.0.s8 %v283
      %v285 = vlaneseq
      %v286 = vshrl.u32 %v285, 7
      %v287 = vsub.s32 %v284, %v286
      %v288 = vrot.slane %v274, %v287
      %v289 = vcombine.high %v281, %v281
      %v290 = vcombine.high %v288, %v288
      %v291 = vunpack.i.l.s16 %v281
      %v292 = vunpack.i.h.s16 %v281
      %v293 = vunpack.i.l.s16 %v288
      %v294 = vunpack.i.h.s16 %v288
      %v295 = vunpack.i.l.s16 %v289
      %v296 = vunpack.i.h.s16 %v289
      %v297 = vunpack.i.l.s16 %v290
      %v298 = vunpack.i.h.s16 %v290
      %v299 = vld [vmem:[#allocation10] sm:$0xf]
      %v300 = vld [vmem:[#allocation10 + $0x4] sm:$0xf]
      %v301 = vld [vmem:[#allocation10 + $0x8] sm:$0xf]
      %v302 = vld [vmem:[#allocation10 + $0xc] sm:$0xf]
      %v303 = vld [vmem:[#allocation10 + $0x10] sm:$0xf]
      %v304 = vld [vmem:[#allocation10 + $0x14] sm:$0xf]
      %v305 = vld [vmem:[#allocation10 + $0x18] sm:$0xf]
      %v306 = vld [vmem:[#allocation10 + $0x1c] sm:$0xf]
      %v307 = vpack.i.b16 %v291, %v291
      %v308 = vlaneseq
      %v309 = vshrl.u32 %v308, 7
      %v310 = vsub.s32 0, %v309
      %v311 = vrot.slane %v307, %v310
      %313 = vmatprep.subr.bf16.mxu0 0
      %314 = vmatpush1.bf16.xpose.msra.mxu0 %v299
      %315 = vmatprep.subr.bf16.mxu0 0
      %316 = vmatpush1.bf16.xpose.msra.mxu0 0
      %317 = vmatprep.subr.bf16.mxu0 0
      %318 = vmatpush1.bf16.xpose.msra.mxu0 0
      %319 = vmatprep.subr.bf16.mxu0 0
      %320 = vmatpush1.bf16.xpose.msra.mxu0 0
      %321 = vmatprep.subr.bf16.mxu0 0
      %322 = vmatpush1.bf16.xpose.msra.mxu0 0
      %323 = vmatprep.subr.bf16.mxu0 0
      %324 = vmatpush1.bf16.xpose.msra.mxu0 0
      %325 = vmatprep.subr.bf16.mxu0 0
      %326 = vmatpush1.bf16.xpose.msra.mxu0 0
      %327 = vmatprep.subr.bf16.mxu0 0
      %328 = vmatpush1.bf16.xpose.msra.mxu0 0
      %329 = vmatprep.subr.bf16.mxu0 0
      %330 = vmatpush1.bf16.xpose.msra.mxu0 0
      %331 = vmatprep.subr.bf16.mxu0 0
      %332 = vmatpush1.bf16.xpose.msra.mxu0 0
      %333 = vmatprep.subr.bf16.mxu0 0
      %334 = vmatpush1.bf16.xpose.msra.mxu0 0
      %335 = vmatprep.subr.bf16.mxu0 0
      %336 = vmatpush1.bf16.xpose.msra.mxu0 0
      %337 = vmatprep.subr.bf16.mxu0 0
      %338 = vmatpush1.bf16.xpose.msra.mxu0 0
      %339 = vmatprep.subr.bf16.mxu0 0
      %340 = vmatpush1.bf16.xpose.msra.mxu0 0
      %341 = vmatprep.subr.bf16.mxu0 0
      %342 = vmatpush1.bf16.xpose.msra.mxu0 0
      %343 = vmatprep.subr.bf16.mxu0 0
      %344 = vmatpush1.bf16.xpose.msra.mxu0 0
      %345 = vmatprep.mubr.bf16.mxu0 0
      %346 = vmatmul.mubr.bf16.gmra.mrb[0].mxu0 %v311
      %v347 = vpop.f32.mrb[0].mxu0
      %v348 = vadd.f32 0.0, %v347
      %v349 = vpop.f32.mrb[0].mxu0
      %v350 = vpop.f32.mrb[0].mxu0
      %v351 = vpop.f32.mrb[0].mxu0
      %352 = vdwg.mxu0
      %v353 = vpack.i.b16 %v292, %v292
      %v354 = vlaneseq
      %v355 = vshrl.u32 %v354, 7
      %v356 = vsub.s32 0, %v355
      %v357 = vrot.slane %v353, %v356
      %359 = vmatprep.subr.bf16.mxu0 0
      %360 = vmatpush1.bf16.xpose.msra.mxu0 %v300
      %361 = vmatprep.subr.bf16.mxu0 0
      %362 = vmatpush1.bf16.xpose.msra.mxu0 0
      %363 = vmatprep.subr.bf16.mxu0 0
      %364 = vmatpush1.bf16.xpose.msra.mxu0 0
      %365 = vmatprep.subr.bf16.mxu0 0
      %366 = vmatpush1.bf16.xpose.msra.mxu0 0
      %367 = vmatprep.subr.bf16.mxu0 0
      %368 = vmatpush1.bf16.xpose.msra.mxu0 0
      %369 = vmatprep.subr.bf16.mxu0 0
      %370 = vmatpush1.bf16.xpose.msra.mxu0 0
      %371 = vmatprep.subr.bf16.mxu0 0
      %372 = vmatpush1.bf16.xpose.msra.mxu0 0
      %373 = vmatprep.subr.bf16.mxu0 0
      %374 = vmatpush1.bf16.xpose.msra.mxu0 0
      %375 = vmatprep.subr.bf16.mxu0 0
      %376 = vmatpush1.bf16.xpose.msra.mxu0 0
      %377 = vmatprep.subr.bf16.mxu0 0
      %378 = vmatpush1.bf16.xpose.msra.mxu0 0
      %379 = vmatprep.subr.bf16.mxu0 0
      %380 = vmatpush1.bf16.xpose.msra.mxu0 0
      %381 = vmatprep.subr.bf16.mxu0 0
      %382 = vmatpush1.bf16.xpose.msra.mxu0 0
      %383 = vmatprep.subr.bf16.mxu0 0
      %384 = vmatpush1.bf16.xpose.msra.mxu0 0
      %385 = vmatprep.subr.bf16.mxu0 0
      %386 = vmatpush1.bf16.xpose.msra.mxu0 0
      %387 = vmatprep.subr.bf16.mxu0 0
      %388 = vmatpush1.bf16.xpose.msra.mxu0 0
      %389 = vmatprep.subr.bf16.mxu0 0
      %390 = vmatpush1.bf16.xpose.msra.mxu0 0
      %391 = vmatprep.mubr.bf16.mxu0 0
      %392 = vmatmul.mubr.bf16.gmra.mrb[0].mxu0 %v357
      %v393 = vpop.f32.mrb[0].mxu0
      %v394 = vadd.f32 0.0, %v393
      %v395 = vpop.f32.mrb[0].mxu0
      %v396 = vpop.f32.mrb[0].mxu0
      %v397 = vpop.f32.mrb[0].mxu0
      %398 = vdwg.mxu0
      %v399 = vpack.i.b16 %v293, %v293
      %v400 = vlaneseq
      %v401 = vshrl.u32 %v400, 7
      %v402 = vsub.s32 0, %v401
      %v403 = vrot.slane %v399, %v402
      %405 = vmatprep.subr.bf16.mxu0 0
      %406 = vmatpush1.bf16.xpose.msra.mxu0 %v301
      %407 = vmatprep.subr.bf16.mxu0 0
      %408 = vmatpush1.bf16.xpose.msra.mxu0 0
      %409 = vmatprep.subr.bf16.mxu0 0
      %410 = vmatpush1.bf16.xpose.msra.mxu0 0
      %411 = vmatprep.subr.bf16.mxu0 0
      %412 = vmatpush1.bf16.xpose.msra.mxu0 0
      %413 = vmatprep.subr.bf16.mxu0 0
      %414 = vmatpush1.bf16.xpose.msra.mxu0 0
      %415 = vmatprep.subr.bf16.mxu0 0
      %416 = vmatpush1.bf16.xpose.msra.mxu0 0
      %417 = vmatprep.subr.bf16.mxu0 0
      %418 = vmatpush1.bf16.xpose.msra.mxu0 0
      %419 = vmatprep.subr.bf16.mxu0 0
      %420 = vmatpush1.bf16.xpose.msra.mxu0 0
      %421 = vmatprep.subr.bf16.mxu0 0
      %422 = vmatpush1.bf16.xpose.msra.mxu0 0
      %423 = vmatprep.subr.bf16.mxu0 0
      %424 = vmatpush1.bf16.xpose.msra.mxu0 0
      %425 = vmatprep.subr.bf16.mxu0 0
      %426 = vmatpush1.bf16.xpose.msra.mxu0 0
      %427 = vmatprep.subr.bf16.mxu0 0
      %428 = vmatpush1.bf16.xpose.msra.mxu0 0
      %429 = vmatprep.subr.bf16.mxu0 0
      %430 = vmatpush1.bf16.xpose.msra.mxu0 0
      %431 = vmatprep.subr.bf16.mxu0 0
      %432 = vmatpush1.bf16.xpose.msra.mxu0 0
      %433 = vmatprep.subr.bf16.mxu0 0
      %434 = vmatpush1.bf16.xpose.msra.mxu0 0
      %435 = vmatprep.subr.bf16.mxu0 0
      %436 = vmatpush1.bf16.xpose.msra.mxu0 0
      %437 = vmatprep.mubr.bf16.mxu0 0
      %438 = vmatmul.mubr.bf16.gmra.mrb[0].mxu0 %v403
      %v439 = vpop.f32.mrb[0].mxu0
      %v440 = vadd.f32 0.0, %v439
      %v441 = vpop.f32.mrb[0].mxu0
      %v442 = vpop.f32.mrb[0].mxu0
      %v443 = vpop.f32.mrb[0].mxu0
      %444 = vdwg.mxu0
      %v445 = vpack.i.b16 %v294, %v294
      %v446 = vlaneseq
      %v447 = vshrl.u32 %v446, 7
      %v448 = vsub.s32 0, %v447
      %v449 = vrot.slane %v445, %v448
      %451 = vmatprep.subr.bf16.mxu0 0
      %452 = vmatpush1.bf16.xpose.msra.mxu0 %v302
      %453 = vmatprep.subr.bf16.mxu0 0
      %454 = vmatpush1.bf16.xpose.msra.mxu0 0
      %455 = vmatprep.subr.bf16.mxu0 0
      %456 = vmatpush1.bf16.xpose.msra.mxu0 0
      %457 = vmatprep.subr.bf16.mxu0 0
      %458 = vmatpush1.bf16.xpose.msra.mxu0 0
      %459 = vmatprep.subr.bf16.mxu0 0
      %460 = vmatpush1.bf16.xpose.msra.mxu0 0
      %461 = vmatprep.subr.bf16.mxu0 0
      %462 = vmatpush1.bf16.xpose.msra.mxu0 0
      %463 = vmatprep.subr.bf16.mxu0 0
      %464 = vmatpush1.bf16.xpose.msra.mxu0 0
      %465 = vmatprep.subr.bf16.mxu0 0
      %466 = vmatpush1.bf16.xpose.msra.mxu0 0
      %467 = vmatprep.subr.bf16.mxu0 0
      %468 = vmatpush1.bf16.xpose.msra.mxu0 0
      %469 = vmatprep.subr.bf16.mxu0 0
      %470 = vmatpush1.bf16.xpose.msra.mxu0 0
      %471 = vmatprep.subr.bf16.mxu0 0
      %472 = vmatpush1.bf16.xpose.msra.mxu0 0
      %473 = vmatprep.subr.bf16.mxu0 0
      %474 = vmatpush1.bf16.xpose.msra.mxu0 0
      %475 = vmatprep.subr.bf16.mxu0 0
      %476 = vmatpush1.bf16.xpose.msra.mxu0 0
      %477 = vmatprep.subr.bf16.mxu0 0
      %478 = vmatpush1.bf16.xpose.msra.mxu0 0
      %479 = vmatprep.subr.bf16.mxu0 0
      %480 = vmatpush1.bf16.xpose.msra.mxu0 0
      %481 = vmatprep.subr.bf16.mxu0 0
      %482 = vmatpush1.bf16.xpose.msra.mxu0 0
      %483 = vmatprep.mubr.bf16.mxu0 0
      %484 = vmatmul.mubr.bf16.gmra.mrb[0].mxu0 %v449
      %v485 = vpop.f32.mrb[0].mxu0
      %v486 = vadd.f32 0.0, %v485
      %v487 = vpop.f32.mrb[0].mxu0
      %v488 = vpop.f32.mrb[0].mxu0
      %v489 = vpop.f32.mrb[0].mxu0
      %490 = vdwg.mxu0
      %v491 = vpack.i.b16 %v295, %v295
      %v492 = vlaneseq
      %v493 = vshrl.u32 %v492, 7
      %v494 = vsub.s32 0, %v493
      %v495 = vrot.slane %v491, %v494
      %497 = vmatprep.subr.bf16.mxu0 0
      %498 = vmatpush1.bf16.xpose.msra.mxu0 %v303
      %499 = vmatprep.subr.bf16.mxu0 0
      %500 = vmatpush1.bf16.xpose.msra.mxu0 0
      %501 = vmatprep.subr.bf16.mxu0 0
      %502 = vmatpush1.bf16.xpose.msra.mxu0 0
      %503 = vmatprep.subr.bf16.mxu0 0
      %504 = vmatpush1.bf16.xpose.msra.mxu0 0
      %505 = vmatprep.subr.bf16.mxu0 0
      %506 = vmatpush1.bf16.xpose.msra.mxu0 0
      %507 = vmatprep.subr.bf16.mxu0 0
      %508 = vmatpush1.bf16.xpose.msra.mxu0 0
      %509 = vmatprep.subr.bf16.mxu0 0
      %510 = vmatpush1.bf16.xpose.msra.mxu0 0
      %511 = vmatprep.subr.bf16.mxu0 0
      %512 = vmatpush1.bf16.xpose.msra.mxu0 0
      %513 = vmatprep.subr.bf16.mxu0 0
      %514 = vmatpush1.bf16.xpose.msra.mxu0 0
      %515 = vmatprep.subr.bf16.mxu0 0
      %516 = vmatpush1.bf16.xpose.msra.mxu0 0
      %517 = vmatprep.subr.bf16.mxu0 0
      %518 = vmatpush1.bf16.xpose.msra.mxu0 0
      %519 = vmatprep.subr.bf16.mxu0 0
      %520 = vmatpush1.bf16.xpose.msra.mxu0 0
      %521 = vmatprep.subr.bf16.mxu0 0
      %522 = vmatpush1.bf16.xpose.msra.mxu0 0
      %523 = vmatprep.subr.bf16.mxu0 0
      %524 = vmatpush1.bf16.xpose.msra.mxu0 0
      %525 = vmatprep.subr.bf16.mxu0 0
      %526 = vmatpush1.bf16.xpose.msra.mxu0 0
      %527 = vmatprep.subr.bf16.mxu0 0
      %528 = vmatpush1.bf16.xpose.msra.mxu0 0
      %529 = vmatprep.mubr.bf16.mxu0 0
      %530 = vmatmul.mubr.bf16.gmra.mrb[0].mxu0 %v495
      %v531 = vpop.f32.mrb[0].mxu0
      %v532 = vadd.f32 0.0, %v531
      %v533 = vpop.f32.mrb[0].mxu0
      %v534 = vpop.f32.mrb[0].mxu0
      %v535 = vpop.f32.mrb[0].mxu0
      %536 = vdwg.mxu0
      %v537 = vpack.i.b16 %v296, %v296
      %v538 = vlaneseq
      %v539 = vshrl.u32 %v538, 7
      %v540 = vsub.s32 0, %v539
      %v541 = vrot.slane %v537, %v540
      %543 = vmatprep.subr.bf16.mxu0 0
      %544 = vmatpush1.bf16.xpose.msra.mxu0 %v304
      %545 = vmatprep.subr.bf16.mxu0 0
      %546 = vmatpush1.bf16.xpose.msra.mxu0 0
      %547 = vmatprep.subr.bf16.mxu0 0
      %548 = vmatpush1.bf16.xpose.msra.mxu0 0
      %549 = vmatprep.subr.bf16.mxu0 0
      %550 = vmatpush1.bf16.xpose.msra.mxu0 0
      %551 = vmatprep.subr.bf16.mxu0 0
      %552 = vmatpush1.bf16.xpose.msra.mxu0 0
      %553 = vmatprep.subr.bf16.mxu0 0
      %554 = vmatpush1.bf16.xpose.msra.mxu0 0
      %555 = vmatprep.subr.bf16.mxu0 0
      %556 = vmatpush1.bf16.xpose.msra.mxu0 0
      %557 = vmatprep.subr.bf16.mxu0 0
      %558 = vmatpush1.bf16.xpose.msra.mxu0 0
      %559 = vmatprep.subr.bf16.mxu0 0
      %560 = vmatpush1.bf16.xpose.msra.mxu0 0
      %561 = vmatprep.subr.bf16.mxu0 0
      %562 = vmatpush1.bf16.xpose.msra.mxu0 0
      %563 = vmatprep.subr.bf16.mxu0 0
      %564 = vmatpush1.bf16.xpose.msra.mxu0 0
      %565 = vmatprep.subr.bf16.mxu0 0
      %566 = vmatpush1.bf16.xpose.msra.mxu0 0
      %567 = vmatprep.subr.bf16.mxu0 0
      %568 = vmatpush1.bf16.xpose.msra.mxu0 0
      %569 = vmatprep.subr.bf16.mxu0 0
      %570 = vmatpush1.bf16.xpose.msra.mxu0 0
      %571 = vmatprep.subr.bf16.mxu0 0
      %572 = vmatpush1.bf16.xpose.msra.mxu0 0
      %573 = vmatprep.subr.bf16.mxu0 0
      %574 = vmatpush1.bf16.xpose.msra.mxu0 0
      %575 = vmatprep.mubr.bf16.mxu0 0
      %576 = vmatmul.mubr.bf16.gmra.mrb[0].mxu0 %v541
      %v577 = vpop.f32.mrb[0].mxu0
      %v578 = vadd.f32 0.0, %v577
      %v579 = vpop.f32.mrb[0].mxu0
      %v580 = vpop.f32.mrb[0].mxu0
      %v581 = vpop.f32.mrb[0].mxu0
      %582 = vdwg.mxu0
      %v583 = vpack.i.b16 %v297, %v297
      %v584 = vlaneseq
      %v585 = vshrl.u32 %v584, 7
      %v586 = vsub.s32 0, %v585
      %v587 = vrot.slane %v583, %v586
      %589 = vmatprep.subr.bf16.mxu0 0
      %590 = vmatpush1.bf16.xpose.msra.mxu0 %v305
      %591 = vmatprep.subr.bf16.mxu0 0
      %592 = vmatpush1.bf16.xpose.msra.mxu0 0
      %593 = vmatprep.subr.bf16.mxu0 0
      %594 = vmatpush1.bf16.xpose.msra.mxu0 0
      %595 = vmatprep.subr.bf16.mxu0 0
      %596 = vmatpush1.bf16.xpose.msra.mxu0 0
      %597 = vmatprep.subr.bf16.mxu0 0
      %598 = vmatpush1.bf16.xpose.msra.mxu0 0
      %599 = vmatprep.subr.bf16.mxu0 0
      %600 = vmatpush1.bf16.xpose.msra.mxu0 0
      %601 = vmatprep.subr.bf16.mxu0 0
      %602 = vmatpush1.bf16.xpose.msra.mxu0 0
      %603 = vmatprep.subr.bf16.mxu0 0
      %604 = vmatpush1.bf16.xpose.msra.mxu0 0
      %605 = vmatprep.subr.bf16.mxu0 0
      %606 = vmatpush1.bf16.xpose.msra.mxu0 0
      %607 = vmatprep.subr.bf16.mxu0 0
      %608 = vmatpush1.bf16.xpose.msra.mxu0 0
      %609 = vmatprep.subr.bf16.mxu0 0
      %610 = vmatpush1.bf16.xpose.msra.mxu0 0
      %611 = vmatprep.subr.bf16.mxu0 0
      %612 = vmatpush1.bf16.xpose.msra.mxu0 0
      %613 = vmatprep.subr.bf16.mxu0 0
      %614 = vmatpush1.bf16.xpose.msra.mxu0 0
      %615 = vmatprep.subr.bf16.mxu0 0
      %616 = vmatpush1.bf16.xpose.msra.mxu0 0
      %617 = vmatprep.subr.bf16.mxu0 0
      %618 = vmatpush1.bf16.xpose.msra.mxu0 0
      %619 = vmatprep.subr.bf16.mxu0 0
      %620 = vmatpush1.bf16.xpose.msra.mxu0 0
      %621 = vmatprep.mubr.bf16.mxu0 0
      %622 = vmatmul.mubr.bf16.gmra.mrb[0].mxu0 %v587
      %v623 = vpop.f32.mrb[0].mxu0
      %v624 = vadd.f32 0.0, %v623
      %v625 = vpop.f32.mrb[0].mxu0
      %v626 = vpop.f32.mrb[0].mxu0
      %v627 = vpop.f32.mrb[0].mxu0
      %628 = vdwg.mxu0
      %v629 = vpack.i.b16 %v298, %v298
      %v630 = vlaneseq
      %v631 = vshrl.u32 %v630, 7
      %v632 = vsub.s32 0, %v631
      %v633 = vrot.slane %v629, %v632
      %635 = vmatprep.subr.bf16.mxu0 0
      %636 = vmatpush1.bf16.xpose.msra.mxu0 %v306
      %637 = vmatprep.subr.bf16.mxu0 0
      %638 = vmatpush1.bf16.xpose.msra.mxu0 0
      %639 = vmatprep.subr.bf16.mxu0 0
      %640 = vmatpush1.bf16.xpose.msra.mxu0 0
      %641 = vmatprep.subr.bf16.mxu0 0
      %642 = vmatpush1.bf16.xpose.msra.mxu0 0
      %643 = vmatprep.subr.bf16.mxu0 0
      %644 = vmatpush1.bf16.xpose.msra.mxu0 0
      %645 = vmatprep.subr.bf16.mxu0 0
      %646 = vmatpush1.bf16.xpose.msra.mxu0 0
      %647 = vmatprep.subr.bf16.mxu0 0
      %648 = vmatpush1.bf16.xpose.msra.mxu0 0
      %649 = vmatprep.subr.bf16.mxu0 0
      %650 = vmatpush1.bf16.xpose.msra.mxu0 0
      %651 = vmatprep.subr.bf16.mxu0 0
      %652 = vmatpush1.bf16.xpose.msra.mxu0 0
      %653 = vmatprep.subr.bf16.mxu0 0
      %654 = vmatpush1.bf16.xpose.msra.mxu0 0
      %655 = vmatprep.subr.bf16.mxu0 0
      %656 = vmatpush1.bf16.xpose.msra.mxu0 0
      %657 = vmatprep.subr.bf16.mxu0 0
      %658 = vmatpush1.bf16.xpose.msra.mxu0 0
      %659 = vmatprep.subr.bf16.mxu0 0
      %660 = vmatpush1.bf16.xpose.msra.mxu0 0
      %661 = vmatprep.subr.bf16.mxu0 0
      %662 = vmatpush1.bf16.xpose.msra.mxu0 0
      %663 = vmatprep.subr.bf16.mxu0 0
      %664 = vmatpush1.bf16.xpose.msra.mxu0 0
      %665 = vmatprep.subr.bf16.mxu0 0
      %666 = vmatpush1.bf16.xpose.msra.mxu0 0
      %667 = vmatprep.mubr.bf16.mxu0 0
      %668 = vmatmul.mubr.bf16.gmra.mrb[0].mxu0 %v633
      %v669 = vpop.f32.mrb[0].mxu0
      %v670 = vadd.f32 0.0, %v669
      %v671 = vpop.f32.mrb[0].mxu0
      %v672 = vpop.f32.mrb[0].mxu0
      %v673 = vpop.f32.mrb[0].mxu0
      %674 = vdwg.mxu0
      %v675 = vld [vmem:[%s3] sm:$0xff]
      %v677 = vrot.slane %v675, 1
      %v678 = vrot.slane %v675, 2
      %v679 = vrot.slane %v675, 3
      %v680 = vrot.slane %v675, 4
      %v681 = vrot.slane %v675, 5
      %v682 = vrot.slane %v675, 6
      %v683 = vrot.slane %v675, 7
      %v692 = vadd.f32 %v348, %v675
      %v693 = vadd.f32 %v394, %v677
      %v694 = vadd.f32 %v440, %v678
      %v695 = vadd.f32 %v486, %v679
      %v696 = vadd.f32 %v532, %v680
      %v697 = vadd.f32 %v578, %v681
      %v698 = vadd.f32 %v624, %v682
      %v699 = vadd.f32 %v670, %v683
      %v708 = vrot.slane %v693, 7
      %vm709 = vcmask 1041409
      %v710 = vsel %vm709, %v708, %v692
      %v711 = vrot.slane %v694, 6
      %vm712 = vcmask 1042434
      %v713 = vsel %vm712, %v711, %v710
      %v714 = vrot.slane %v695, 5
      %vm715 = vcmask 1043459
      %v716 = vsel %vm715, %v714, %v713
      %v717 = vrot.slane %v696, 4
      %vm718 = vcmask 1044484
      %v719 = vsel %vm718, %v717, %v716
      %v720 = vrot.slane %v697, 3
      %vm721 = vcmask 1045509
      %v722 = vsel %vm721, %v720, %v719
      %v723 = vrot.slane %v698, 2
      %vm724 = vcmask 1046534
      %v725 = vsel %vm724, %v723, %v722
      %v726 = vrot.slane %v699, 1
      %vm727 = vcmask 1047559
      %v728 = vsel %vm727, %v726, %v725
      %vm730 = vcmask 64512
      %v731 = vsel %vm730, %v728, -inf
      %732 = vmax.xlane.f32.xlu0 %v731
      %v733 = vpop.xlane.xlu0 %732
      %v735 = vrot.slane %v733, 1
      %v736 = vrot.slane %v733, 2
      %v737 = vrot.slane %v733, 3
      %v738 = vrot.slane %v733, 4
      %v739 = vrot.slane %v733, 5
      %v740 = vrot.slane %v733, 6
      %v741 = vrot.slane %v733, 7
      %v750 = vsub.f32 %v692, %v733
      %v751 = vsub.f32 %v693, %v735
      %v752 = vsub.f32 %v694, %v736
      %v753 = vsub.f32 %v695, %v737
      %v754 = vsub.f32 %v696, %v738
      %v755 = vsub.f32 %v697, %v739
      %v756 = vsub.f32 %v698, %v740
      %v757 = vsub.f32 %v699, %v741
      %v758 = vmul.f32 %v750, 1.442695
      %v759 = vpow.pop %v758
      %v760 = vmul.f32 %v751, 1.442695
      %v761 = vpow.pop %v760
      %v762 = vmul.f32 %v752, 1.442695
      %v763 = vpow.pop %v762
      %v764 = vmul.f32 %v753, 1.442695
      %v765 = vpow.pop %v764
      %v766 = vmul.f32 %v754, 1.442695
      %v767 = vpow.pop %v766
      %v768 = vmul.f32 %v755, 1.442695
      %v769 = vpow.pop %v768
      %v770 = vmul.f32 %v756, 1.442695
      %v771 = vpow.pop %v770
      %v772 = vmul.f32 %v757, 1.442695
      %v773 = vpow.pop %v772
      %v782 = vrot.slane %v761, 7
      %v783 = vsel %vm709, %v782, %v759
      %v784 = vrot.slane %v763, 6
      %v785 = vsel %vm712, %v784, %v783
      %v786 = vrot.slane %v765, 5
      %v787 = vsel %vm715, %v786, %v785
      %v788 = vrot.slane %v767, 4
      %v789 = vsel %vm718, %v788, %v787
      %v790 = vrot.slane %v769, 3
      %v791 = vsel %vm721, %v790, %v789
      %v792 = vrot.slane %v771, 2
      %v793 = vsel %vm724, %v792, %v791
      %v794 = vrot.slane %v773, 1
      %v795 = vsel %vm727, %v794, %v793
      %v797 = vsel %vm730, %v795, 0.0
      %798 = vadd.xlane.f32.xlu0 %v797
      %v799 = vpop.xlane.xlu0 %798
      %v800 = vrcp.pop %v799
      %v802 = vrot.slane %v800, 1
      %v803 = vrot.slane %v800, 2
      %v804 = vrot.slane %v800, 3
      %v805 = vrot.slane %v800, 4
      %v806 = vrot.slane %v800, 5
      %v807 = vrot.slane %v800, 6
      %v808 = vrot.slane %v800, 7
      %v817 = vmul.f32 %v759, %v800
      %v818 = vmul.f32 %v761, %v802
      %v819 = vmul.f32 %v763, %v803
      %v820 = vmul.f32 %v765, %v804
      %v821 = vmul.f32 %v767, %v805
      %v822 = vmul.f32 %v769, %v806
      %v823 = vmul.f32 %v771, %v807
      %v824 = vmul.f32 %v773, %v808
      %v825 = vpack.c.bf16 %v817, %v817
      %v826 = vpack.c.bf16 %v818, %v818
      %v827 = vpack.c.bf16 %v819, %v819
      %v828 = vpack.c.bf16 %v820, %v820
      %v829 = vpack.c.bf16 %v821, %v821
      %v830 = vpack.c.bf16 %v822, %v822
      %v831 = vpack.c.bf16 %v823, %v823
      %v832 = vpack.c.bf16 %v824, %v824
      %v834 = vsel %vm730, %v825, 0
      %vm836 = vcmask 1043456
      %v838 = vsel %vm836, %v299, 0
      %840 = vmatprep.subr.bf16.mxu0 0
      %841 = vmatpush1.bf16.msra.mxu0 %v838
      %842 = vmatprep.subr.bf16.mxu0 0
      %843 = vmatpush1.bf16.msra.mxu0 0
      %844 = vmatprep.subr.bf16.mxu0 0
      %845 = vmatpush1.bf16.msra.mxu0 0
      %846 = vmatprep.subr.bf16.mxu0 0
      %847 = vmatpush1.bf16.msra.mxu0 0
      %848 = vmatprep.subr.bf16.mxu0 0
      %849 = vmatpush1.bf16.msra.mxu0 0
      %850 = vmatprep.subr.bf16.mxu0 0
      %851 = vmatpush1.bf16.msra.mxu0 0
      %852 = vmatprep.subr.bf16.mxu0 0
      %853 = vmatpush1.bf16.msra.mxu0 0
      %854 = vmatprep.subr.bf16.mxu0 0
      %855 = vmatpush1.bf16.msra.mxu0 0
      %856 = vmatprep.subr.bf16.mxu0 0
      %857 = vmatpush1.bf16.msra.mxu0 0
      %858 = vmatprep.subr.bf16.mxu0 0
      %859 = vmatpush1.bf16.msra.mxu0 0
      %860 = vmatprep.subr.bf16.mxu0 0
      %861 = vmatpush1.bf16.msra.mxu0 0
      %862 = vmatprep.subr.bf16.mxu0 0
      %863 = vmatpush1.bf16.msra.mxu0 0
      %864 = vmatprep.subr.bf16.mxu0 0
      %865 = vmatpush1.bf16.msra.mxu0 0
      %866 = vmatprep.subr.bf16.mxu0 0
      %867 = vmatpush1.bf16.msra.mxu0 0
      %868 = vmatprep.subr.bf16.mxu0 0
      %869 = vmatpush1.bf16.msra.mxu0 0
      %870 = vmatprep.subr.bf16.mxu0 0
      %871 = vmatpush1.bf16.msra.mxu0 0
      %872 = vmatprep.mubr.bf16.mxu0 0
      %873 = vmatmul.mubr.bf16.gmra.mrb[0].mxu0 %v834
      %v874 = vpop.f32.mrb[0].mxu0
      %v875 = vadd.f32 0.0, %v874
      %v876 = vpop.f32.mrb[0].mxu0
      %v877 = vpop.f32.mrb[0].mxu0
      %v878 = vpop.f32.mrb[0].mxu0
      %879 = vdwg.mxu0
      %v881 = vsel %vm730, %v826, 0
      %v884 = vsel %vm836, %v300, 0
      %886 = vmatprep.subr.bf16.mxu0 0
      %887 = vmatpush1.bf16.msra.mxu0 %v884
      %888 = vmatprep.subr.bf16.mxu0 0
      %889 = vmatpush1.bf16.msra.mxu0 0
      %890 = vmatprep.subr.bf16.mxu0 0
      %891 = vmatpush1.bf16.msra.mxu0 0
      %892 = vmatprep.subr.bf16.mxu0 0
      %893 = vmatpush1.bf16.msra.mxu0 0
      %894 = vmatprep.subr.bf16.mxu0 0
      %895 = vmatpush1.bf16.msra.mxu0 0
      %896 = vmatprep.subr.bf16.mxu0 0
      %897 = vmatpush1.bf16.msra.mxu0 0
      %898 = vmatprep.subr.bf16.mxu0 0
      %899 = vmatpush1.bf16.msra.mxu0 0
      %900 = vmatprep.subr.bf16.mxu0 0
      %901 = vmatpush1.bf16.msra.mxu0 0
      %902 = vmatprep.subr.bf16.mxu0 0
      %903 = vmatpush1.bf16.msra.mxu0 0
      %904 = vmatprep.subr.bf16.mxu0 0
      %905 = vmatpush1.bf16.msra.mxu0 0
      %906 = vmatprep.subr.bf16.mxu0 0
      %907 = vmatpush1.bf16.msra.mxu0 0
      %908 = vmatprep.subr.bf16.mxu0 0
      %909 = vmatpush1.bf16.msra.mxu0 0
      %910 = vmatprep.subr.bf16.mxu0 0
      %911 = vmatpush1.bf16.msra.mxu0 0
      %912 = vmatprep.subr.bf16.mxu0 0
      %913 = vmatpush1.bf16.msra.mxu0 0
      %914 = vmatprep.subr.bf16.mxu0 0
      %915 = vmatpush1.bf16.msra.mxu0 0
      %916 = vmatprep.subr.bf16.mxu0 0
      %917 = vmatpush1.bf16.msra.mxu0 0
      %918 = vmatprep.mubr.bf16.mxu0 0
      %919 = vmatmul.mubr.bf16.gmra.mrb[0].mxu0 %v881
      %v920 = vpop.f32.mrb[0].mxu0
      %v921 = vadd.f32 0.0, %v920
      %v922 = vpop.f32.mrb[0].mxu0
      %v923 = vpop.f32.mrb[0].mxu0
      %v924 = vpop.f32.mrb[0].mxu0
      %925 = vdwg.mxu0
      %v927 = vsel %vm730, %v827, 0
      %v930 = vsel %vm836, %v301, 0
      %932 = vmatprep.subr.bf16.mxu0 0
      %933 = vmatpush1.bf16.msra.mxu0 %v930
      %934 = vmatprep.subr.bf16.mxu0 0
      %935 = vmatpush1.bf16.msra.mxu0 0
      %936 = vmatprep.subr.bf16.mxu0 0
      %937 = vmatpush1.bf16.msra.mxu0 0
      %938 = vmatprep.subr.bf16.mxu0 0
      %939 = vmatpush1.bf16.msra.mxu0 0
      %940 = vmatprep.subr.bf16.mxu0 0
      %941 = vmatpush1.bf16.msra.mxu0 0
      %942 = vmatprep.subr.bf16.mxu0 0
      %943 = vmatpush1.bf16.msra.mxu0 0
      %944 = vmatprep.subr.bf16.mxu0 0
      %945 = vmatpush1.bf16.msra.mxu0 0
      %946 = vmatprep.subr.bf16.mxu0 0
      %947 = vmatpush1.bf16.msra.mxu0 0
      %948 = vmatprep.subr.bf16.mxu0 0
      %949 = vmatpush1.bf16.msra.mxu0 0
      %950 = vmatprep.subr.bf16.mxu0 0
      %951 = vmatpush1.bf16.msra.mxu0 0
      %952 = vmatprep.subr.bf16.mxu0 0
      %953 = vmatpush1.bf16.msra.mxu0 0
      %954 = vmatprep.subr.bf16.mxu0 0
      %955 = vmatpush1.bf16.msra.mxu0 0
      %956 = vmatprep.subr.bf16.mxu0 0
      %957 = vmatpush1.bf16.msra.mxu0 0
      %958 = vmatprep.subr.bf16.mxu0 0
      %959 = vmatpush1.bf16.msra.mxu0 0
      %960 = vmatprep.subr.bf16.mxu0 0
      %961 = vmatpush1.bf16.msra.mxu0 0
      %962 = vmatprep.subr.bf16.mxu0 0
      %963 = vmatpush1.bf16.msra.mxu0 0
      %964 = vmatprep.mubr.bf16.mxu0 0
      %965 = vmatmul.mubr.bf16.gmra.mrb[0].mxu0 %v927
      %v966 = vpop.f32.mrb[0].mxu0
      %v967 = vadd.f32 0.0, %v966
      %v968 = vpop.f32.mrb[0].mxu0
      %v969 = vpop.f32.mrb[0].mxu0
      %v970 = vpop.f32.mrb[0].mxu0
      %971 = vdwg.mxu0
      %v973 = vsel %vm730, %v828, 0
      %v976 = vsel %vm836, %v302, 0
      %978 = vmatprep.subr.bf16.mxu0 0
      %979 = vmatpush1.bf16.msra.mxu0 %v976
      %980 = vmatprep.subr.bf16.mxu0 0
      %981 = vmatpush1.bf16.msra.mxu0 0
      %982 = vmatprep.subr.bf16.mxu0 0
      %983 = vmatpush1.bf16.msra.mxu0 0
      %984 = vmatprep.subr.bf16.mxu0 0
      %985 = vmatpush1.bf16.msra.mxu0 0
      %986 = vmatprep.subr.bf16.mxu0 0
      %987 = vmatpush1.bf16.msra.mxu0 0
      %988 = vmatprep.subr.bf16.mxu0 0
      %989 = vmatpush1.bf16.msra.mxu0 0
      %990 = vmatprep.subr.bf16.mxu0 0
      %991 = vmatpush1.bf16.msra.mxu0 0
      %992 = vmatprep.subr.bf16.mxu0 0
      %993 = vmatpush1.bf16.msra.mxu0 0
      %994 = vmatprep.subr.bf16.mxu0 0
      %995 = vmatpush1.bf16.msra.mxu0 0
      %996 = vmatprep.subr.bf16.mxu0 0
      %997 = vmatpush1.bf16.msra.mxu0 0
      %998 = vmatprep.subr.bf16.mxu0 0
      %999 = vmatpush1.bf16.msra.mxu0 0
      %1000 = vmatprep.subr.bf16.mxu0 0
      %1001 = vmatpush1.bf16.msra.mxu0 0
      %1002 = vmatprep.subr.bf16.mxu0 0
      %1003 = vmatpush1.bf16.msra.mxu0 0
      %1004 = vmatprep.subr.bf16.mxu0 0
      %1005 = vmatpush1.bf16.msra.mxu0 0
      %1006 = vmatprep.subr.bf16.mxu0 0
      %1007 = vmatpush1.bf16.msra.mxu0 0
      %1008 = vmatprep.subr.bf16.mxu0 0
      %1009 = vmatpush1.bf16.msra.mxu0 0
      %1010 = vmatprep.mubr.bf16.mxu0 0
      %1011 = vmatmul.mubr.bf16.gmra.mrb[0].mxu0 %v973
      %v1012 = vpop.f32.mrb[0].mxu0
      %v1013 = vadd.f32 0.0, %v1012
      %v1014 = vpop.f32.mrb[0].mxu0
      %v1015 = vpop.f32.mrb[0].mxu0
      %v1016 = vpop.f32.mrb[0].mxu0
      %1017 = vdwg.mxu0
      %v1019 = vsel %vm730, %v829, 0
      %v1022 = vsel %vm836, %v303, 0
      %1024 = vmatprep.subr.bf16.mxu0 0
      %1025 = vmatpush1.bf16.msra.mxu0 %v1022
      %1026 = vmatprep.subr.bf16.mxu0 0
      %1027 = vmatpush1.bf16.msra.mxu0 0
      %1028 = vmatprep.subr.bf16.mxu0 0
      %1029 = vmatpush1.bf16.msra.mxu0 0
      %1030 = vmatprep.subr.bf16.mxu0 0
      %1031 = vmatpush1.bf16.msra.mxu0 0
      %1032 = vmatprep.subr.bf16.mxu0 0
      %1033 = vmatpush1.bf16.msra.mxu0 0
      %1034 = vmatprep.subr.bf16.mxu0 0
      %1035 = vmatpush1.bf16.msra.mxu0 0
      %1036 = vmatprep.subr.bf16.mxu0 0
      %1037 = vmatpush1.bf16.msra.mxu0 0
      %1038 = vmatprep.subr.bf16.mxu0 0
      %1039 = vmatpush1.bf16.msra.mxu0 0
      %1040 = vmatprep.subr.bf16.mxu0 0
      %1041 = vmatpush1.bf16.msra.mxu0 0
      %1042 = vmatprep.subr.bf16.mxu0 0
      %1043 = vmatpush1.bf16.msra.mxu0 0
      %1044 = vmatprep.subr.bf16.mxu0 0
      %1045 = vmatpush1.bf16.msra.mxu0 0
      %1046 = vmatprep.subr.bf16.mxu0 0
      %1047 = vmatpush1.bf16.msra.mxu0 0
      %1048 = vmatprep.subr.bf16.mxu0 0
      %1049 = vmatpush1.bf16.msra.mxu0 0
      %1050 = vmatprep.subr.bf16.mxu0 0
      %1051 = vmatpush1.bf16.msra.mxu0 0
      %1052 = vmatprep.subr.bf16.mxu0 0
      %1053 = vmatpush1.bf16.msra.mxu0 0
      %1054 = vmatprep.subr.bf16.mxu0 0
      %1055 = vmatpush1.bf16.msra.mxu0 0
      %1056 = vmatprep.mubr.bf16.mxu0 0
      %1057 = vmatmul.mubr.bf16.gmra.mrb[0].mxu0 %v1019
      %v1058 = vpop.f32.mrb[0].mxu0
      %v1059 = vadd.f32 0.0, %v1058
      %v1060 = vpop.f32.mrb[0].mxu0
      %v1061 = vpop.f32.mrb[0].mxu0
      %v1062 = vpop.f32.mrb[0].mxu0
      %1063 = vdwg.mxu0
      %v1065 = vsel %vm730, %v830, 0
      %v1068 = vsel %vm836, %v304, 0
      %1070 = vmatprep.subr.bf16.mxu0 0
      %1071 = vmatpush1.bf16.msra.mxu0 %v1068
      %1072 = vmatprep.subr.bf16.mxu0 0
      %1073 = vmatpush1.bf16.msra.mxu0 0
      %1074 = vmatprep.subr.bf16.mxu0 0
      %1075 = vmatpush1.bf16.msra.mxu0 0
      %1076 = vmatprep.subr.bf16.mxu0 0
      %1077 = vmatpush1.bf16.msra.mxu0 0
      %1078 = vmatprep.subr.bf16.mxu0 0
      %1079 = vmatpush1.bf16.msra.mxu0 0
      %1080 = vmatprep.subr.bf16.mxu0 0
      %1081 = vmatpush1.bf16.msra.mxu0 0
      %1082 = vmatprep.subr.bf16.mxu0 0
      %1083 = vmatpush1.bf16.msra.mxu0 0
      %1084 = vmatprep.subr.bf16.mxu0 0
      %1085 = vmatpush1.bf16.msra.mxu0 0
      %1086 = vmatprep.subr.bf16.mxu0 0
      %1087 = vmatpush1.bf16.msra.mxu0 0
      %1088 = vmatprep.subr.bf16.mxu0 0
      %1089 = vmatpush1.bf16.msra.mxu0 0
      %1090 = vmatprep.subr.bf16.mxu0 0
      %1091 = vmatpush1.bf16.msra.mxu0 0
      %1092 = vmatprep.subr.bf16.mxu0 0
      %1093 = vmatpush1.bf16.msra.mxu0 0
      %1094 = vmatprep.subr.bf16.mxu0 0
      %1095 = vmatpush1.bf16.msra.mxu0 0
      %1096 = vmatprep.subr.bf16.mxu0 0
      %1097 = vmatpush1.bf16.msra.mxu0 0
      %1098 = vmatprep.subr.bf16.mxu0 0
      %1099 = vmatpush1.bf16.msra.mxu0 0
      %1100 = vmatprep.subr.bf16.mxu0 0
      %1101 = vmatpush1.bf16.msra.mxu0 0
      %1102 = vmatprep.mubr.bf16.mxu0 0
      %1103 = vmatmul.mubr.bf16.gmra.mrb[0].mxu0 %v1065
      %v1104 = vpop.f32.mrb[0].mxu0
      %v1105 = vadd.f32 0.0, %v1104
      %v1106 = vpop.f32.mrb[0].mxu0
      %v1107 = vpop.f32.mrb[0].mxu0
      %v1108 = vpop.f32.mrb[0].mxu0
      %1109 = vdwg.mxu0
      %v1111 = vsel %vm730, %v831, 0
      %v1114 = vsel %vm836, %v305, 0
      %1116 = vmatprep.subr.bf16.mxu0 0
      %1117 = vmatpush1.bf16.msra.mxu0 %v1114
      %1118 = vmatprep.subr.bf16.mxu0 0
      %1119 = vmatpush1.bf16.msra.mxu0 0
      %1120 = vmatprep.subr.bf16.mxu0 0
      %1121 = vmatpush1.bf16.msra.mxu0 0
      %1122 = vmatprep.subr.bf16.mxu0 0
      %1123 = vmatpush1.bf16.msra.mxu0 0
      %1124 = vmatprep.subr.bf16.mxu0 0
      %1125 = vmatpush1.bf16.msra.mxu0 0
      %1126 = vmatprep.subr.bf16.mxu0 0
      %1127 = vmatpush1.bf16.msra.mxu0 0
      %1128 = vmatprep.subr.bf16.mxu0 0
      %1129 = vmatpush1.bf16.msra.mxu0 0
      %1130 = vmatprep.subr.bf16.mxu0 0
      %1131 = vmatpush1.bf16.msra.mxu0 0
      %1132 = vmatprep.subr.bf16.mxu0 0
      %1133 = vmatpush1.bf16.msra.mxu0 0
      %1134 = vmatprep.subr.bf16.mxu0 0
      %1135 = vmatpush1.bf16.msra.mxu0 0
      %1136 = vmatprep.subr.bf16.mxu0 0
      %1137 = vmatpush1.bf16.msra.mxu0 0
      %1138 = vmatprep.subr.bf16.mxu0 0
      %1139 = vmatpush1.bf16.msra.mxu0 0
      %1140 = vmatprep.subr.bf16.mxu0 0
      %1141 = vmatpush1.bf16.msra.mxu0 0
      %1142 = vmatprep.subr.bf16.mxu0 0
      %1143 = vmatpush1.bf16.msra.mxu0 0
      %1144 = vmatprep.subr.bf16.mxu0 0
      %1145 = vmatpush1.bf16.msra.mxu0 0
      %1146 = vmatprep.subr.bf16.mxu0 0
      %1147 = vmatpush1.bf16.msra.mxu0 0
      %1148 = vmatprep.mubr.bf16.mxu0 0
      %1149 = vmatmul.mubr.bf16.gmra.mrb[0].mxu0 %v1111
      %v1150 = vpop.f32.mrb[0].mxu0
      %v1151 = vadd.f32 0.0, %v1150
      %v1152 = vpop.f32.mrb[0].mxu0
      %v1153 = vpop.f32.mrb[0].mxu0
      %v1154 = vpop.f32.mrb[0].mxu0
      %1155 = vdwg.mxu0
      %v1157 = vsel %vm730, %v832, 0
      %v1160 = vsel %vm836, %v306, 0
      %1162 = vmatprep.subr.bf16.mxu0 0
      %1163 = vmatpush1.bf16.msra.mxu0 %v1160
      %1164 = vmatprep.subr.bf16.mxu0 0
      %1165 = vmatpush1.bf16.msra.mxu0 0
      %1166 = vmatprep.subr.bf16.mxu0 0
      %1167 = vmatpush1.bf16.msra.mxu0 0
      %1168 = vmatprep.subr.bf16.mxu0 0
      %1169 = vmatpush1.bf16.msra.mxu0 0
      %1170 = vmatprep.subr.bf16.mxu0 0
      %1171 = vmatpush1.bf16.msra.mxu0 0
      %1172 = vmatprep.subr.bf16.mxu0 0
      %1173 = vmatpush1.bf16.msra.mxu0 0
      %1174 = vmatprep.subr.bf16.mxu0 0
      %1175 = vmatpush1.bf16.msra.mxu0 0
      %1176 = vmatprep.subr.bf16.mxu0 0
      %1177 = vmatpush1.bf16.msra.mxu0 0
      %1178 = vmatprep.subr.bf16.mxu0 0
      %1179 = vmatpush1.bf16.msra.mxu0 0
      %1180 = vmatprep.subr.bf16.mxu0 0
      %1181 = vmatpush1.bf16.msra.mxu0 0
      %1182 = vmatprep.subr.bf16.mxu0 0
      %1183 = vmatpush1.bf16.msra.mxu0 0
      %1184 = vmatprep.subr.bf16.mxu0 0
      %1185 = vmatpush1.bf16.msra.mxu0 0
      %1186 = vmatprep.subr.bf16.mxu0 0
      %1187 = vmatpush1.bf16.msra.mxu0 0
      %1188 = vmatprep.subr.bf16.mxu0 0
      %1189 = vmatpush1.bf16.msra.mxu0 0
      %1190 = vmatprep.subr.bf16.mxu0 0
      %1191 = vmatpush1.bf16.msra.mxu0 0
      %1192 = vmatprep.subr.bf16.mxu0 0
      %1193 = vmatpush1.bf16.msra.mxu0 0
      %1194 = vmatprep.mubr.bf16.mxu0 0
      %1195 = vmatmul.mubr.bf16.gmra.mrb[0].mxu0 %v1157
      %v1196 = vpop.f32.mrb[0].mxu0
      %v1197 = vadd.f32 0.0, %v1196
      %v1198 = vpop.f32.mrb[0].mxu0
      %v1199 = vpop.f32.mrb[0].mxu0
      %v1200 = vpop.f32.mrb[0].mxu0
      %1201 = vdwg.mxu0
      %v1202 = vld [vmem:[#allocation12] sm:$0x3]
      %v1203 = vld [vmem:[#allocation12 + $0x2] sm:$0x3]
      %v1204 = vld [vmem:[#allocation12 + $0x4] sm:$0x3]
      %v1205 = vld [vmem:[#allocation12 + $0x6] sm:$0x3]
      %v1206 = vld [vmem:[#allocation12 + $0x8] sm:$0x3]
      %v1207 = vld [vmem:[#allocation12 + $0xa] sm:$0x3]
      %v1208 = vld [vmem:[#allocation12 + $0xc] sm:$0x3]
      %v1209 = vld [vmem:[#allocation12 + $0xe] sm:$0x3]
      %1210 = vmatprep.subr.bf16.mxu0 0
      %1211 = vmatpush1.bf16.xpose.msra.mxu0 %v1202
      %1212 = vmatprep.subr.bf16.mxu0 0
      %1213 = vmatpush1.bf16.xpose.msra.mxu0 0
      %1214 = vmatprep.subr.bf16.mxu0 0
      %1215 = vmatpush1.bf16.xpose.msra.mxu0 0
      %1216 = vmatprep.subr.bf16.mxu0 0
      %1217 = vmatpush1.bf16.xpose.msra.mxu0 0
      %1218 = vmatprep.subr.bf16.mxu0 0
      %1219 = vmatpush1.bf16.xpose.msra.mxu0 0
      %1220 = vmatprep.subr.bf16.mxu0 0
      %1221 = vmatpush1.bf16.xpose.msra.mxu0 0
      %1222 = vmatprep.subr.bf16.mxu0 0
      %1223 = vmatpush1.bf16.xpose.msra.mxu0 0
      %1224 = vmatprep.subr.bf16.mxu0 0
      %1225 = vmatpush1.bf16.xpose.msra.mxu0 0
      %1226 = vmatprep.subr.bf16.mxu0 0
      %1227 = vmatpush1.bf16.xpose.msra.mxu0 0
      %1228 = vmatprep.subr.bf16.mxu0 0
      %1229 = vmatpush1.bf16.xpose.msra.mxu0 0
      %1230 = vmatprep.subr.bf16.mxu0 0
      %1231 = vmatpush1.bf16.xpose.msra.mxu0 0
      %1232 = vmatprep.subr.bf16.mxu0 0
      %1233 = vmatpush1.bf16.xpose.msra.mxu0 0
      %1234 = vmatprep.subr.bf16.mxu0 0
      %1235 = vmatpush1.bf16.xpose.msra.mxu0 0
      %1236 = vmatprep.subr.bf16.mxu0 0
      %1237 = vmatpush1.bf16.xpose.msra.mxu0 0
      %1238 = vmatprep.subr.bf16.mxu0 0
      %1239 = vmatpush1.bf16.xpose.msra.mxu0 0
      %1240 = vmatprep.subr.bf16.mxu0 0
      %1241 = vmatpush1.bf16.xpose.msra.mxu0 0
      %1242 = vmatprep.mubr.bf16.mxu0 0
      %1243 = vmatmul.mubr.bf16.gmra.mrb[0].mxu0 %v311
      %v1244 = vpop.f32.mrb[0].mxu0
      %v1245 = vadd.f32 0.0, %v1244
      %v1246 = vpop.f32.mrb[0].mxu0
      %v1247 = vpop.f32.mrb[0].mxu0
      %v1248 = vpop.f32.mrb[0].mxu0
      %1249 = vdwg.mxu0
      %1250 = vmatprep.subr.bf16.mxu0 0
      %1251 = vmatpush1.bf16.xpose.msra.mxu0 %v1203
      %1252 = vmatprep.subr.bf16.mxu0 0
      %1253 = vmatpush1.bf16.xpose.msra.mxu0 0
      %1254 = vmatprep.subr.bf16.mxu0 0
      %1255 = vmatpush1.bf16.xpose.msra.mxu0 0
      %1256 = vmatprep.subr.bf16.mxu0 0
      %1257 = vmatpush1.bf16.xpose.msra.mxu0 0
      %1258 = vmatprep.subr.bf16.mxu0 0
      %1259 = vmatpush1.bf16.xpose.msra.mxu0 0
      %1260 = vmatprep.subr.bf16.mxu0 0
      %1261 = vmatpush1.bf16.xpose.msra.mxu0 0
      %1262 = vmatprep.subr.bf16.mxu0 0
      %1263 = vmatpush1.bf16.xpose.msra.mxu0 0
      %1264 = vmatprep.subr.bf16.mxu0 0
      %1265 = vmatpush1.bf16.xpose.msra.mxu0 0
      %1266 = vmatprep.subr.bf16.mxu0 0
      %1267 = vmatpush1.bf16.xpose.msra.mxu0 0
      %1268 = vmatprep.subr.bf16.mxu0 0
      %1269 = vmatpush1.bf16.xpose.msra.mxu0 0
      %1270 = vmatprep.subr.bf16.mxu0 0
      %1271 = vmatpush1.bf16.xpose.msra.mxu0 0
      %1272 = vmatprep.subr.bf16.mxu0 0
      %1273 = vmatpush1.bf16.xpose.msra.mxu0 0
      %1274 = vmatprep.subr.bf16.mxu0 0
      %1275 = vmatpush1.bf16.xpose.msra.mxu0 0
      %1276 = vmatprep.subr.bf16.mxu0 0
      %1277 = vmatpush1.bf16.xpose.msra.mxu0 0
      %1278 = vmatprep.subr.bf16.mxu0 0
      %1279 = vmatpush1.bf16.xpose.msra.mxu0 0
      %1280 = vmatprep.subr.bf16.mxu0 0
      %1281 = vmatpush1.bf16.xpose.msra.mxu0 0
      %1282 = vmatprep.mubr.bf16.mxu0 0
      %1283 = vmatmul.mubr.bf16.gmra.mrb[0].mxu0 %v357
      %v1284 = vpop.f32.mrb[0].mxu0
      %v1285 = vadd.f32 0.0, %v1284
      %v1286 = vpop.f32.mrb[0].mxu0
      %v1287 = vpop.f32.mrb[0].mxu0
      %v1288 = vpop.f32.mrb[0].mxu0
      %1289 = vdwg.mxu0
      %1290 = vmatprep.subr.bf16.mxu0 0
      %1291 = vmatpush1.bf16.xpose.msra.mxu0 %v1204
      %1292 = vmatprep.subr.bf16.mxu0 0
      %1293 = vmatpush1.bf16.xpose.msra.mxu0 0
      %1294 = vmatprep.subr.bf16.mxu0 0
      %1295 = vmatpush1.bf16.xpose.msra.mxu0 0
      %1296 = vmatprep.subr.bf16.mxu0 0
      %1297 = vmatpush1.bf16.xpose.msra.mxu0 0
      %1298 = vmatprep.subr.bf16.mxu0 0
      %1299 = vmatpush1.bf16.xpose.msra.mxu0 0
      %1300 = vmatprep.subr.bf16.mxu0 0
      %1301 = vmatpush1.bf16.xpose.msra.mxu0 0
      %1302 = vmatprep.subr.bf16.mxu0 0
      %1303 = vmatpush1.bf16.xpose.msra.mxu0 0
      %1304 = vmatprep.subr.bf16.mxu0 0
      %1305 = vmatpush1.bf16.xpose.msra.mxu0 0
      %1306 = vmatprep.subr.bf16.mxu0 0
      %1307 = vmatpush1.bf16.xpose.msra.mxu0 0
      %1308 = vmatprep.subr.bf16.mxu0 0
      %1309 = vmatpush1.bf16.xpose.msra.mxu0 0
      %1310 = vmatprep.subr.bf16.mxu0 0
      %1311 = vmatpush1.bf16.xpose.msra.mxu0 0
      %1312 = vmatprep.subr.bf16.mxu0 0
      %1313 = vmatpush1.bf16.xpose.msra.mxu0 0
      %1314 = vmatprep.subr.bf16.mxu0 0
      %1315 = vmatpush1.bf16.xpose.msra.mxu0 0
      %1316 = vmatprep.subr.bf16.mxu0 0
      %1317 = vmatpush1.bf16.xpose.msra.mxu0 0
      %1318 = vmatprep.subr.bf16.mxu0 0
      %1319 = vmatpush1.bf16.xpose.msra.mxu0 0
      %1320 = vmatprep.subr.bf16.mxu0 0
      %1321 = vmatpush1.bf16.xpose.msra.mxu0 0
      %1322 = vmatprep.mubr.bf16.mxu0 0
      %1323 = vmatmul.mubr.bf16.gmra.mrb[0].mxu0 %v403
      %v1324 = vpop.f32.mrb[0].mxu0
      %v1325 = vadd.f32 0.0, %v1324
      %v1326 = vpop.f32.mrb[0].mxu0
      %v1327 = vpop.f32.mrb[0].mxu0
      %v1328 = vpop.f32.mrb[0].mxu0
      %1329 = vdwg.mxu0
      %1330 = vmatprep.subr.bf16.mxu0 0
      %1331 = vmatpush1.bf16.xpose.msra.mxu0 %v1205
      %1332 = vmatprep.subr.bf16.mxu0 0
      %1333 = vmatpush1.bf16.xpose.msra.mxu0 0
      %1334 = vmatprep.subr.bf16.mxu0 0
      %1335 = vmatpush1.bf16.xpose.msra.mxu0 0
      %1336 = vmatprep.subr.bf16.mxu0 0
      %1337 = vmatpush1.bf16.xpose.msra.mxu0 0
      %1338 = vmatprep.subr.bf16.mxu0 0
      %1339 = vmatpush1.bf16.xpose.msra.mxu0 0
      %1340 = vmatprep.subr.bf16.mxu0 0
      %1341 = vmatpush1.bf16.xpose.msra.mxu0 0
      %1342 = vmatprep.subr.bf16.mxu0 0
      %1343 = vmatpush1.bf16.xpose.msra.mxu0 0
      %1344 = vmatprep.subr.bf16.mxu0 0
      %1345 = vmatpush1.bf16.xpose.msra.mxu0 0
      %1346 = vmatprep.subr.bf16.mxu0 0
      %1347 = vmatpush1.bf16.xpose.msra.mxu0 0
      %1348 = vmatprep.subr.bf16.mxu0 0
      %1349 = vmatpush1.bf16.xpose.msra.mxu0 0
      %1350 = vmatprep.subr.bf16.mxu0 0
      %1351 = vmatpush1.bf16.xpose.msra.mxu0 0
      %1352 = vmatprep.subr.bf16.mxu0 0
      %1353 = vmatpush1.bf16.xpose.msra.mxu0 0
      %1354 = vmatprep.subr.bf16.mxu0 0
      %1355 = vmatpush1.bf16.xpose.msra.mxu0 0
      %1356 = vmatprep.subr.bf16.mxu0 0
      %1357 = vmatpush1.bf16.xpose.msra.mxu0 0
      %1358 = vmatprep.subr.bf16.mxu0 0
      %1359 = vmatpush1.bf16.xpose.msra.mxu0 0
      %1360 = vmatprep.subr.bf16.mxu0 0
      %1361 = vmatpush1.bf16.xpose.msra.mxu0 0
      %1362 = vmatprep.mubr.bf16.mxu0 0
      %1363 = vmatmul.mubr.bf16.gmra.mrb[0].mxu0 %v449
      %v1364 = vpop.f32.mrb[0].mxu0
      %v1365 = vadd.f32 0.0, %v1364
      %v1366 = vpop.f32.mrb[0].mxu0
      %v1367 = vpop.f32.mrb[0].mxu0
      %v1368 = vpop.f32.mrb[0].mxu0
      %1369 = vdwg.mxu0
      %1370 = vmatprep.subr.bf16.mxu0 0
      %1371 = vmatpush1.bf16.xpose.msra.mxu0 %v1206
      %1372 = vmatprep.subr.bf16.mxu0 0
      %1373 = vmatpush1.bf16.xpose.msra.mxu0 0
      %1374 = vmatprep.subr.bf16.mxu0 0
      %1375 = vmatpush1.bf16.xpose.msra.mxu0 0
      %1376 = vmatprep.subr.bf16.mxu0 0
      %1377 = vmatpush1.bf16.xpose.msra.mxu0 0
      %1378 = vmatprep.subr.bf16.mxu0 0
      %1379 = vmatpush1.bf16.xpose.msra.mxu0 0
      %1380 = vmatprep.subr.bf16.mxu0 0
      %1381 = vmatpush1.bf16.xpose.msra.mxu0 0
      %1382 = vmatprep.subr.bf16.mxu0 0
      %1383 = vmatpush1.bf16.xpose.msra.mxu0 0
      %1384 = vmatprep.subr.bf16.mxu0 0
      %1385 = vmatpush1.bf16.xpose.msra.mxu0 0
      %1386 = vmatprep.subr.bf16.mxu0 0
      %1387 = vmatpush1.bf16.xpose.msra.mxu0 0
      %1388 = vmatprep.subr.bf16.mxu0 0
      %1389 = vmatpush1.bf16.xpose.msra.mxu0 0
      %1390 = vmatprep.subr.bf16.mxu0 0
      %1391 = vmatpush1.bf16.xpose.msra.mxu0 0
      %1392 = vmatprep.subr.bf16.mxu0 0
      %1393 = vmatpush1.bf16.xpose.msra.mxu0 0
      %1394 = vmatprep.subr.bf16.mxu0 0
      %1395 = vmatpush1.bf16.xpose.msra.mxu0 0
      %1396 = vmatprep.subr.bf16.mxu0 0
      %1397 = vmatpush1.bf16.xpose.msra.mxu0 0
      %1398 = vmatprep.subr.bf16.mxu0 0
      %1399 = vmatpush1.bf16.xpose.msra.mxu0 0
      %1400 = vmatprep.subr.bf16.mxu0 0
      %1401 = vmatpush1.bf16.xpose.msra.mxu0 0
      %1402 = vmatprep.mubr.bf16.mxu0 0
      %1403 = vmatmul.mubr.bf16.gmra.mrb[0].mxu0 %v495
      %v1404 = vpop.f32.mrb[0].mxu0
      %v1405 = vadd.f32 0.0, %v1404
      %v1406 = vpop.f32.mrb[0].mxu0
      %v1407 = vpop.f32.mrb[0].mxu0
      %v1408 = vpop.f32.mrb[0].mxu0
      %1409 = vdwg.mxu0
      %1410 = vmatprep.subr.bf16.mxu0 0
      %1411 = vmatpush1.bf16.xpose.msra.mxu0 %v1207
      %1412 = vmatprep.subr.bf16.mxu0 0
      %1413 = vmatpush1.bf16.xpose.msra.mxu0 0
      %1414 = vmatprep.subr.bf16.mxu0 0
      %1415 = vmatpush1.bf16.xpose.msra.mxu0 0
      %1416 = vmatprep.subr.bf16.mxu0 0
      %1417 = vmatpush1.bf16.xpose.msra.mxu0 0
      %1418 = vmatprep.subr.bf16.mxu0 0
      %1419 = vmatpush1.bf16.xpose.msra.mxu0 0
      %1420 = vmatprep.subr.bf16.mxu0 0
      %1421 = vmatpush1.bf16.xpose.msra.mxu0 0
      %1422 = vmatprep.subr.bf16.mxu0 0
      %1423 = vmatpush1.bf16.xpose.msra.mxu0 0
      %1424 = vmatprep.subr.bf16.mxu0 0
      %1425 = vmatpush1.bf16.xpose.msra.mxu0 0
      %1426 = vmatprep.subr.bf16.mxu0 0
      %1427 = vmatpush1.bf16.xpose.msra.mxu0 0
      %1428 = vmatprep.subr.bf16.mxu0 0
      %1429 = vmatpush1.bf16.xpose.msra.mxu0 0
      %1430 = vmatprep.subr.bf16.mxu0 0
      %1431 = vmatpush1.bf16.xpose.msra.mxu0 0
      %1432 = vmatprep.subr.bf16.mxu0 0
      %1433 = vmatpush1.bf16.xpose.msra.mxu0 0
      %1434 = vmatprep.subr.bf16.mxu0 0
      %1435 = vmatpush1.bf16.xpose.msra.mxu0 0
      %1436 = vmatprep.subr.bf16.mxu0 0
      %1437 = vmatpush1.bf16.xpose.msra.mxu0 0
      %1438 = vmatprep.subr.bf16.mxu0 0
      %1439 = vmatpush1.bf16.xpose.msra.mxu0 0
      %1440 = vmatprep.subr.bf16.mxu0 0
      %1441 = vmatpush1.bf16.xpose.msra.mxu0 0
      %1442 = vmatprep.mubr.bf16.mxu0 0
      %1443 = vmatmul.mubr.bf16.gmra.mrb[0].mxu0 %v541
      %v1444 = vpop.f32.mrb[0].mxu0
      %v1445 = vadd.f32 0.0, %v1444
      %v1446 = vpop.f32.mrb[0].mxu0
      %v1447 = vpop.f32.mrb[0].mxu0
      %v1448 = vpop.f32.mrb[0].mxu0
      %1449 = vdwg.mxu0
      %1450 = vmatprep.subr.bf16.mxu0 0
      %1451 = vmatpush1.bf16.xpose.msra.mxu0 %v1208
      %1452 = vmatprep.subr.bf16.mxu0 0
      %1453 = vmatpush1.bf16.xpose.msra.mxu0 0
      %1454 = vmatprep.subr.bf16.mxu0 0
      %1455 = vmatpush1.bf16.xpose.msra.mxu0 0
      %1456 = vmatprep.subr.bf16.mxu0 0
      %1457 = vmatpush1.bf16.xpose.msra.mxu0 0
      %1458 = vmatprep.subr.bf16.mxu0 0
      %1459 = vmatpush1.bf16.xpose.msra.mxu0 0
      %1460 = vmatprep.subr.bf16.mxu0 0
      %1461 = vmatpush1.bf16.xpose.msra.mxu0 0
      %1462 = vmatprep.subr.bf16.mxu0 0
      %1463 = vmatpush1.bf16.xpose.msra.mxu0 0
      %1464 = vmatprep.subr.bf16.mxu0 0
      %1465 = vmatpush1.bf16.xpose.msra.mxu0 0
      %1466 = vmatprep.subr.bf16.mxu0 0
      %1467 = vmatpush1.bf16.xpose.msra.mxu0 0
      %1468 = vmatprep.subr.bf16.mxu0 0
      %1469 = vmatpush1.bf16.xpose.msra.mxu0 0
      %1470 = vmatprep.subr.bf16.mxu0 0
      %1471 = vmatpush1.bf16.xpose.msra.mxu0 0
      %1472 = vmatprep.subr.bf16.mxu0 0
      %1473 = vmatpush1.bf16.xpose.msra.mxu0 0
      %1474 = vmatprep.subr.bf16.mxu0 0
      %1475 = vmatpush1.bf16.xpose.msra.mxu0 0
      %1476 = vmatprep.subr.bf16.mxu0 0
      %1477 = vmatpush1.bf16.xpose.msra.mxu0 0
      %1478 = vmatprep.subr.bf16.mxu0 0
      %1479 = vmatpush1.bf16.xpose.msra.mxu0 0
      %1480 = vmatprep.subr.bf16.mxu0 0
      %1481 = vmatpush1.bf16.xpose.msra.mxu0 0
      %1482 = vmatprep.mubr.bf16.mxu0 0
      %1483 = vmatmul.mubr.bf16.gmra.mrb[0].mxu0 %v587
      %v1484 = vpop.f32.mrb[0].mxu0
      %v1485 = vadd.f32 0.0, %v1484
      %v1486 = vpop.f32.mrb[0].mxu0
      %v1487 = vpop.f32.mrb[0].mxu0
      %v1488 = vpop.f32.mrb[0].mxu0
      %1489 = vdwg.mxu0
      %1490 = vmatprep.subr.bf16.mxu0 0
      %1491 = vmatpush1.bf16.xpose.msra.mxu0 %v1209
      %1492 = vmatprep.subr.bf16.mxu0 0
      %1493 = vmatpush1.bf16.xpose.msra.mxu0 0
      %1494 = vmatprep.subr.bf16.mxu0 0
      %1495 = vmatpush1.bf16.xpose.msra.mxu0 0
      %1496 = vmatprep.subr.bf16.mxu0 0
      %1497 = vmatpush1.bf16.xpose.msra.mxu0 0
      %1498 = vmatprep.subr.bf16.mxu0 0
      %1499 = vmatpush1.bf16.xpose.msra.mxu0 0
      %1500 = vmatprep.subr.bf16.mxu0 0
      %1501 = vmatpush1.bf16.xpose.msra.mxu0 0
      %1502 = vmatprep.subr.bf16.mxu0 0
      %1503 = vmatpush1.bf16.xpose.msra.mxu0 0
      %1504 = vmatprep.subr.bf16.mxu0 0
      %1505 = vmatpush1.bf16.xpose.msra.mxu0 0
      %1506 = vmatprep.subr.bf16.mxu0 0
      %1507 = vmatpush1.bf16.xpose.msra.mxu0 0
      %1508 = vmatprep.subr.bf16.mxu0 0
      %1509 = vmatpush1.bf16.xpose.msra.mxu0 0
      %1510 = vmatprep.subr.bf16.mxu0 0
      %1511 = vmatpush1.bf16.xpose.msra.mxu0 0
      %1512 = vmatprep.subr.bf16.mxu0 0
      %1513 = vmatpush1.bf16.xpose.msra.mxu0 0
      %1514 = vmatprep.subr.bf16.mxu0 0
      %1515 = vmatpush1.bf16.xpose.msra.mxu0 0
      %1516 = vmatprep.subr.bf16.mxu0 0
      %1517 = vmatpush1.bf16.xpose.msra.mxu0 0
      %1518 = vmatprep.subr.bf16.mxu0 0
      %1519 = vmatpush1.bf16.xpose.msra.mxu0 0
      %1520 = vmatprep.subr.bf16.mxu0 0
      %1521 = vmatpush1.bf16.xpose.msra.mxu0 0
      %1522 = vmatprep.mubr.bf16.mxu0 0
      %1523 = vmatmul.mubr.bf16.gmra.mrb[0].mxu0 %v633
      %v1524 = vpop.f32.mrb[0].mxu0
      %v1525 = vadd.f32 0.0, %v1524
      %v1526 = vpop.f32.mrb[0].mxu0
      %v1527 = vpop.f32.mrb[0].mxu0
      %v1528 = vpop.f32.mrb[0].mxu0
      %1529 = vdwg.mxu0
      %v1538 = vrot.slane %v1285, 7
      %v1539 = vsel %vm709, %v1538, %v1245
      %v1540 = vrot.slane %v1325, 6
      %v1541 = vsel %vm712, %v1540, %v1539
      %v1542 = vrot.slane %v1365, 5
      %v1543 = vsel %vm715, %v1542, %v1541
      %v1544 = vrot.slane %v1405, 4
      %v1545 = vsel %vm718, %v1544, %v1543
      %v1546 = vrot.slane %v1445, 3
      %v1547 = vsel %vm721, %v1546, %v1545
      %v1548 = vrot.slane %v1485, 2
      %v1549 = vsel %vm724, %v1548, %v1547
      %v1550 = vrot.slane %v1525, 1
      %v1551 = vsel %vm727, %v1550, %v1549
      %vm1553 = vcmask 31744
      %v1554 = vsel %vm1553, %v1551, -inf
      %1555 = vmax.xlane.f32.xlu0 %v1554
      %v1556 = vpop.xlane.xlu0 %1555
      %v1558 = vrot.slane %v1556, 1
      %v1559 = vrot.slane %v1556, 2
      %v1560 = vrot.slane %v1556, 3
      %v1561 = vrot.slane %v1556, 4
      %v1562 = vrot.slane %v1556, 5
      %v1563 = vrot.slane %v1556, 6
      %v1564 = vrot.slane %v1556, 7
      %v1573 = vsub.f32 %v1245, %v1556
      %v1574 = vsub.f32 %v1285, %v1558
      %v1575 = vsub.f32 %v1325, %v1559
      %v1576 = vsub.f32 %v1365, %v1560
      %v1577 = vsub.f32 %v1405, %v1561
      %v1578 = vsub.f32 %v1445, %v1562
      %v1579 = vsub.f32 %v1485, %v1563
      %v1580 = vsub.f32 %v1525, %v1564
      %v1581 = vmul.f32 %v1573, 1.442695
      %v1582 = vpow.pop %v1581
      %v1583 = vmul.f32 %v1574, 1.442695
      %v1584 = vpow.pop %v1583
      %v1585 = vmul.f32 %v1575, 1.442695
      %v1586 = vpow.pop %v1585
      %v1587 = vmul.f32 %v1576, 1.442695
      %v1588 = vpow.pop %v1587
      %v1589 = vmul.f32 %v1577, 1.442695
      %v1590 = vpow.pop %v1589
      %v1591 = vmul.f32 %v1578, 1.442695
      %v1592 = vpow.pop %v1591
      %v1593 = vmul.f32 %v1579, 1.442695
      %v1594 = vpow.pop %v1593
      %v1595 = vmul.f32 %v1580, 1.442695
      %v1596 = vpow.pop %v1595
      %v1605 = vrot.slane %v1584, 7
      %v1606 = vsel %vm709, %v1605, %v1582
      %v1607 = vrot.slane %v1586, 6
      %v1608 = vsel %vm712, %v1607, %v1606
      %v1609 = vrot.slane %v1588, 5
      %v1610 = vsel %vm715, %v1609, %v1608
      %v1611 = vrot.slane %v1590, 4
      %v1612 = vsel %vm718, %v1611, %v1610
      %v1613 = vrot.slane %v1592, 3
      %v1614 = vsel %vm721, %v1613, %v1612
      %v1615 = vrot.slane %v1594, 2
      %v1616 = vsel %vm724, %v1615, %v1614
      %v1617 = vrot.slane %v1596, 1
      %v1618 = vsel %vm727, %v1617, %v1616
      %v1620 = vsel %vm1553, %v1618, 0.0
      %1621 = vadd.xlane.f32.xlu0 %v1620
      %v1622 = vpop.xlane.xlu0 %1621
      %v1623 = vrcp.pop %v1622
      %v1625 = vrot.slane %v1623, 1
      %v1626 = vrot.slane %v1623, 2
      %v1627 = vrot.slane %v1623, 3
      %v1628 = vrot.slane %v1623, 4
      %v1629 = vrot.slane %v1623, 5
      %v1630 = vrot.slane %v1623, 6
      %v1631 = vrot.slane %v1623, 7
      %v1640 = vmul.f32 %v1582, %v1623
      %v1641 = vmul.f32 %v1584, %v1625
      %v1642 = vmul.f32 %v1586, %v1626
      %v1643 = vmul.f32 %v1588, %v1627
      %v1644 = vmul.f32 %v1590, %v1628
      %v1645 = vmul.f32 %v1592, %v1629
      %v1646 = vmul.f32 %v1594, %v1630
      %v1647 = vmul.f32 %v1596, %v1631
      %v1648 = vpack.c.bf16 %v1640, %v1640
      %v1649 = vpack.c.bf16 %v1641, %v1641
      %v1650 = vpack.c.bf16 %v1642, %v1642
      %v1651 = vpack.c.bf16 %v1643, %v1643
      %v1652 = vpack.c.bf16 %v1644, %v1644
      %v1653 = vpack.c.bf16 %v1645, %v1645
      %v1654 = vpack.c.bf16 %v1646, %v1646
      %v1655 = vpack.c.bf16 %v1647, %v1647
      %v1657 = vsel %vm1553, %v1648, 0
      %vm1659 = vcmask 1041408
      %v1661 = vsel %vm1659, %v1202, 0
      %1663 = vmatprep.subr.bf16.mxu0 0
      %1664 = vmatpush1.bf16.msra.mxu0 %v1661
      %1665 = vmatprep.subr.bf16.mxu0 0
      %1666 = vmatpush1.bf16.msra.mxu0 0
      %1667 = vmatprep.subr.bf16.mxu0 0
      %1668 = vmatpush1.bf16.msra.mxu0 0
      %1669 = vmatprep.subr.bf16.mxu0 0
      %1670 = vmatpush1.bf16.msra.mxu0 0
      %1671 = vmatprep.subr.bf16.mxu0 0
      %1672 = vmatpush1.bf16.msra.mxu0 0
      %1673 = vmatprep.subr.bf16.mxu0 0
      %1674 = vmatpush1.bf16.msra.mxu0 0
      %1675 = vmatprep.subr.bf16.mxu0 0
      %1676 = vmatpush1.bf16.msra.mxu0 0
      %1677 = vmatprep.subr.bf16.mxu0 0
      %1678 = vmatpush1.bf16.msra.mxu0 0
      %1679 = vmatprep.subr.bf16.mxu0 0
      %1680 = vmatpush1.bf16.msra.mxu0 0
      %1681 = vmatprep.subr.bf16.mxu0 0
      %1682 = vmatpush1.bf16.msra.mxu0 0
      %1683 = vmatprep.subr.bf16.mxu0 0
      %1684 = vmatpush1.bf16.msra.mxu0 0
      %1685 = vmatprep.subr.bf16.mxu0 0
      %1686 = vmatpush1.bf16.msra.mxu0 0
      %1687 = vmatprep.subr.bf16.mxu0 0
      %1688 = vmatpush1.bf16.msra.mxu0 0
      %1689 = vmatprep.subr.bf16.mxu0 0
      %1690 = vmatpush1.bf16.msra.mxu0 0
      %1691 = vmatprep.subr.bf16.mxu0 0
      %1692 = vmatpush1.bf16.msra.mxu0 0
      %1693 = vmatprep.subr.bf16.mxu0 0
      %1694 = vmatpush1.bf16.msra.mxu0 0
      %1695 = vmatprep.mubr.bf16.mxu0 0
      %1696 = vmatmul.mubr.bf16.gmra.mrb[0].mxu0 %v1657
      %v1697 = vpop.f32.mrb[0].mxu0
      %v1698 = vadd.f32 0.0, %v1697
      %v1699 = vpop.f32.mrb[0].mxu0
      %v1700 = vpop.f32.mrb[0].mxu0
      %v1701 = vpop.f32.mrb[0].mxu0
      %1702 = vdwg.mxu0
      %v1704 = vsel %vm1553, %v1649, 0
      %v1707 = vsel %vm1659, %v1203, 0
      %1709 = vmatprep.subr.bf16.mxu0 0
      %1710 = vmatpush1.bf16.msra.mxu0 %v1707
      %1711 = vmatprep.subr.bf16.mxu0 0
      %1712 = vmatpush1.bf16.msra.mxu0 0
      %1713 = vmatprep.subr.bf16.mxu0 0
      %1714 = vmatpush1.bf16.msra.mxu0 0
      %1715 = vmatprep.subr.bf16.mxu0 0
      %1716 = vmatpush1.bf16.msra.mxu0 0
      %1717 = vmatprep.subr.bf16.mxu0 0
      %1718 = vmatpush1.bf16.msra.mxu0 0
      %1719 = vmatprep.subr.bf16.mxu0 0
      %1720 = vmatpush1.bf16.msra.mxu0 0
      %1721 = vmatprep.subr.bf16.mxu0 0
      %1722 = vmatpush1.bf16.msra.mxu0 0
      %1723 = vmatprep.subr.bf16.mxu0 0
      %1724 = vmatpush1.bf16.msra.mxu0 0
      %1725 = vmatprep.subr.bf16.mxu0 0
      %1726 = vmatpush1.bf16.msra.mxu0 0
      %1727 = vmatprep.subr.bf16.mxu0 0
      %1728 = vmatpush1.bf16.msra.mxu0 0
      %1729 = vmatprep.subr.bf16.mxu0 0
      %1730 = vmatpush1.bf16.msra.mxu0 0
      %1731 = vmatprep.subr.bf16.mxu0 0
      %1732 = vmatpush1.bf16.msra.mxu0 0
      %1733 = vmatprep.subr.bf16.mxu0 0
      %1734 = vmatpush1.bf16.msra.mxu0 0
      %1735 = vmatprep.subr.bf16.mxu0 0
      %1736 = vmatpush1.bf16.msra.mxu0 0
      %1737 = vmatprep.subr.bf16.mxu0 0
      %1738 = vmatpush1.bf16.msra.mxu0 0
      %1739 = vmatprep.subr.bf16.mxu0 0
      %1740 = vmatpush1.bf16.msra.mxu0 0
      %1741 = vmatprep.mubr.bf16.mxu0 0
      %1742 = vmatmul.mubr.bf16.gmra.mrb[0].mxu0 %v1704
      %v1743 = vpop.f32.mrb[0].mxu0
      %v1744 = vadd.f32 0.0, %v1743
      %v1745 = vpop.f32.mrb[0].mxu0
      %v1746 = vpop.f32.mrb[0].mxu0
      %v1747 = vpop.f32.mrb[0].mxu0
      %1748 = vdwg.mxu0
      %v1750 = vsel %vm1553, %v1650, 0
      %v1753 = vsel %vm1659, %v1204, 0
      %1755 = vmatprep.subr.bf16.mxu0 0
      %1756 = vmatpush1.bf16.msra.mxu0 %v1753
      %1757 = vmatprep.subr.bf16.mxu0 0
      %1758 = vmatpush1.bf16.msra.mxu0 0
      %1759 = vmatprep.subr.bf16.mxu0 0
      %1760 = vmatpush1.bf16.msra.mxu0 0
      %1761 = vmatprep.subr.bf16.mxu0 0
      %1762 = vmatpush1.bf16.msra.mxu0 0
      %1763 = vmatprep.subr.bf16.mxu0 0
      %1764 = vmatpush1.bf16.msra.mxu0 0
      %1765 = vmatprep.subr.bf16.mxu0 0
      %1766 = vmatpush1.bf16.msra.mxu0 0
      %1767 = vmatprep.subr.bf16.mxu0 0
      %1768 = vmatpush1.bf16.msra.mxu0 0
      %1769 = vmatprep.subr.bf16.mxu0 0
      %1770 = vmatpush1.bf16.msra.mxu0 0
      %1771 = vmatprep.subr.bf16.mxu0 0
      %1772 = vmatpush1.bf16.msra.mxu0 0
      %1773 = vmatprep.subr.bf16.mxu0 0
      %1774 = vmatpush1.bf16.msra.mxu0 0
      %1775 = vmatprep.subr.bf16.mxu0 0
      %1776 = vmatpush1.bf16.msra.mxu0 0
      %1777 = vmatprep.subr.bf16.mxu0 0
      %1778 = vmatpush1.bf16.msra.mxu0 0
      %1779 = vmatprep.subr.bf16.mxu0 0
      %1780 = vmatpush1.bf16.msra.mxu0 0
      %1781 = vmatprep.subr.bf16.mxu0 0
      %1782 = vmatpush1.bf16.msra.mxu0 0
      %1783 = vmatprep.subr.bf16.mxu0 0
      %1784 = vmatpush1.bf16.msra.mxu0 0
      %1785 = vmatprep.subr.bf16.mxu0 0
      %1786 = vmatpush1.bf16.msra.mxu0 0
      %1787 = vmatprep.mubr.bf16.mxu0 0
      %1788 = vmatmul.mubr.bf16.gmra.mrb[0].mxu0 %v1750
      %v1789 = vpop.f32.mrb[0].mxu0
      %v1790 = vadd.f32 0.0, %v1789
      %v1791 = vpop.f32.mrb[0].mxu0
      %v1792 = vpop.f32.mrb[0].mxu0
      %v1793 = vpop.f32.mrb[0].mxu0
      %1794 = vdwg.mxu0
      %v1796 = vsel %vm1553, %v1651, 0
      %v1799 = vsel %vm1659, %v1205, 0
      %1801 = vmatprep.subr.bf16.mxu0 0
      %1802 = vmatpush1.bf16.msra.mxu0 %v1799
      %1803 = vmatprep.subr.bf16.mxu0 0
      %1804 = vmatpush1.bf16.msra.mxu0 0
      %1805 = vmatprep.subr.bf16.mxu0 0
      %1806 = vmatpush1.bf16.msra.mxu0 0
      %1807 = vmatprep.subr.bf16.mxu0 0
      %1808 = vmatpush1.bf16.msra.mxu0 0
      %1809 = vmatprep.subr.bf16.mxu0 0
      %1810 = vmatpush1.bf16.msra.mxu0 0
      %1811 = vmatprep.subr.bf16.mxu0 0
      %1812 = vmatpush1.bf16.msra.mxu0 0
      %1813 = vmatprep.subr.bf16.mxu0 0
      %1814 = vmatpush1.bf16.msra.mxu0 0
      %1815 = vmatprep.subr.bf16.mxu0 0
      %1816 = vmatpush1.bf16.msra.mxu0 0
      %1817 = vmatprep.subr.bf16.mxu0 0
      %1818 = vmatpush1.bf16.msra.mxu0 0
      %1819 = vmatprep.subr.bf16.mxu0 0
      %1820 = vmatpush1.bf16.msra.mxu0 0
      %1821 = vmatprep.subr.bf16.mxu0 0
      %1822 = vmatpush1.bf16.msra.mxu0 0
      %1823 = vmatprep.subr.bf16.mxu0 0
      %1824 = vmatpush1.bf16.msra.mxu0 0
      %1825 = vmatprep.subr.bf16.mxu0 0
      %1826 = vmatpush1.bf16.msra.mxu0 0
      %1827 = vmatprep.subr.bf16.mxu0 0
      %1828 = vmatpush1.bf16.msra.mxu0 0
      %1829 = vmatprep.subr.bf16.mxu0 0
      %1830 = vmatpush1.bf16.msra.mxu0 0
      %1831 = vmatprep.subr.bf16.mxu0 0
      %1832 = vmatpush1.bf16.msra.mxu0 0
      %1833 = vmatprep.mubr.bf16.mxu0 0
      %1834 = vmatmul.mubr.bf16.gmra.mrb[0].mxu0 %v1796
      %v1835 = vpop.f32.mrb[0].mxu0
      %v1836 = vadd.f32 0.0, %v1835
      %v1837 = vpop.f32.mrb[0].mxu0
      %v1838 = vpop.f32.mrb[0].mxu0
      %v1839 = vpop.f32.mrb[0].mxu0
      %1840 = vdwg.mxu0
      %v1842 = vsel %vm1553, %v1652, 0
      %v1845 = vsel %vm1659, %v1206, 0
      %1847 = vmatprep.subr.bf16.mxu0 0
      %1848 = vmatpush1.bf16.msra.mxu0 %v1845
      %1849 = vmatprep.subr.bf16.mxu0 0
      %1850 = vmatpush1.bf16.msra.mxu0 0
      %1851 = vmatprep.subr.bf16.mxu0 0
      %1852 = vmatpush1.bf16.msra.mxu0 0
      %1853 = vmatprep.subr.bf16.mxu0 0
      %1854 = vmatpush1.bf16.msra.mxu0 0
      %1855 = vmatprep.subr.bf16.mxu0 0
      %1856 = vmatpush1.bf16.msra.mxu0 0
      %1857 = vmatprep.subr.bf16.mxu0 0
      %1858 = vmatpush1.bf16.msra.mxu0 0
      %1859 = vmatprep.subr.bf16.mxu0 0
      %1860 = vmatpush1.bf16.msra.mxu0 0
      %1861 = vmatprep.subr.bf16.mxu0 0
      %1862 = vmatpush1.bf16.msra.mxu0 0
      %1863 = vmatprep.subr.bf16.mxu0 0
      %1864 = vmatpush1.bf16.msra.mxu0 0
      %1865 = vmatprep.subr.bf16.mxu0 0
      %1866 = vmatpush1.bf16.msra.mxu0 0
      %1867 = vmatprep.subr.bf16.mxu0 0
      %1868 = vmatpush1.bf16.msra.mxu0 0
      %1869 = vmatprep.subr.bf16.mxu0 0
      %1870 = vmatpush1.bf16.msra.mxu0 0
      %1871 = vmatprep.subr.bf16.mxu0 0
      %1872 = vmatpush1.bf16.msra.mxu0 0
      %1873 = vmatprep.subr.bf16.mxu0 0
      %1874 = vmatpush1.bf16.msra.mxu0 0
      %1875 = vmatprep.subr.bf16.mxu0 0
      %1876 = vmatpush1.bf16.msra.mxu0 0
      %1877 = vmatprep.subr.bf16.mxu0 0
      %1878 = vmatpush1.bf16.msra.mxu0 0
      %1879 = vmatprep.mubr.bf16.mxu0 0
      %1880 = vmatmul.mubr.bf16.gmra.mrb[0].mxu0 %v1842
      %v1881 = vpop.f32.mrb[0].mxu0
      %v1882 = vadd.f32 0.0, %v1881
      %v1883 = vpop.f32.mrb[0].mxu0
      %v1884 = vpop.f32.mrb[0].mxu0
      %v1885 = vpop.f32.mrb[0].mxu0
      %1886 = vdwg.mxu0
      %v1888 = vsel %vm1553, %v1653, 0
      %v1891 = vsel %vm1659, %v1207, 0
      %1893 = vmatprep.subr.bf16.mxu0 0
      %1894 = vmatpush1.bf16.msra.mxu0 %v1891
      %1895 = vmatprep.subr.bf16.mxu0 0
      %1896 = vmatpush1.bf16.msra.mxu0 0
      %1897 = vmatprep.subr.bf16.mxu0 0
      %1898 = vmatpush1.bf16.msra.mxu0 0
      %1899 = vmatprep.subr.bf16.mxu0 0
      %1900 = vmatpush1.bf16.msra.mxu0 0
      %1901 = vmatprep.subr.bf16.mxu0 0
      %1902 = vmatpush1.bf16.msra.mxu0 0
      %1903 = vmatprep.subr.bf16.mxu0 0
      %1904 = vmatpush1.bf16.msra.mxu0 0
      %1905 = vmatprep.subr.bf16.mxu0 0
      %1906 = vmatpush1.bf16.msra.mxu0 0
      %1907 = vmatprep.subr.bf16.mxu0 0
      %1908 = vmatpush1.bf16.msra.mxu0 0
      %1909 = vmatprep.subr.bf16.mxu0 0
      %1910 = vmatpush1.bf16.msra.mxu0 0
      %1911 = vmatprep.subr.bf16.mxu0 0
      %1912 = vmatpush1.bf16.msra.mxu0 0
      %1913 = vmatprep.subr.bf16.mxu0 0
      %1914 = vmatpush1.bf16.msra.mxu0 0
      %1915 = vmatprep.subr.bf16.mxu0 0
      %1916 = vmatpush1.bf16.msra.mxu0 0
      %1917 = vmatprep.subr.bf16.mxu0 0
      %1918 = vmatpush1.bf16.msra.mxu0 0
      %1919 = vmatprep.subr.bf16.mxu0 0
      %1920 = vmatpush1.bf16.msra.mxu0 0
      %1921 = vmatprep.subr.bf16.mxu0 0
      %1922 = vmatpush1.bf16.msra.mxu0 0
      %1923 = vmatprep.subr.bf16.mxu0 0
      %1924 = vmatpush1.bf16.msra.mxu0 0
      %1925 = vmatprep.mubr.bf16.mxu0 0
      %1926 = vmatmul.mubr.bf16.gmra.mrb[0].mxu0 %v1888
      %v1927 = vpop.f32.mrb[0].mxu0
      %v1928 = vadd.f32 0.0, %v1927
      %v1929 = vpop.f32.mrb[0].mxu0
      %v1930 = vpop.f32.mrb[0].mxu0
      %v1931 = vpop.f32.mrb[0].mxu0
      %1932 = vdwg.mxu0
      %v1934 = vsel %vm1553, %v1654, 0
      %v1937 = vsel %vm1659, %v1208, 0
      %1939 = vmatprep.subr.bf16.mxu0 0
      %1940 = vmatpush1.bf16.msra.mxu0 %v1937
      %1941 = vmatprep.subr.bf16.mxu0 0
      %1942 = vmatpush1.bf16.msra.mxu0 0
      %1943 = vmatprep.subr.bf16.mxu0 0
      %1944 = vmatpush1.bf16.msra.mxu0 0
      %1945 = vmatprep.subr.bf16.mxu0 0
      %1946 = vmatpush1.bf16.msra.mxu0 0
      %1947 = vmatprep.subr.bf16.mxu0 0
      %1948 = vmatpush1.bf16.msra.mxu0 0
      %1949 = vmatprep.subr.bf16.mxu0 0
      %1950 = vmatpush1.bf16.msra.mxu0 0
      %1951 = vmatprep.subr.bf16.mxu0 0
      %1952 = vmatpush1.bf16.msra.mxu0 0
      %1953 = vmatprep.subr.bf16.mxu0 0
      %1954 = vmatpush1.bf16.msra.mxu0 0
      %1955 = vmatprep.subr.bf16.mxu0 0
      %1956 = vmatpush1.bf16.msra.mxu0 0
      %1957 = vmatprep.subr.bf16.mxu0 0
      %1958 = vmatpush1.bf16.msra.mxu0 0
      %1959 = vmatprep.subr.bf16.mxu0 0
      %1960 = vmatpush1.bf16.msra.mxu0 0
      %1961 = vmatprep.subr.bf16.mxu0 0
      %1962 = vmatpush1.bf16.msra.mxu0 0
      %1963 = vmatprep.subr.bf16.mxu0 0
      %1964 = vmatpush1.bf16.msra.mxu0 0
      %1965 = vmatprep.subr.bf16.mxu0 0
      %1966 = vmatpush1.bf16.msra.mxu0 0
      %1967 = vmatprep.subr.bf16.mxu0 0
      %1968 = vmatpush1.bf16.msra.mxu0 0
      %1969 = vmatprep.subr.bf16.mxu0 0
      %1970 = vmatpush1.bf16.msra.mxu0 0
      %1971 = vmatprep.mubr.bf16.mxu0 0
      %1972 = vmatmul.mubr.bf16.gmra.mrb[0].mxu0 %v1934
      %v1973 = vpop.f32.mrb[0].mxu0
      %v1974 = vadd.f32 0.0, %v1973
      %v1975 = vpop.f32.mrb[0].mxu0
      %v1976 = vpop.f32.mrb[0].mxu0
      %v1977 = vpop.f32.mrb[0].mxu0
      %1978 = vdwg.mxu0
      %v1980 = vsel %vm1553, %v1655, 0
      %v1983 = vsel %vm1659, %v1209, 0
      %1985 = vmatprep.subr.bf16.mxu0 0
      %1986 = vmatpush1.bf16.msra.mxu0 %v1983
      %1987 = vmatprep.subr.bf16.mxu0 0
      %1988 = vmatpush1.bf16.msra.mxu0 0
      %1989 = vmatprep.subr.bf16.mxu0 0
      %1990 = vmatpush1.bf16.msra.mxu0 0
      %1991 = vmatprep.subr.bf16.mxu0 0
      %1992 = vmatpush1.bf16.msra.mxu0 0
      %1993 = vmatprep.subr.bf16.mxu0 0
      %1994 = vmatpush1.bf16.msra.mxu0 0
      %1995 = vmatprep.subr.bf16.mxu0 0
      %1996 = vmatpush1.bf16.msra.mxu0 0
      %1997 = vmatprep.subr.bf16.mxu0 0
      %1998 = vmatpush1.bf16.msra.mxu0 0
      %1999 = vmatprep.subr.bf16.mxu0 0
      %2000 = vmatpush1.bf16.msra.mxu0 0
      %2001 = vmatprep.subr.bf16.mxu0 0
      %2002 = vmatpush1.bf16.msra.mxu0 0
      %2003 = vmatprep.subr.bf16.mxu0 0
      %2004 = vmatpush1.bf16.msra.mxu0 0
      %2005 = vmatprep.subr.bf16.mxu0 0
      %2006 = vmatpush1.bf16.msra.mxu0 0
      %2007 = vmatprep.subr.bf16.mxu0 0
      %2008 = vmatpush1.bf16.msra.mxu0 0
      %2009 = vmatprep.subr.bf16.mxu0 0
      %2010 = vmatpush1.bf16.msra.mxu0 0
      %2011 = vmatprep.subr.bf16.mxu0 0
      %2012 = vmatpush1.bf16.msra.mxu0 0
      %2013 = vmatprep.subr.bf16.mxu0 0
      %2014 = vmatpush1.bf16.msra.mxu0 0
      %2015 = vmatprep.subr.bf16.mxu0 0
      %2016 = vmatpush1.bf16.msra.mxu0 0
      %2017 = vmatprep.mubr.bf16.mxu0 0
      %2018 = vmatmul.mubr.bf16.gmra.mrb[0].mxu0 %v1980
      %v2019 = vpop.f32.mrb[0].mxu0
      %v2020 = vadd.f32 0.0, %v2019
      %v2021 = vpop.f32.mrb[0].mxu0
      %v2022 = vpop.f32.mrb[0].mxu0
      %v2023 = vpop.f32.mrb[0].mxu0
      %2024 = vdwg.mxu0
      %v2025 = vpack.c.bf16 %v260, %v260
      %2026 = vst [vmem:[#allocation6] sm:$0xf] %v2025
      %v2027 = vpack.c.bf16 %v875, %v875
      %v2028 = vpack.c.bf16 %v921, %v921
      %v2029 = vpack.c.bf16 %v967, %v967
      %v2030 = vpack.c.bf16 %v1013, %v1013
      %v2031 = vpack.c.bf16 %v1059, %v1059
      %v2032 = vpack.c.bf16 %v1105, %v1105
      %v2033 = vpack.c.bf16 %v1151, %v1151
      %v2034 = vpack.c.bf16 %v1197, %v1197
      %v2043 = vunpack.c.l.b16 %v2027
      %v2044 = vunpack.c.l.b16 %v2028
      %v2045 = vunpack.c.l.b16 %v2029
      %v2046 = vunpack.c.l.b16 %v2030
      %v2047 = vunpack.c.l.b16 %v2031
      %v2048 = vunpack.c.l.b16 %v2032
      %v2049 = vunpack.c.l.b16 %v2033
      %v2050 = vunpack.c.l.b16 %v2034
      %v2051 = vpack.c.b16 %v2043, %v2043
      %v2052 = vpack.c.b16 %v2044, %v2044
      %v2053 = vpack.c.b16 %v2045, %v2045
      %v2054 = vpack.c.b16 %v2046, %v2046
      %v2055 = vpack.c.b16 %v2047, %v2047
      %v2056 = vpack.c.b16 %v2048, %v2048
      %v2057 = vpack.c.b16 %v2049, %v2049
      %v2058 = vpack.c.b16 %v2050, %v2050
      %v2059 = vunpack.c.l.b16 %v2051
      %v2060 = vunpack.c.l.b16 %v2052
      %v2061 = vunpack.c.l.b16 %v2053
      %v2062 = vunpack.c.l.b16 %v2054
      %v2063 = vunpack.c.l.b16 %v2055
      %v2064 = vunpack.c.l.b16 %v2056
      %v2065 = vunpack.c.l.b16 %v2057
      %v2066 = vunpack.c.l.b16 %v2058
      %v2067 = vrot.slane %v2060, 7
      %v2068 = vsel %vm709, %v2067, %v2059
      %v2069 = vrot.slane %v2061, 6
      %v2070 = vsel %vm712, %v2069, %v2068
      %v2071 = vrot.slane %v2062, 5
      %v2072 = vsel %vm715, %v2071, %v2070
      %v2073 = vrot.slane %v2063, 4
      %v2074 = vsel %vm718, %v2073, %v2072
      %v2075 = vrot.slane %v2064, 3
      %v2076 = vsel %vm721, %v2075, %v2074
      %v2077 = vrot.slane %v2065, 2
      %v2078 = vsel %vm724, %v2077, %v2076
      %v2079 = vrot.slane %v2066, 1
      %v2080 = vsel %vm727, %v2079, %v2078
      %v2081 = vpack.c.b16 %v2080, %v2080
      %2083 = vst [vmem:[#allocation6 + $0x4] sm:$0xf] %v2081
      %v2084 = vpack.c.bf16 %v1698, %v1698
      %v2085 = vpack.c.bf16 %v1744, %v1744
      %v2086 = vpack.c.bf16 %v1790, %v1790
      %v2087 = vpack.c.bf16 %v1836, %v1836
      %v2088 = vpack.c.bf16 %v1882, %v1882
      %v2089 = vpack.c.bf16 %v1928, %v1928
      %v2090 = vpack.c.bf16 %v1974, %v1974
      %v2091 = vpack.c.bf16 %v2020, %v2020
      %v2100 = vunpack.c.l.b16 %v2084
      %v2101 = vunpack.c.l.b16 %v2085
      %v2102 = vunpack.c.l.b16 %v2086
      %v2103 = vunpack.c.l.b16 %v2087
      %v2104 = vunpack.c.l.b16 %v2088
      %v2105 = vunpack.c.l.b16 %v2089
      %v2106 = vunpack.c.l.b16 %v2090
      %v2107 = vunpack.c.l.b16 %v2091
      %v2108 = vpack.c.b16 %v2100, %v2100
      %v2109 = vpack.c.b16 %v2101, %v2101
      %v2110 = vpack.c.b16 %v2102, %v2102
      %v2111 = vpack.c.b16 %v2103, %v2103
      %v2112 = vpack.c.b16 %v2104, %v2104
      %v2113 = vpack.c.b16 %v2105, %v2105
      %v2114 = vpack.c.b16 %v2106, %v2106
      %v2115 = vpack.c.b16 %v2107, %v2107
      %v2116 = vunpack.c.l.b16 %v2108
      %v2117 = vunpack.c.l.b16 %v2109
      %v2118 = vunpack.c.l.b16 %v2110
      %v2119 = vunpack.c.l.b16 %v2111
      %v2120 = vunpack.c.l.b16 %v2112
      %v2121 = vunpack.c.l.b16 %v2113
      %v2122 = vunpack.c.l.b16 %v2114
      %v2123 = vunpack.c.l.b16 %v2115
      %v2124 = vrot.slane %v2117, 7
      %v2125 = vsel %vm709, %v2124, %v2116
      %v2126 = vrot.slane %v2118, 6
      %v2127 = vsel %vm712, %v2126, %v2125
      %v2128 = vrot.slane %v2119, 5
      %v2129 = vsel %vm715, %v2128, %v2127
      %v2130 = vrot.slane %v2120, 4
      %v2131 = vsel %vm718, %v2130, %v2129
      %v2132 = vrot.slane %v2121, 3
      %v2133 = vsel %vm721, %v2132, %v2131
      %v2134 = vrot.slane %v2122, 2
      %v2135 = vsel %vm724, %v2134, %v2133
      %v2136 = vrot.slane %v2123, 1
      %v2137 = vsel %vm727, %v2136, %v2135
      %v2138 = vpack.c.b16 %v2137, %v2137
      %2140 = vst [vmem:[#allocation6 + $0x8] sm:$0xf] %v2138
      %2141 = vst [vmem:[#allocation6 + $0xc] sm:$0xf] %v265
      %v2142 = vld [vmem:[#allocation6] sm:$0xff]
      %v2143 = vld [vmem:[#allocation6 + $0x8] sm:$0xff]
      %v2144 = vld [vmem:[#allocation13] sm:$0xff]
      %v2145 = vld [vmem:[#allocation13 + $0x8] sm:$0xff]
      %v2146 = vld [vmem:[#allocation13 + $0x10] sm:$0xff]
      %v2147 = vld [vmem:[#allocation13 + $0x18] sm:$0xff]
      %v2148 = vld [vmem:[#allocation13 + $0x20] sm:$0xff]
      %v2149 = vld [vmem:[#allocation13 + $0x28] sm:$0xff]
      %v2150 = vld [vmem:[#allocation13 + $0x30] sm:$0xff]
      %v2151 = vld [vmem:[#allocation13 + $0x38] sm:$0xff]
      %v2152 = vld [vmem:[#allocation13 + $0x40] sm:$0xff]
      %v2153 = vld [vmem:[#allocation13 + $0x48] sm:$0xff]
      %v2154 = vld [vmem:[#allocation13 + $0x50] sm:$0xff]
      %v2155 = vld [vmem:[#allocation13 + $0x58] sm:$0xff]
      %v2156 = vld [vmem:[#allocation13 + $0x60] sm:$0xff]
      %v2157 = vld [vmem:[#allocation13 + $0x68] sm:$0xff]
      %v2158 = vld [vmem:[#allocation13 + $0x70] sm:$0xff]
      %v2159 = vld [vmem:[#allocation13 + $0x78] sm:$0xff]
      %v2160 = vld [vmem:[#allocation13 + $0x80] sm:$0xff]
      %v2161 = vld [vmem:[#allocation13 + $0x88] sm:$0xff]
      %v2162 = vld [vmem:[#allocation13 + $0x90] sm:$0xff]
      %v2163 = vld [vmem:[#allocation13 + $0x98] sm:$0xff]
      %v2164 = vld [vmem:[#allocation13 + $0xa0] sm:$0xff]
      %v2165 = vld [vmem:[#allocation13 + $0xa8] sm:$0xff]
      %v2166 = vld [vmem:[#allocation13 + $0xb0] sm:$0xff]
      %v2167 = vld [vmem:[#allocation13 + $0xb8] sm:$0xff]
      %v2168 = vld [vmem:[#allocation13 + $0xc0] sm:$0xff]
      %v2169 = vld [vmem:[#allocation13 + $0xc8] sm:$0xff]
      %v2170 = vld [vmem:[#allocation13 + $0xd0] sm:$0xff]
      %v2171 = vld [vmem:[#allocation13 + $0xd8] sm:$0xff]
      %v2172 = vld [vmem:[#allocation13 + $0xe0] sm:$0xff]
      %v2173 = vld [vmem:[#allocation13 + $0xe8] sm:$0xff]
      %v2174 = vld [vmem:[#allocation13 + $0xf0] sm:$0xff]
      %v2175 = vld [vmem:[#allocation13 + $0xf8] sm:$0xff]
      %v2176 = vld [vmem:[#allocation13 + $0x100] sm:$0xff]
      %v2177 = vld [vmem:[#allocation13 + $0x108] sm:$0xff]
      %v2178 = vld [vmem:[#allocation13 + $0x110] sm:$0xff]
      %v2179 = vld [vmem:[#allocation13 + $0x118] sm:$0xff]
      %v2180 = vld [vmem:[#allocation13 + $0x120] sm:$0xff]
      %v2181 = vld [vmem:[#allocation13 + $0x128] sm:$0xff]
      %v2182 = vld [vmem:[#allocation13 + $0x130] sm:$0xff]
      %v2183 = vld [vmem:[#allocation13 + $0x138] sm:$0xff]
      %v2184 = vld [vmem:[#allocation13 + $0x140] sm:$0xff]
      %v2185 = vld [vmem:[#allocation13 + $0x148] sm:$0xff]
      %v2186 = vld [vmem:[#allocation13 + $0x150] sm:$0xff]
      %v2187 = vld [vmem:[#allocation13 + $0x158] sm:$0xff]
      %v2188 = vld [vmem:[#allocation13 + $0x160] sm:$0xff]
      %v2189 = vld [vmem:[#allocation13 + $0x168] sm:$0xff]
      %v2190 = vld [vmem:[#allocation13 + $0x170] sm:$0xff]
      %v2191 = vld [vmem:[#allocation13 + $0x178] sm:$0xff]
      %v2192 = vld [vmem:[#allocation13 + $0x180] sm:$0xff]
      %v2193 = vld [vmem:[#allocation13 + $0x188] sm:$0xff]
      %v2194 = vld [vmem:[#allocation13 + $0x190] sm:$0xff]
      %v2195 = vld [vmem:[#allocation13 + $0x198] sm:$0xff]
      %v2196 = vld [vmem:[#allocation13 + $0x1a0] sm:$0xff]
      %v2197 = vld [vmem:[#allocation13 + $0x1a8] sm:$0xff]
      %v2198 = vld [vmem:[#allocation13 + $0x1b0] sm:$0xff]
      %v2199 = vld [vmem:[#allocation13 + $0x1b8] sm:$0xff]
      %v2200 = vld [vmem:[#allocation13 + $0x1c0] sm:$0xff]
      %v2201 = vld [vmem:[#allocation13 + $0x1c8] sm:$0xff]
      %v2202 = vld [vmem:[#allocation13 + $0x1d0] sm:$0xff]
      %v2203 = vld [vmem:[#allocation13 + $0x1d8] sm:$0xff]
      %v2204 = vld [vmem:[#allocation13 + $0x1e0] sm:$0xff]
      %v2205 = vld [vmem:[#allocation13 + $0x1e8] sm:$0xff]
      %v2206 = vld [vmem:[#allocation13 + $0x1f0] sm:$0xff]
      %v2207 = vld [vmem:[#allocation13 + $0x1f8] sm:$0xff]
      %v2208 = vld [vmem:[#allocation13 + $0x200] sm:$0xff]
      %v2209 = vld [vmem:[#allocation13 + $0x208] sm:$0xff]
      %v2210 = vld [vmem:[#allocation13 + $0x210] sm:$0xff]
      %v2211 = vld [vmem:[#allocation13 + $0x218] sm:$0xff]
      %v2212 = vld [vmem:[#allocation13 + $0x220] sm:$0xff]
      %v2213 = vld [vmem:[#allocation13 + $0x228] sm:$0xff]
      %v2214 = vld [vmem:[#allocation13 + $0x230] sm:$0xff]
      %v2215 = vld [vmem:[#allocation13 + $0x238] sm:$0xff]
      %v2216 = vld [vmem:[#allocation13 + $0x240] sm:$0xff]
      %v2217 = vld [vmem:[#allocation13 + $0x248] sm:$0xff]
      %v2218 = vld [vmem:[#allocation13 + $0x250] sm:$0xff]
      %v2219 = vld [vmem:[#allocation13 + $0x258] sm:$0xff]
      %v2220 = vld [vmem:[#allocation13 + $0x260] sm:$0xff]
      %v2221 = vld [vmem:[#allocation13 + $0x268] sm:$0xff]
      %v2222 = vld [vmem:[#allocation13 + $0x270] sm:$0xff]
      %v2223 = vld [vmem:[#allocation13 + $0x278] sm:$0xff]
      %v2224 = vld [vmem:[#allocation13 + $0x280] sm:$0xff]
      %v2225 = vld [vmem:[#allocation13 + $0x288] sm:$0xff]
      %v2226 = vld [vmem:[#allocation13 + $0x290] sm:$0xff]
      %v2227 = vld [vmem:[#allocation13 + $0x298] sm:$0xff]
      %v2228 = vld [vmem:[#allocation13 + $0x2a0] sm:$0xff]
      %v2229 = vld [vmem:[#allocation13 + $0x2a8] sm:$0xff]
      %v2230 = vld [vmem:[#allocation13 + $0x2b0] sm:$0xff]
      %v2231 = vld [vmem:[#allocation13 + $0x2b8] sm:$0xff]
      %v2232 = vld [vmem:[#allocation13 + $0x2c0] sm:$0xff]
      %v2233 = vld [vmem:[#allocation13 + $0x2c8] sm:$0xff]
      %v2234 = vld [vmem:[#allocation13 + $0x2d0] sm:$0xff]
      %v2235 = vld [vmem:[#allocation13 + $0x2d8] sm:$0xff]
      %v2236 = vld [vmem:[#allocation13 + $0x2e0] sm:$0xff]
      %v2237 = vld [vmem:[#allocation13 + $0x2e8] sm:$0xff]
      %v2238 = vld [vmem:[#allocation13 + $0x2f0] sm:$0xff]
      %v2239 = vld [vmem:[#allocation13 + $0x2f8] sm:$0xff]
      %v2240 = vld [vmem:[#allocation13 + $0x300] sm:$0xff]
      %v2241 = vld [vmem:[#allocation13 + $0x308] sm:$0xff]
      %v2242 = vld [vmem:[#allocation13 + $0x310] sm:$0xff]
      %v2243 = vld [vmem:[#allocation13 + $0x318] sm:$0xff]
      %v2244 = vld [vmem:[#allocation13 + $0x320] sm:$0xff]
      %v2245 = vld [vmem:[#allocation13 + $0x328] sm:$0xff]
      %v2246 = vld [vmem:[#allocation13 + $0x330] sm:$0xff]
      %v2247 = vld [vmem:[#allocation13 + $0x338] sm:$0xff]
      %v2248 = vld [vmem:[#allocation13 + $0x340] sm:$0xff]
      %v2249 = vld [vmem:[#allocation13 + $0x348] sm:$0xff]
      %v2250 = vld [vmem:[#allocation13 + $0x350] sm:$0xff]
      %v2251 = vld [vmem:[#allocation13 + $0x358] sm:$0xff]
      %v2252 = vld [vmem:[#allocation13 + $0x360] sm:$0xff]
      %v2253 = vld [vmem:[#allocation13 + $0x368] sm:$0xff]
      %v2254 = vld [vmem:[#allocation13 + $0x370] sm:$0xff]
      %v2255 = vld [vmem:[#allocation13 + $0x378] sm:$0xff]
      %v2256 = vld [vmem:[#allocation13 + $0x380] sm:$0xff]
      %v2257 = vld [vmem:[#allocation13 + $0x388] sm:$0xff]
      %v2258 = vld [vmem:[#allocation13 + $0x390] sm:$0xff]
      %v2259 = vld [vmem:[#allocation13 + $0x398] sm:$0xff]
      %v2260 = vld [vmem:[#allocation13 + $0x3a0] sm:$0xff]
      %v2261 = vld [vmem:[#allocation13 + $0x3a8] sm:$0xff]
      %v2262 = vld [vmem:[#allocation13 + $0x3b0] sm:$0xff]
      %v2263 = vld [vmem:[#allocation13 + $0x3b8] sm:$0xff]
      %v2264 = vld [vmem:[#allocation13 + $0x3c0] sm:$0xff]
      %v2265 = vld [vmem:[#allocation13 + $0x3c8] sm:$0xff]
      %v2266 = vld [vmem:[#allocation13 + $0x3d0] sm:$0xff]
      %v2267 = vld [vmem:[#allocation13 + $0x3d8] sm:$0xff]
      %v2268 = vld [vmem:[#allocation13 + $0x3e0] sm:$0xff]
      %v2269 = vld [vmem:[#allocation13 + $0x3e8] sm:$0xff]
      %v2270 = vld [vmem:[#allocation13 + $0x3f0] sm:$0xff]
      %v2271 = vld [vmem:[#allocation13 + $0x3f8] sm:$0xff]
      %v2272 = vld [vmem:[#allocation15] sm:$0xf]
      %v2274 = vlaneseq
      %v2275 = vshrl.u32 %v2274, 7
      %v2276 = vsub.s32 0, %v2275
      %v2277 = vrot.slane %v2272, %v2276
      %v2278 = vlaneseq
      %v2279 = vshrl.u32 %v2278, 7
      %v2280 = vsub.s32 1, %v2279
      %v2281 = vrot.slane %v2272, %v2280
      %v2282 = vlaneseq
      %v2283 = vshrl.u32 %v2282, 7
      %v2284 = vsub.s32 2, %v2283
      %v2285 = vrot.slane %v2272, %v2284
      %v2286 = vlaneseq
      %v2287 = vshrl.u32 %v2286, 7
      %v2288 = vsub.s32 3, %v2287
      %v2289 = vrot.slane %v2272, %v2288
      %v2296 = vunpack.c.l.b16 %v2142
      %v2297 = vunpack.c.h.b16 %v2142
      %v2298 = vunpack.c.l.b16 %v2143
      %v2299 = vunpack.c.h.b16 %v2143
      %v2300 = vpack.c.b16 %v2296, %v2296
      %v2301 = vpack.c.b16 %v2297, %v2297
      %v2302 = vpack.c.b16 %v2298, %v2298
      %v2303 = vpack.c.b16 %v2299, %v2299
      %v2436 = vunpack.c.l.b16 %v2144
      %v2437 = vunpack.c.h.b16 %v2144
      %v2438 = vunpack.c.l.b16 %v2145
      %v2439 = vunpack.c.h.b16 %v2145
      %v2440 = vunpack.c.l.b16 %v2146
      %v2441 = vunpack.c.h.b16 %v2146
      %v2442 = vunpack.c.l.b16 %v2147
      %v2443 = vunpack.c.h.b16 %v2147
      %v2444 = vunpack.c.l.b16 %v2148
      %v2445 = vunpack.c.h.b16 %v2148
      %v2446 = vunpack.c.l.b16 %v2149
      %v2447 = vunpack.c.h.b16 %v2149
      %v2448 = vunpack.c.l.b16 %v2150
      %v2449 = vunpack.c.h.b16 %v2150
      %v2450 = vunpack.c.l.b16 %v2151
      %v2451 = vunpack.c.h.b16 %v2151
      %v2452 = vunpack.c.l.b16 %v2152
      %v2453 = vunpack.c.h.b16 %v2152
      %v2454 = vunpack.c.l.b16 %v2153
      %v2455 = vunpack.c.h.b16 %v2153
      %v2456 = vunpack.c.l.b16 %v2154
      %v2457 = vunpack.c.h.b16 %v2154
      %v2458 = vunpack.c.l.b16 %v2155
      %v2459 = vunpack.c.h.b16 %v2155
      %v2460 = vunpack.c.l.b16 %v2156
      %v2461 = vunpack.c.h.b16 %v2156
      %v2462 = vunpack.c.l.b16 %v2157
      %v2463 = vunpack.c.h.b16 %v2157
      %v2464 = vunpack.c.l.b16 %v2158
      %v2465 = vunpack.c.h.b16 %v2158
      %v2466 = vunpack.c.l.b16 %v2159
      %v2467 = vunpack.c.h.b16 %v2159
      %v2468 = vunpack.c.l.b16 %v2160
      %v2469 = vunpack.c.h.b16 %v2160
      %v2470 = vunpack.c.l.b16 %v2161
      %v2471 = vunpack.c.h.b16 %v2161
      %v2472 = vunpack.c.l.b16 %v2162
      %v2473 = vunpack.c.h.b16 %v2162
      %v2474 = vunpack.c.l.b16 %v2163
      %v2475 = vunpack.c.h.b16 %v2163
      %v2476 = vunpack.c.l.b16 %v2164
      %v2477 = vunpack.c.h.b16 %v2164
      %v2478 = vunpack.c.l.b16 %v2165
      %v2479 = vunpack.c.h.b16 %v2165
      %v2480 = vunpack.c.l.b16 %v2166
      %v2481 = vunpack.c.h.b16 %v2166
      %v2482 = vunpack.c.l.b16 %v2167
      %v2483 = vunpack.c.h.b16 %v2167
      %v2484 = vunpack.c.l.b16 %v2168
      %v2485 = vunpack.c.h.b16 %v2168
      %v2486 = vunpack.c.l.b16 %v2169
      %v2487 = vunpack.c.h.b16 %v2169
      %v2488 = vunpack.c.l.b16 %v2170
      %v2489 = vunpack.c.h.b16 %v2170
      %v2490 = vunpack.c.l.b16 %v2171
      %v2491 = vunpack.c.h.b16 %v2171
      %v2492 = vunpack.c.l.b16 %v2172
      %v2493 = vunpack.c.h.b16 %v2172
      %v2494 = vunpack.c.l.b16 %v2173
      %v2495 = vunpack.c.h.b16 %v2173
      %v2496 = vunpack.c.l.b16 %v2174
      %v2497 = vunpack.c.h.b16 %v2174
      %v2498 = vunpack.c.l.b16 %v2175
      %v2499 = vunpack.c.h.b16 %v2175
      %v2500 = vunpack.c.l.b16 %v2176
      %v2501 = vunpack.c.h.b16 %v2176
      %v2502 = vunpack.c.l.b16 %v2177
      %v2503 = vunpack.c.h.b16 %v2177
      %v2504 = vunpack.c.l.b16 %v2178
      %v2505 = vunpack.c.h.b16 %v2178
      %v2506 = vunpack.c.l.b16 %v2179
      %v2507 = vunpack.c.h.b16 %v2179
      %v2508 = vunpack.c.l.b16 %v2180
      %v2509 = vunpack.c.h.b16 %v2180
      %v2510 = vunpack.c.l.b16 %v2181
      %v2511 = vunpack.c.h.b16 %v2181
      %v2512 = vunpack.c.l.b16 %v2182
      %v2513 = vunpack.c.h.b16 %v2182
      %v2514 = vunpack.c.l.b16 %v2183
      %v2515 = vunpack.c.h.b16 %v2183
      %v2516 = vunpack.c.l.b16 %v2184
      %v2517 = vunpack.c.h.b16 %v2184
      %v2518 = vunpack.c.l.b16 %v2185
      %v2519 = vunpack.c.h.b16 %v2185
      %v2520 = vunpack.c.l.b16 %v2186
      %v2521 = vunpack.c.h.b16 %v2186
      %v2522 = vunpack.c.l.b16 %v2187
      %v2523 = vunpack.c.h.b16 %v2187
      %v2524 = vunpack.c.l.b16 %v2188
      %v2525 = vunpack.c.h.b16 %v2188
      %v2526 = vunpack.c.l.b16 %v2189
      %v2527 = vunpack.c.h.b16 %v2189
      %v2528 = vunpack.c.l.b16 %v2190
      %v2529 = vunpack.c.h.b16 %v2190
      %v2530 = vunpack.c.l.b16 %v2191
      %v2531 = vunpack.c.h.b16 %v2191
      %v2532 = vunpack.c.l.b16 %v2192
      %v2533 = vunpack.c.h.b16 %v2192
      %v2534 = vunpack.c.l.b16 %v2193
      %v2535 = vunpack.c.h.b16 %v2193
      %v2536 = vunpack.c.l.b16 %v2194
      %v2537 = vunpack.c.h.b16 %v2194
      %v2538 = vunpack.c.l.b16 %v2195
      %v2539 = vunpack.c.h.b16 %v2195
      %v2540 = vunpack.c.l.b16 %v2196
      %v2541 = vunpack.c.h.b16 %v2196
      %v2542 = vunpack.c.l.b16 %v2197
      %v2543 = vunpack.c.h.b16 %v2197
      %v2544 = vunpack.c.l.b16 %v2198
      %v2545 = vunpack.c.h.b16 %v2198
      %v2546 = vunpack.c.l.b16 %v2199
      %v2547 = vunpack.c.h.b16 %v2199
      %v2548 = vunpack.c.l.b16 %v2200
      %v2549 = vunpack.c.h.b16 %v2200
      %v2550 = vunpack.c.l.b16 %v2201
      %v2551 = vunpack.c.h.b16 %v2201
      %v2552 = vunpack.c.l.b16 %v2202
      %v2553 = vunpack.c.h.b16 %v2202
      %v2554 = vunpack.c.l.b16 %v2203
      %v2555 = vunpack.c.h.b16 %v2203
      %v2556 = vunpack.c.l.b16 %v2204
      %v2557 = vunpack.c.h.b16 %v2204
      %v2558 = vunpack.c.l.b16 %v2205
      %v2559 = vunpack.c.h.b16 %v2205
      %v2560 = vunpack.c.l.b16 %v2206
      %v2561 = vunpack.c.h.b16 %v2206
      %v2562 = vunpack.c.l.b16 %v2207
      %v2563 = vunpack.c.h.b16 %v2207
      %v2564 = vunpack.c.l.b16 %v2208
      %v2565 = vunpack.c.h.b16 %v2208
      %v2566 = vunpack.c.l.b16 %v2209
      %v2567 = vunpack.c.h.b16 %v2209
      %v2568 = vunpack.c.l.b16 %v2210
      %v2569 = vunpack.c.h.b16 %v2210
      %v2570 = vunpack.c.l.b16 %v2211
      %v2571 = vunpack.c.h.b16 %v2211
      %v2572 = vunpack.c.l.b16 %v2212
      %v2573 = vunpack.c.h.b16 %v2212
      %v2574 = vunpack.c.l.b16 %v2213
      %v2575 = vunpack.c.h.b16 %v2213
      %v2576 = vunpack.c.l.b16 %v2214
      %v2577 = vunpack.c.h.b16 %v2214
      %v2578 = vunpack.c.l.b16 %v2215
      %v2579 = vunpack.c.h.b16 %v2215
      %v2580 = vunpack.c.l.b16 %v2216
      %v2581 = vunpack.c.h.b16 %v2216
      %v2582 = vunpack.c.l.b16 %v2217
      %v2583 = vunpack.c.h.b16 %v2217
      %v2584 = vunpack.c.l.b16 %v2218
      %v2585 = vunpack.c.h.b16 %v2218
      %v2586 = vunpack.c.l.b16 %v2219
      %v2587 = vunpack.c.h.b16 %v2219
      %v2588 = vunpack.c.l.b16 %v2220
      %v2589 = vunpack.c.h.b16 %v2220
      %v2590 = vunpack.c.l.b16 %v2221
      %v2591 = vunpack.c.h.b16 %v2221
      %v2592 = vunpack.c.l.b16 %v2222
      %v2593 = vunpack.c.h.b16 %v2222
      %v2594 = vunpack.c.l.b16 %v2223
      %v2595 = vunpack.c.h.b16 %v2223
      %v2596 = vunpack.c.l.b16 %v2224
      %v2597 = vunpack.c.h.b16 %v2224
      %v2598 = vunpack.c.l.b16 %v2225
      %v2599 = vunpack.c.h.b16 %v2225
      %v2600 = vunpack.c.l.b16 %v2226
      %v2601 = vunpack.c.h.b16 %v2226
      %v2602 = vunpack.c.l.b16 %v2227
      %v2603 = vunpack.c.h.b16 %v2227
      %v2604 = vunpack.c.l.b16 %v2228
      %v2605 = vunpack.c.h.b16 %v2228
      %v2606 = vunpack.c.l.b16 %v2229
      %v2607 = vunpack.c.h.b16 %v2229
      %v2608 = vunpack.c.l.b16 %v2230
      %v2609 = vunpack.c.h.b16 %v2230
      %v2610 = vunpack.c.l.b16 %v2231
      %v2611 = vunpack.c.h.b16 %v2231
      %v2612 = vunpack.c.l.b16 %v2232
      %v2613 = vunpack.c.h.b16 %v2232
      %v2614 = vunpack.c.l.b16 %v2233
      %v2615 = vunpack.c.h.b16 %v2233
      %v2616 = vunpack.c.l.b16 %v2234
      %v2617 = vunpack.c.h.b16 %v2234
      %v2618 = vunpack.c.l.b16 %v2235
      %v2619 = vunpack.c.h.b16 %v2235
      %v2620 = vunpack.c.l.b16 %v2236
      %v2621 = vunpack.c.h.b16 %v2236
      %v2622 = vunpack.c.l.b16 %v2237
      %v2623 = vunpack.c.h.b16 %v2237
      %v2624 = vunpack.c.l.b16 %v2238
      %v2625 = vunpack.c.h.b16 %v2238
      %v2626 = vunpack.c.l.b16 %v2239
      %v2627 = vunpack.c.h.b16 %v2239
      %v2628 = vunpack.c.l.b16 %v2240
      %v2629 = vunpack.c.h.b16 %v2240
      %v2630 = vunpack.c.l.b16 %v2241
      %v2631 = vunpack.c.h.b16 %v2241
      %v2632 = vunpack.c.l.b16 %v2242
      %v2633 = vunpack.c.h.b16 %v2242
      %v2634 = vunpack.c.l.b16 %v2243
      %v2635 = vunpack.c.h.b16 %v2243
      %v2636 = vunpack.c.l.b16 %v2244
      %v2637 = vunpack.c.h.b16 %v2244
      %v2638 = vunpack.c.l.b16 %v2245
      %v2639 = vunpack.c.h.b16 %v2245
      %v2640 = vunpack.c.l.b16 %v2246
      %v2641 = vunpack.c.h.b16 %v2246
      %v2642 = vunpack.c.l.b16 %v2247
      %v2643 = vunpack.c.h.b16 %v2247
      %v2644 = vunpack.c.l.b16 %v2248
      %v2645 = vunpack.c.h.b16 %v2248
      %v2646 = vunpack.c.l.b16 %v2249
      %v2647 = vunpack.c.h.b16 %v2249
      %v2648 = vunpack.c.l.b16 %v2250
      %v2649 = vunpack.c.h.b16 %v2250
      %v2650 = vunpack.c.l.b16 %v2251
      %v2651 = vunpack.c.h.b16 %v2251
      %v2652 = vunpack.c.l.b16 %v2252
      %v2653 = vunpack.c.h.b16 %v2252
      %v2654 = vunpack.c.l.b16 %v2253
      %v2655 = vunpack.c.h.b16 %v2253
      %v2656 = vunpack.c.l.b16 %v2254
      %v2657 = vunpack.c.h.b16 %v2254
      %v2658 = vunpack.c.l.b16 %v2255
      %v2659 = vunpack.c.h.b16 %v2255
      %v2660 = vunpack.c.l.b16 %v2256
      %v2661 = vunpack.c.h.b16 %v2256
      %v2662 = vunpack.c.l.b16 %v2257
      %v2663 = vunpack.c.h.b16 %v2257
      %v2664 = vunpack.c.l.b16 %v2258
      %v2665 = vunpack.c.h.b16 %v2258
      %v2666 = vunpack.c.l.b16 %v2259
      %v2667 = vunpack.c.h.b16 %v2259
      %v2668 = vunpack.c.l.b16 %v2260
      %v2669 = vunpack.c.h.b16 %v2260
      %v2670 = vunpack.c.l.b16 %v2261
      %v2671 = vunpack.c.h.b16 %v2261
      %v2672 = vunpack.c.l.b16 %v2262
      %v2673 = vunpack.c.h.b16 %v2262
      %v2674 = vunpack.c.l.b16 %v2263
      %v2675 = vunpack.c.h.b16 %v2263
      %v2676 = vunpack.c.l.b16 %v2264
      %v2677 = vunpack.c.h.b16 %v2264
      %v2678 = vunpack.c.l.b16 %v2265
      %v2679 = vunpack.c.h.b16 %v2265
      %v2680 = vunpack.c.l.b16 %v2266
      %v2681 = vunpack.c.h.b16 %v2266
      %v2682 = vunpack.c.l.b16 %v2267
      %v2683 = vunpack.c.h.b16 %v2267
      %v2684 = vunpack.c.l.b16 %v2268
      %v2685 = vunpack.c.h.b16 %v2268
      %v2686 = vunpack.c.l.b16 %v2269
      %v2687 = vunpack.c.h.b16 %v2269
      %v2688 = vunpack.c.l.b16 %v2270
      %v2689 = vunpack.c.h.b16 %v2270
      %v2690 = vunpack.c.l.b16 %v2271
      %v2691 = vunpack.c.h.b16 %v2271
      %v2692 = vpack.c.b16 %v2440, %v2436
      %v2693 = vpack.c.b16 %v2441, %v2437
      %v2694 = vpack.c.b16 %v2442, %v2438
      %v2695 = vpack.c.b16 %v2443, %v2439
      %v2696 = vpack.c.b16 %v2448, %v2444
      %v2697 = vpack.c.b16 %v2449, %v2445
      %v2698 = vpack.c.b16 %v2450, %v2446
      %v2699 = vpack.c.b16 %v2451, %v2447
      %v2700 = vpack.c.b16 %v2456, %v2452
      %v2701 = vpack.c.b16 %v2457, %v2453
      %v2702 = vpack.c.b16 %v2458, %v2454
      %v2703 = vpack.c.b16 %v2459, %v2455
      %v2704 = vpack.c.b16 %v2464, %v2460
      %v2705 = vpack.c.b16 %v2465, %v2461
      %v2706 = vpack.c.b16 %v2466, %v2462
      %v2707 = vpack.c.b16 %v2467, %v2463
      %v2708 = vpack.c.b16 %v2472, %v2468
      %v2709 = vpack.c.b16 %v2473, %v2469
      %v2710 = vpack.c.b16 %v2474, %v2470
      %v2711 = vpack.c.b16 %v2475, %v2471
      %v2712 = vpack.c.b16 %v2480, %v2476
      %v2713 = vpack.c.b16 %v2481, %v2477
      %v2714 = vpack.c.b16 %v2482, %v2478
      %v2715 = vpack.c.b16 %v2483, %v2479
      %v2716 = vpack.c.b16 %v2488, %v2484
      %v2717 = vpack.c.b16 %v2489, %v2485
      %v2718 = vpack.c.b16 %v2490, %v2486
      %v2719 = vpack.c.b16 %v2491, %v2487
      %v2720 = vpack.c.b16 %v2496, %v2492
      %v2721 = vpack.c.b16 %v2497, %v2493
      %v2722 = vpack.c.b16 %v2498, %v2494
      %v2723 = vpack.c.b16 %v2499, %v2495
      %v2724 = vpack.c.b16 %v2504, %v2500
      %v2725 = vpack.c.b16 %v2505, %v2501
      %v2726 = vpack.c.b16 %v2506, %v2502
      %v2727 = vpack.c.b16 %v2507, %v2503
      %v2728 = vpack.c.b16 %v2512, %v2508
      %v2729 = vpack.c.b16 %v2513, %v2509
      %v2730 = vpack.c.b16 %v2514, %v2510
      %v2731 = vpack.c.b16 %v2515, %v2511
      %v2732 = vpack.c.b16 %v2520, %v2516
      %v2733 = vpack.c.b16 %v2521, %v2517
      %v2734 = vpack.c.b16 %v2522, %v2518
      %v2735 = vpack.c.b16 %v2523, %v2519
      %v2736 = vpack.c.b16 %v2528, %v2524
      %v2737 = vpack.c.b16 %v2529, %v2525
      %v2738 = vpack.c.b16 %v2530, %v2526
      %v2739 = vpack.c.b16 %v2531, %v2527
      %v2740 = vpack.c.b16 %v2536, %v2532
      %v2741 = vpack.c.b16 %v2537, %v2533
      %v2742 = vpack.c.b16 %v2538, %v2534
      %v2743 = vpack.c.b16 %v2539, %v2535
      %v2744 = vpack.c.b16 %v2544, %v2540
      %v2745 = vpack.c.b16 %v2545, %v2541
      %v2746 = vpack.c.b16 %v2546, %v2542
      %v2747 = vpack.c.b16 %v2547, %v2543
      %v2748 = vpack.c.b16 %v2552, %v2548
      %v2749 = vpack.c.b16 %v2553, %v2549
      %v2750 = vpack.c.b16 %v2554, %v2550
      %v2751 = vpack.c.b16 %v2555, %v2551
      %v2752 = vpack.c.b16 %v2560, %v2556
      %v2753 = vpack.c.b16 %v2561, %v2557
      %v2754 = vpack.c.b16 %v2562, %v2558
      %v2755 = vpack.c.b16 %v2563, %v2559
      %v2756 = vpack.c.b16 %v2568, %v2564
      %v2757 = vpack.c.b16 %v2569, %v2565
      %v2758 = vpack.c.b16 %v2570, %v2566
      %v2759 = vpack.c.b16 %v2571, %v2567
      %v2760 = vpack.c.b16 %v2576, %v2572
      %v2761 = vpack.c.b16 %v2577, %v2573
      %v2762 = vpack.c.b16 %v2578, %v2574
      %v2763 = vpack.c.b16 %v2579, %v2575
      %v2764 = vpack.c.b16 %v2584, %v2580
      %v2765 = vpack.c.b16 %v2585, %v2581
      %v2766 = vpack.c.b16 %v2586, %v2582
      %v2767 = vpack.c.b16 %v2587, %v2583
      %v2768 = vpack.c.b16 %v2592, %v2588
      %v2769 = vpack.c.b16 %v2593, %v2589
      %v2770 = vpack.c.b16 %v2594, %v2590
      %v2771 = vpack.c.b16 %v2595, %v2591
      %v2772 = vpack.c.b16 %v2600, %v2596
      %v2773 = vpack.c.b16 %v2601, %v2597
      %v2774 = vpack.c.b16 %v2602, %v2598
      %v2775 = vpack.c.b16 %v2603, %v2599
      %v2776 = vpack.c.b16 %v2608, %v2604
      %v2777 = vpack.c.b16 %v2609, %v2605
      %v2778 = vpack.c.b16 %v2610, %v2606
      %v2779 = vpack.c.b16 %v2611, %v2607
      %v2780 = vpack.c.b16 %v2616, %v2612
      %v2781 = vpack.c.b16 %v2617, %v2613
      %v2782 = vpack.c.b16 %v2618, %v2614
      %v2783 = vpack.c.b16 %v2619, %v2615
      %v2784 = vpack.c.b16 %v2624, %v2620
      %v2785 = vpack.c.b16 %v2625, %v2621
      %v2786 = vpack.c.b16 %v2626, %v2622
      %v2787 = vpack.c.b16 %v2627, %v2623
      %v2788 = vpack.c.b16 %v2632, %v2628
      %v2789 = vpack.c.b16 %v2633, %v2629
      %v2790 = vpack.c.b16 %v2634, %v2630
      %v2791 = vpack.c.b16 %v2635, %v2631
      %v2792 = vpack.c.b16 %v2640, %v2636
      %v2793 = vpack.c.b16 %v2641, %v2637
      %v2794 = vpack.c.b16 %v2642, %v2638
      %v2795 = vpack.c.b16 %v2643, %v2639
      %v2796 = vpack.c.b16 %v2648, %v2644
      %v2797 = vpack.c.b16 %v2649, %v2645
      %v2798 = vpack.c.b16 %v2650, %v2646
      %v2799 = vpack.c.b16 %v2651, %v2647
      %v2800 = vpack.c.b16 %v2656, %v2652
      %v2801 = vpack.c.b16 %v2657, %v2653
      %v2802 = vpack.c.b16 %v2658, %v2654
      %v2803 = vpack.c.b16 %v2659, %v2655
      %v2804 = vpack.c.b16 %v2664, %v2660
      %v2805 = vpack.c.b16 %v2665, %v2661
      %v2806 = vpack.c.b16 %v2666, %v2662
      %v2807 = vpack.c.b16 %v2667, %v2663
      %v2808 = vpack.c.b16 %v2672, %v2668
      %v2809 = vpack.c.b16 %v2673, %v2669
      %v2810 = vpack.c.b16 %v2674, %v2670
      %v2811 = vpack.c.b16 %v2675, %v2671
      %v2812 = vpack.c.b16 %v2680, %v2676
      %v2813 = vpack.c.b16 %v2681, %v2677
      %v2814 = vpack.c.b16 %v2682, %v2678
      %v2815 = vpack.c.b16 %v2683, %v2679
      %v2816 = vpack.c.b16 %v2688, %v2684
      %v2817 = vpack.c.b16 %v2689, %v2685
      %v2818 = vpack.c.b16 %v2690, %v2686
      %v2819 = vpack.c.b16 %v2691, %v2687
      %2948 = vmatprep.subr.bf16.mxu0 %v2693
      %2949 = vmatpush1.bf16.msra.mxu0 %v2692
      %2950 = vmatprep.subr.bf16.mxu0 %v2697
      %2951 = vmatpush1.bf16.msra.mxu0 %v2696
      %2952 = vmatprep.subr.bf16.mxu0 %v2701
      %2953 = vmatpush1.bf16.msra.mxu0 %v2700
      %2954 = vmatprep.subr.bf16.mxu0 %v2705
      %2955 = vmatpush1.bf16.msra.mxu0 %v2704
      %2956 = vmatprep.subr.bf16.mxu0 %v2709
      %2957 = vmatpush1.bf16.msra.mxu0 %v2708
      %2958 = vmatprep.subr.bf16.mxu0 %v2713
      %2959 = vmatpush1.bf16.msra.mxu0 %v2712
      %2960 = vmatprep.subr.bf16.mxu0 %v2717
      %2961 = vmatpush1.bf16.msra.mxu0 %v2716
      %2962 = vmatprep.subr.bf16.mxu0 %v2721
      %2963 = vmatpush1.bf16.msra.mxu0 %v2720
      %2964 = vmatprep.subr.bf16.mxu0 %v2725
      %2965 = vmatpush1.bf16.msra.mxu0 %v2724
      %2966 = vmatprep.subr.bf16.mxu0 %v2729
      %2967 = vmatpush1.bf16.msra.mxu0 %v2728
      %2968 = vmatprep.subr.bf16.mxu0 %v2733
      %2969 = vmatpush1.bf16.msra.mxu0 %v2732
      %2970 = vmatprep.subr.bf16.mxu0 %v2737
      %2971 = vmatpush1.bf16.msra.mxu0 %v2736
      %2972 = vmatprep.subr.bf16.mxu0 %v2741
      %2973 = vmatpush1.bf16.msra.mxu0 %v2740
      %2974 = vmatprep.subr.bf16.mxu0 %v2745
      %2975 = vmatpush1.bf16.msra.mxu0 %v2744
      %2976 = vmatprep.subr.bf16.mxu0 %v2749
      %2977 = vmatpush1.bf16.msra.mxu0 %v2748
      %2978 = vmatprep.subr.bf16.mxu0 %v2753
      %2979 = vmatpush1.bf16.msra.mxu0 %v2752
      %2980 = vmatprep.mubr.bf16.mxu0 %v2301
      %2981 = vmatmul.mubr.bf16.gmra.mrb[0].mxu0 %v2300
      %v2982 = vpop.f32.mrb[0].mxu0
      %v2983 = vadd.f32 %v2277, %v2982
      %v2984 = vpop.f32.mrb[0].mxu0
      %v2985 = vadd.f32 %v2281, %v2984
      %v2986 = vpop.f32.mrb[0].mxu0
      %v2987 = vpop.f32.mrb[0].mxu0
      %2988 = vdwg.mxu0
      %2989 = vmatprep.subr.bf16.mxu0 %v2757
      %2990 = vmatpush1.bf16.msra.mxu0 %v2756
      %2991 = vmatprep.subr.bf16.mxu0 %v2761
      %2992 = vmatpush1.bf16.msra.mxu0 %v2760
      %2993 = vmatprep.subr.bf16.mxu0 %v2765
      %2994 = vmatpush1.bf16.msra.mxu0 %v2764
      %2995 = vmatprep.subr.bf16.mxu0 %v2769
      %2996 = vmatpush1.bf16.msra.mxu0 %v2768
      %2997 = vmatprep.subr.bf16.mxu0 %v2773
      %2998 = vmatpush1.bf16.msra.mxu0 %v2772
      %2999 = vmatprep.subr.bf16.mxu0 %v2777
      %3000 = vmatpush1.bf16.msra.mxu0 %v2776
      %3001 = vmatprep.subr.bf16.mxu0 %v2781
      %3002 = vmatpush1.bf16.msra.mxu0 %v2780
      %3003 = vmatprep.subr.bf16.mxu0 %v2785
      %3004 = vmatpush1.bf16.msra.mxu0 %v2784
      %3005 = vmatprep.subr.bf16.mxu0 %v2789
      %3006 = vmatpush1.bf16.msra.mxu0 %v2788
      %3007 = vmatprep.subr.bf16.mxu0 %v2793
      %3008 = vmatpush1.bf16.msra.mxu0 %v2792
      %3009 = vmatprep.subr.bf16.mxu0 %v2797
      %3010 = vmatpush1.bf16.msra.mxu0 %v2796
      %3011 = vmatprep.subr.bf16.mxu0 %v2801
      %3012 = vmatpush1.bf16.msra.mxu0 %v2800
      %3013 = vmatprep.subr.bf16.mxu0 %v2805
      %3014 = vmatpush1.bf16.msra.mxu0 %v2804
      %3015 = vmatprep.subr.bf16.mxu0 %v2809
      %3016 = vmatpush1.bf16.msra.mxu0 %v2808
      %3017 = vmatprep.subr.bf16.mxu0 %v2813
      %3018 = vmatpush1.bf16.msra.mxu0 %v2812
      %3019 = vmatprep.subr.bf16.mxu0 %v2817
      %3020 = vmatpush1.bf16.msra.mxu0 %v2816
      %3021 = vmatprep.mubr.bf16.mxu0 %v2303
      %3022 = vmatmul.mubr.bf16.gmra.mrb[0].mxu0 %v2302
      %v3023 = vpop.f32.mrb[0].mxu0
      %v3024 = vadd.f32 %v2983, %v3023
      %v3025 = vpop.f32.mrb[0].mxu0
      %v3026 = vadd.f32 %v2985, %v3025
      %v3027 = vpop.f32.mrb[0].mxu0
      %v3028 = vpop.f32.mrb[0].mxu0
      %3029 = vdwg.mxu0
      %3030 = vmatprep.subr.bf16.mxu0 %v2695
      %3031 = vmatpush1.bf16.msra.mxu0 %v2694
      %3032 = vmatprep.subr.bf16.mxu0 %v2699
      %3033 = vmatpush1.bf16.msra.mxu0 %v2698
      %3034 = vmatprep.subr.bf16.mxu0 %v2703
      %3035 = vmatpush1.bf16.msra.mxu0 %v2702
      %3036 = vmatprep.subr.bf16.mxu0 %v2707
      %3037 = vmatpush1.bf16.msra.mxu0 %v2706
      %3038 = vmatprep.subr.bf16.mxu0 %v2711
      %3039 = vmatpush1.bf16.msra.mxu0 %v2710
      %3040 = vmatprep.subr.bf16.mxu0 %v2715
      %3041 = vmatpush1.bf16.msra.mxu0 %v2714
      %3042 = vmatprep.subr.bf16.mxu0 %v2719
      %3043 = vmatpush1.bf16.msra.mxu0 %v2718
      %3044 = vmatprep.subr.bf16.mxu0 %v2723
      %3045 = vmatpush1.bf16.msra.mxu0 %v2722
      %3046 = vmatprep.subr.bf16.mxu0 %v2727
      %3047 = vmatpush1.bf16.msra.mxu0 %v2726
      %3048 = vmatprep.subr.bf16.mxu0 %v2731
      %3049 = vmatpush1.bf16.msra.mxu0 %v2730
      %3050 = vmatprep.subr.bf16.mxu0 %v2735
      %3051 = vmatpush1.bf16.msra.mxu0 %v2734
      %3052 = vmatprep.subr.bf16.mxu0 %v2739
      %3053 = vmatpush1.bf16.msra.mxu0 %v2738
      %3054 = vmatprep.subr.bf16.mxu0 %v2743
      %3055 = vmatpush1.bf16.msra.mxu0 %v2742
      %3056 = vmatprep.subr.bf16.mxu0 %v2747
      %3057 = vmatpush1.bf16.msra.mxu0 %v2746
      %3058 = vmatprep.subr.bf16.mxu0 %v2751
      %3059 = vmatpush1.bf16.msra.mxu0 %v2750
      %3060 = vmatprep.subr.bf16.mxu0 %v2755
      %3061 = vmatpush1.bf16.msra.mxu0 %v2754
      %3062 = vmatprep.mubr.bf16.mxu0 %v2301
      %3063 = vmatmul.mubr.bf16.gmra.mrb[0].mxu0 %v2300
      %v3064 = vpop.f32.mrb[0].mxu0
      %v3065 = vadd.f32 %v2285, %v3064
      %v3066 = vpop.f32.mrb[0].mxu0
      %v3067 = vadd.f32 %v2289, %v3066
      %v3068 = vpop.f32.mrb[0].mxu0
      %v3069 = vpop.f32.mrb[0].mxu0
      %3070 = vdwg.mxu0
      %3071 = vmatprep.subr.bf16.mxu0 %v2759
      %3072 = vmatpush1.bf16.msra.mxu0 %v2758
      %3073 = vmatprep.subr.bf16.mxu0 %v2763
      %3074 = vmatpush1.bf16.msra.mxu0 %v2762
      %3075 = vmatprep.subr.bf16.mxu0 %v2767
      %3076 = vmatpush1.bf16.msra.mxu0 %v2766
      %3077 = vmatprep.subr.bf16.mxu0 %v2771
      %3078 = vmatpush1.bf16.msra.mxu0 %v2770
      %3079 = vmatprep.subr.bf16.mxu0 %v2775
      %3080 = vmatpush1.bf16.msra.mxu0 %v2774
      %3081 = vmatprep.subr.bf16.mxu0 %v2779
      %3082 = vmatpush1.bf16.msra.mxu0 %v2778
      %3083 = vmatprep.subr.bf16.mxu0 %v2783
      %3084 = vmatpush1.bf16.msra.mxu0 %v2782
      %3085 = vmatprep.subr.bf16.mxu0 %v2787
      %3086 = vmatpush1.bf16.msra.mxu0 %v2786
      %3087 = vmatprep.subr.bf16.mxu0 %v2791
      %3088 = vmatpush1.bf16.msra.mxu0 %v2790
      %3089 = vmatprep.subr.bf16.mxu0 %v2795
      %3090 = vmatpush1.bf16.msra.mxu0 %v2794
      %3091 = vmatprep.subr.bf16.mxu0 %v2799
      %3092 = vmatpush1.bf16.msra.mxu0 %v2798
      %3093 = vmatprep.subr.bf16.mxu0 %v2803
      %3094 = vmatpush1.bf16.msra.mxu0 %v2802
      %3095 = vmatprep.subr.bf16.mxu0 %v2807
      %3096 = vmatpush1.bf16.msra.mxu0 %v2806
      %3097 = vmatprep.subr.bf16.mxu0 %v2811
      %3098 = vmatpush1.bf16.msra.mxu0 %v2810
      %3099 = vmatprep.subr.bf16.mxu0 %v2815
      %3100 = vmatpush1.bf16.msra.mxu0 %v2814
      %3101 = vmatprep.subr.bf16.mxu0 %v2819
      %3102 = vmatpush1.bf16.msra.mxu0 %v2818
      %3103 = vmatprep.mubr.bf16.mxu0 %v2303
      %3104 = vmatmul.mubr.bf16.gmra.mrb[0].mxu0 %v2302
      %v3105 = vpop.f32.mrb[0].mxu0
      %v3106 = vadd.f32 %v3065, %v3105
      %v3107 = vpop.f32.mrb[0].mxu0
      %v3108 = vadd.f32 %v3067, %v3107
      %v3109 = vpop.f32.mrb[0].mxu0
      %v3110 = vpop.f32.mrb[0].mxu0
      %3111 = vdwg.mxu0
      %v3112 = vxor.u32 %v3024, 2147483648
      %v3113 = vmul.f32 %v3112, 1.442695
      %v3114 = vpow.pop %v3113
      %v3115 = vadd.f32 %v3114, 1.0
      %v3116 = vrcp.pop %v3115
      %v3117 = vmul.f32 1.0, %v3116
      %v3118 = vxor.u32 %v3026, 2147483648
      %v3119 = vmul.f32 %v3118, 1.442695
      %v3120 = vpow.pop %v3119
      %v3121 = vadd.f32 %v3120, 1.0
      %v3122 = vrcp.pop %v3121
      %v3123 = vmul.f32 1.0, %v3122
      %v3124 = vtanh.pop %v3106
      %v3125 = vxor.u32 %v3108, 2147483648
      %v3126 = vmul.f32 %v3125, 1.442695
      %v3127 = vpow.pop %v3126
      %v3128 = vadd.f32 %v3127, 1.0
      %v3129 = vrcp.pop %v3128
      %v3130 = vmul.f32 1.0, %v3129
      %v3131 = vmul.f32 %v3123, %v151
      %v3132 = vmul.f32 %v3117, %v3124
      %v3133 = vadd.f32 %v3131, %v3132
      %v3134 = vtanh.pop %v3133
      %v3135 = vmul.f32 %v3130, %v3134
      %v3136 = vpack.c.bf16 %v3135, %v3135
      %v3137 = vld [vmem:[#allocation16] sm:$0xf]
      %v3138 = vld [vmem:[#allocation16 + $0x4] sm:$0xf]
      %v3139 = vld [vmem:[#allocation16 + $0x8] sm:$0xf]
      %v3140 = vld [vmem:[#allocation16 + $0xc] sm:$0xf]
      %v3141 = vld [vmem:[#allocation16 + $0x10] sm:$0xf]
      %v3142 = vld [vmem:[#allocation16 + $0x14] sm:$0xf]
      %v3143 = vld [vmem:[#allocation16 + $0x18] sm:$0xf]
      %v3144 = vld [vmem:[#allocation16 + $0x1c] sm:$0xf]
      %v3145 = vld [vmem:[#allocation16 + $0x20] sm:$0xf]
      %v3146 = vld [vmem:[#allocation16 + $0x24] sm:$0xf]
      %v3147 = vld [vmem:[#allocation16 + $0x28] sm:$0xf]
      %v3148 = vld [vmem:[#allocation16 + $0x2c] sm:$0xf]
      %v3149 = vld [vmem:[#allocation16 + $0x30] sm:$0xf]
      %v3150 = vld [vmem:[#allocation16 + $0x34] sm:$0xf]
      %v3151 = vld [vmem:[#allocation16 + $0x38] sm:$0xf]
      %v3152 = vld [vmem:[#allocation16 + $0x3c] sm:$0xf]
      %v3153 = vld [vmem:[%s7] sm:$0x1]
      %v3155 = vlaneseq
      %v3156 = vshrl.u32 %v3155, 7
      %v3157 = vsub.s32 0, %v3156
      %v3158 = vrot.slane %v3153, %v3157
      %v3176 = vunpack.c.l.b16 %v3137
      %v3177 = vunpack.c.l.b16 %v3138
      %v3178 = vunpack.c.l.b16 %v3139
      %v3179 = vunpack.c.l.b16 %v3140
      %v3180 = vunpack.c.l.b16 %v3141
      %v3181 = vunpack.c.l.b16 %v3142
      %v3182 = vunpack.c.l.b16 %v3143
      %v3183 = vunpack.c.l.b16 %v3144
      %v3184 = vunpack.c.l.b16 %v3145
      %v3185 = vunpack.c.l.b16 %v3146
      %v3186 = vunpack.c.l.b16 %v3147
      %v3187 = vunpack.c.l.b16 %v3148
      %v3188 = vunpack.c.l.b16 %v3149
      %v3189 = vunpack.c.l.b16 %v3150
      %v3190 = vunpack.c.l.b16 %v3151
      %v3191 = vunpack.c.l.b16 %v3152
      %v3192 = vpack.c.b16 %v3177, %v3176
      %v3193 = vpack.c.b16 %v3179, %v3178
      %v3194 = vpack.c.b16 %v3181, %v3180
      %v3195 = vpack.c.b16 %v3183, %v3182
      %v3196 = vpack.c.b16 %v3185, %v3184
      %v3197 = vpack.c.b16 %v3187, %v3186
      %v3198 = vpack.c.b16 %v3189, %v3188
      %v3199 = vpack.c.b16 %v3191, %v3190
      %3208 = vmatprep.subr.bf16.mxu0 0
      %3209 = vmatpush1.bf16.msra.mxu0 %v3192
      %3210 = vmatprep.subr.bf16.mxu0 0
      %3211 = vmatpush1.bf16.msra.mxu0 %v3193
      %3212 = vmatprep.subr.bf16.mxu0 0
      %3213 = vmatpush1.bf16.msra.mxu0 %v3194
      %3214 = vmatprep.subr.bf16.mxu0 0
      %3215 = vmatpush1.bf16.msra.mxu0 %v3195
      %3216 = vmatprep.subr.bf16.mxu0 0
      %3217 = vmatpush1.bf16.msra.mxu0 %v3196
      %3218 = vmatprep.subr.bf16.mxu0 0
      %3219 = vmatpush1.bf16.msra.mxu0 %v3197
      %3220 = vmatprep.subr.bf16.mxu0 0
      %3221 = vmatpush1.bf16.msra.mxu0 %v3198
      %3222 = vmatprep.subr.bf16.mxu0 0
      %3223 = vmatpush1.bf16.msra.mxu0 %v3199
      %3224 = vmatprep.subr.bf16.mxu0 0
      %3225 = vmatpush1.bf16.msra.mxu0 0
      %3226 = vmatprep.subr.bf16.mxu0 0
      %3227 = vmatpush1.bf16.msra.mxu0 0
      %3228 = vmatprep.subr.bf16.mxu0 0
      %3229 = vmatpush1.bf16.msra.mxu0 0
      %3230 = vmatprep.subr.bf16.mxu0 0
      %3231 = vmatpush1.bf16.msra.mxu0 0
      %3232 = vmatprep.subr.bf16.mxu0 0
      %3233 = vmatpush1.bf16.msra.mxu0 0
      %3234 = vmatprep.subr.bf16.mxu0 0
      %3235 = vmatpush1.bf16.msra.mxu0 0
      %3236 = vmatprep.subr.bf16.mxu0 0
      %3237 = vmatpush1.bf16.msra.mxu0 0
      %3238 = vmatprep.subr.bf16.mxu0 0
      %3239 = vmatpush1.bf16.msra.mxu0 0
      %3240 = vmatprep.mubr.bf16.mxu0 0
      %3241 = vmatmul.mubr.bf16.gmra.mrb[0].mxu0 %v3136
      %v3242 = vpop.f32.mrb[0].mxu0
      %v3243 = vadd.f32 %v3158, %v3242
      %v3244 = vpop.f32.mrb[0].mxu0
      %v3245 = vpop.f32.mrb[0].mxu0
      %v3246 = vpop.f32.mrb[0].mxu0
      %3247 = vdwg.mxu0
      %3248 = vmax.xlane.f32.xlu0 %v3243
      %v3249 = vpop.xlane.xlu0 %3248
      %v3250 = vsub.f32 %v3243, %v3249
      %v3251 = vmul.f32 %v3250, 1.442695
      %v3252 = vpow.pop %v3251
      %3253 = vadd.xlane.f32.xlu0 %v3252
      %v3254 = vpop.xlane.xlu0 %3253
      %v3255 = vlog2.pop %v3254
      %v3256 = vmul.f32 %v3255, 0.6931472
      %v3257 = vadd.f32 %v3256, %v3249
      %v3258 = vsub.f32 %v3243, %v3257
      %3260 = vset.pattern.permute.xlu0 0
      %3261 = vperm.xlu0 %3260, %v153
      %v3262 = vpop.permute.xlu0 %3261
      %v3264 = vadd.f32 %v3258, %v3262
      %p3265 = scmp.gt.s32.totalorder %s145, 0
      %vm3266 = vcmp.eq.s32.totalorder %v143, 0
      %s3267 = scalar_select %p3265, 1, 0
      %v3268 = vstv %s3267
      %vm3269 = vcmp.eq.s32.totalorder %v3268, 1
      %vm3270 = vmor %vm3269, %vm3266
      %v3271 = vsel %vm3270, 1, 0
      %vm3272 = vcmp.eq.s32.totalorder %v3271, 1
      %v3273 = vsel %vm3272, %v3264, -1e+30
      %3274 = vmax.xlane.f32.xlu0 %v3273
      %v3275 = vpop.xlane.xlu0 %3274
      %vm3276 = vcmp.ge.f32.partialorder %v3273, %v3275
      %v3277 = vsel %vm3276, %v129, 128.0
      %3278 = vmin.xlane.f32.xlu0 %v3277
      %v3279 = vpop.xlane.xlu0 %3278
      %v3280 = vcvt.f32.s32.to.zero.pseudo %v3279
      %v3282 = vrot.slane %v3275, 7
      %vm3284 = vcmp.gt.f32.partialorder %v3275, %v3282
      %v3285 = vsel %vm3284, %v3275, %v3282
      %v3286 = vrot.slane %v3280, 7
      %v3287 = vsel %vm3284, %v3280, %v3286
      %v3288 = vsel %vm3284, 1, 0
      %v3290 = vrot.slane %v3285, 7
      %vm3292 = vcmp.gt.f32.partialorder %v3275, %v3290
      %v3293 = vsel %vm3292, %v3275, %v3290
      %v3294 = vrot.slane %v3287, 7
      %v3295 = vsel %vm3292, %v3280, %v3294
      %v3296 = vrot.slane %v3288, 7
      %v3297 = vsel %vm3292, 2, %v3296
      %v3299 = vrot.slane %v3293, 7
      %vm3301 = vcmp.gt.f32.partialorder %v3275, %v3299
      %v3302 = vsel %vm3301, %v3275, %v3299
      %v3303 = vrot.slane %v3295, 7
      %v3304 = vsel %vm3301, %v3280, %v3303
      %v3305 = vrot.slane %v3297, 7
      %v3306 = vsel %vm3301, 3, %v3305
      %v3307 = vrot.slane %v3306, 3
      %s3308 = vtos %v3307
      %v3309 = vstv %s3308
      %vm3310 = vcmp.eq.s32.totalorder %v131, %v3309
      %v3311 = vrot.slane %v3304, 3
      %s3312 = vtos %v3311
      %v3313 = vstv %s3312
      %vm3314 = vcmp.eq.s32.totalorder %v128, %v3313
      %vm3315 = vmand %vm3310, %vm3314
      %v3316 = vsel %vm3315, -1e+30, %v3273
      %v3317 = vsel %vm3284, 5, 4
      %v3318 = vrot.slane %v3317, 7
      %v3319 = vsel %vm3292, 6, %v3318
      %v3320 = vrot.slane %v3319, 7
      %v3321 = vsel %vm3301, 7, %v3320
      %v3322 = vrot.slane %v3321, 7
      %s3323 = vtos %v3322
      %v3324 = vstv %s3323
      %vm3325 = vcmp.eq.s32.totalorder %v131, %v3324
      %v3326 = vrot.slane %v3304, 7
      %s3327 = vtos %v3326
      %v3328 = vstv %s3327
      %vm3329 = vcmp.eq.s32.totalorder %v128, %v3328
      %vm3330 = vmand %vm3325, %vm3329
      %v3331 = vsel %vm3330, -1e+30, %v3316
      %3332 = vmax.xlane.f32.xlu0 %v3331
      %v3333 = vpop.xlane.xlu0 %3332
      %vm3334 = vcmp.ge.f32.partialorder %v3331, %v3333
      %v3335 = vsel %vm3334, %v129, 128.0
      %3336 = vmin.xlane.f32.xlu0 %v3335
      %v3337 = vpop.xlane.xlu0 %3336
      %v3338 = vcvt.f32.s32.to.zero.pseudo %v3337
      %v3340 = vrot.slane %v3333, 7
      %vm3342 = vcmp.gt.f32.partialorder %v3333, %v3340
      %v3343 = vsel %vm3342, %v3333, %v3340
      %v3344 = vrot.slane %v3338, 7
      %v3345 = vsel %vm3342, %v3338, %v3344
      %v3346 = vsel %vm3342, 1, 0
      %v3348 = vrot.slane %v3343, 7
      %vm3350 = vcmp.gt.f32.partialorder %v3333, %v3348
      %v3351 = vsel %vm3350, %v3333, %v3348
      %v3352 = vrot.slane %v3345, 7
      %v3353 = vsel %vm3350, %v3338, %v3352
      %v3354 = vrot.slane %v3346, 7
      %v3355 = vsel %vm3350, 2, %v3354
      %v3357 = vrot.slane %v3351, 7
      %vm3359 = vcmp.gt.f32.partialorder %v3333, %v3357
      %v3360 = vsel %vm3359, %v3333, %v3357
      %v3361 = vrot.slane %v3353, 7
      %v3362 = vsel %vm3359, %v3338, %v3361
      %v3363 = vrot.slane %v3355, 7
      %v3364 = vsel %vm3359, 3, %v3363
      %v3365 = vrot.slane %v3364, 3
      %s3366 = vtos %v3365
      %v3367 = vstv %s3366
      %vm3368 = vcmp.eq.s32.totalorder %v131, %v3367
      %v3369 = vrot.slane %v3362, 3
      %s3370 = vtos %v3369
      %v3371 = vstv %s3370
      %vm3372 = vcmp.eq.s32.totalorder %v128, %v3371
      %vm3373 = vmand %vm3368, %vm3372
      %v3374 = vsel %vm3373, -1e+30, %v3331
      %v3375 = vsel %vm3342, 5, 4
      %v3376 = vrot.slane %v3375, 7
      %v3377 = vsel %vm3350, 6, %v3376
      %v3378 = vrot.slane %v3377, 7
      %v3379 = vsel %vm3359, 7, %v3378
      %v3380 = vrot.slane %v3379, 7
      %s3381 = vtos %v3380
      %v3382 = vstv %s3381
      %vm3383 = vcmp.eq.s32.totalorder %v131, %v3382
      %v3384 = vrot.slane %v3362, 7
      %s3385 = vtos %v3384
      %v3386 = vstv %s3385
      %vm3387 = vcmp.eq.s32.totalorder %v128, %v3386
      %vm3388 = vmand %vm3383, %vm3387
      %v3389 = vsel %vm3388, -1e+30, %v3374
      %3390 = vmax.xlane.f32.xlu0 %v3389
      %v3391 = vpop.xlane.xlu0 %3390
      %vm3392 = vcmp.ge.f32.partialorder %v3389, %v3391
      %v3393 = vsel %vm3392, %v129, 128.0
      %3394 = vmin.xlane.f32.xlu0 %v3393
      %v3395 = vpop.xlane.xlu0 %3394
      %v3396 = vcvt.f32.s32.to.zero.pseudo %v3395
      %v3398 = vrot.slane %v3391, 7
      %vm3400 = vcmp.gt.f32.partialorder %v3391, %v3398
      %v3401 = vsel %vm3400, %v3391, %v3398
      %v3402 = vrot.slane %v3396, 7
      %v3403 = vsel %vm3400, %v3396, %v3402
      %v3404 = vsel %vm3400, 1, 0
      %v3406 = vrot.slane %v3401, 7
      %vm3408 = vcmp.gt.f32.partialorder %v3391, %v3406
      %v3409 = vsel %vm3408, %v3391, %v3406
      %v3410 = vrot.slane %v3403, 7
      %v3411 = vsel %vm3408, %v3396, %v3410
      %v3412 = vrot.slane %v3404, 7
      %v3413 = vsel %vm3408, 2, %v3412
      %v3415 = vrot.slane %v3409, 7
      %vm3417 = vcmp.gt.f32.partialorder %v3391, %v3415
      %v3418 = vsel %vm3417, %v3391, %v3415
      %v3419 = vrot.slane %v3411, 7
      %v3420 = vsel %vm3417, %v3396, %v3419
      %v3421 = vrot.slane %v3413, 7
      %v3422 = vsel %vm3417, 3, %v3421
      %v3423 = vrot.slane %v3422, 3
      %s3424 = vtos %v3423
      %v3425 = vstv %s3424
      %vm3426 = vcmp.eq.s32.totalorder %v131, %v3425
      %v3427 = vrot.slane %v3420, 3
      %s3428 = vtos %v3427
      %v3429 = vstv %s3428
      %vm3430 = vcmp.eq.s32.totalorder %v128, %v3429
      %vm3431 = vmand %vm3426, %vm3430
      %v3432 = vsel %vm3431, -1e+30, %v3389
      %v3433 = vsel %vm3400, 5, 4
      %v3434 = vrot.slane %v3433, 7
      %v3435 = vsel %vm3408, 6, %v3434
      %v3436 = vrot.slane %v3435, 7
      %v3437 = vsel %vm3417, 7, %v3436
      %v3438 = vrot.slane %v3437, 7
      %s3439 = vtos %v3438
      %v3440 = vstv %s3439
      %vm3441 = vcmp.eq.s32.totalorder %v131, %v3440
      %v3442 = vrot.slane %v3420, 7
      %s3443 = vtos %v3442
      %v3444 = vstv %s3443
      %vm3445 = vcmp.eq.s32.totalorder %v128, %v3444
      %vm3446 = vmand %vm3441, %vm3445
      %v3447 = vsel %vm3446, -1e+30, %v3432
      %3448 = vmax.xlane.f32.xlu0 %v3447
      %v3449 = vpop.xlane.xlu0 %3448
      %vm3450 = vcmp.ge.f32.partialorder %v3447, %v3449
      %v3451 = vsel %vm3450, %v129, 128.0
      %3452 = vmin.xlane.f32.xlu0 %v3451
      %v3453 = vpop.xlane.xlu0 %3452
      %v3454 = vcvt.f32.s32.to.zero.pseudo %v3453
      %v3456 = vrot.slane %v3449, 7
      %vm3458 = vcmp.gt.f32.partialorder %v3449, %v3456
      %v3459 = vsel %vm3458, %v3449, %v3456
      %v3460 = vrot.slane %v3454, 7
      %v3461 = vsel %vm3458, %v3454, %v3460
      %v3462 = vsel %vm3458, 1, 0
      %v3464 = vrot.slane %v3459, 7
      %vm3466 = vcmp.gt.f32.partialorder %v3449, %v3464
      %v3467 = vsel %vm3466, %v3449, %v3464
      %v3468 = vrot.slane %v3461, 7
      %v3469 = vsel %vm3466, %v3454, %v3468
      %v3470 = vrot.slane %v3462, 7
      %v3471 = vsel %vm3466, 2, %v3470
      %v3473 = vrot.slane %v3467, 7
      %vm3475 = vcmp.gt.f32.partialorder %v3449, %v3473
      %v3476 = vsel %vm3475, %v3449, %v3473
      %v3477 = vrot.slane %v3469, 7
      %v3478 = vsel %vm3475, %v3454, %v3477
      %v3479 = vrot.slane %v3471, 7
      %v3480 = vsel %vm3475, 3, %v3479
      %v3481 = vsel %vm3458, 5, 4
      %v3482 = vrot.slane %v3481, 7
      %v3483 = vsel %vm3466, 6, %v3482
      %v3484 = vrot.slane %v3483, 7
      %v3485 = vsel %vm3475, 7, %v3484
      %vm3486 = vcmp.eq.s32.totalorder %v131, 0
      %v3487 = vlaneseq
      %v3488 = vshrl.u32 %v3487, 7
      %v3489 = vsub.s32 3, %v3488
      %v3490 = vrot.slane %v3304, %v3489
      %v3491 = vsel %vm3486, %v3490, 0
      %v3492 = vlaneseq
      %v3493 = vshrl.u32 %v3492, 7
      %v3494 = vsub.s32 3, %v3493
      %v3495 = vrot.slane %v3306, %v3494
      %v3496 = vsel %vm3486, %v3495, 0
      %v3497 = vlaneseq
      %v3498 = vshrl.u32 %v3497, 7
      %v3499 = vsub.s32 3, %v3498
      %v3500 = vrot.slane %v3302, %v3499
      %v3501 = vsel %vm3486, %v3500, 0.0
      %vm3502 = vcmp.eq.s32.totalorder %v128, 0
      %3503 = vset.pattern.permute.xlu0 0
      %3504 = vperm.xlu0 %3503, %v3304
      %v3505 = vpop.permute.xlu0 %3504
      %v3506 = vsel %vm3502, %v3505, 0
      %3507 = vset.pattern.permute.xlu0 0
      %3508 = vperm.xlu0 %3507, %v3306
      %v3509 = vpop.permute.xlu0 %3508
      %v3510 = vsel %vm3502, %v3509, 0
      %vm3511 = vcmp.eq.s32.totalorder %v131, 1
      %v3512 = vlaneseq
      %v3513 = vshrl.u32 %v3512, 7
      %v3514 = vsub.s32 3, %v3513
      %v3515 = vrot.slane %v3362, %v3514
      %v3516 = vsel %vm3511, %v3515, %v3491
      %v3517 = vlaneseq
      %v3518 = vshrl.u32 %v3517, 7
      %v3519 = vsub.s32 3, %v3518
      %v3520 = vrot.slane %v3364, %v3519
      %v3521 = vsel %vm3511, %v3520, %v3496
      %v3522 = vlaneseq
      %v3523 = vshrl.u32 %v3522, 7
      %v3524 = vsub.s32 3, %v3523
      %v3525 = vrot.slane %v3360, %v3524
      %v3526 = vsel %vm3511, %v3525, %v3501
      %vm3527 = vcmp.eq.s32.totalorder %v128, 1
      %3528 = vset.pattern.permute.xlu0 0
      %3529 = vperm.xlu0 %3528, %v3362
      %v3530 = vpop.permute.xlu0 %3529
      %v3531 = vsel %vm3527, %v3530, %v3506
      %3532 = vset.pattern.permute.xlu0 0
      %3533 = vperm.xlu0 %3532, %v3364
      %v3534 = vpop.permute.xlu0 %3533
      %v3535 = vsel %vm3527, %v3534, %v3510
      %vm3536 = vcmp.eq.s32.totalorder %v131, 2
      %v3537 = vlaneseq
      %v3538 = vshrl.u32 %v3537, 7
      %v3539 = vsub.s32 3, %v3538
      %v3540 = vrot.slane %v3420, %v3539
      %v3541 = vsel %vm3536, %v3540, %v3516
      %v3542 = vlaneseq
      %v3543 = vshrl.u32 %v3542, 7
      %v3544 = vsub.s32 3, %v3543
      %v3545 = vrot.slane %v3422, %v3544
      %v3546 = vsel %vm3536, %v3545, %v3521
      %v3547 = vlaneseq
      %v3548 = vshrl.u32 %v3547, 7
      %v3549 = vsub.s32 3, %v3548
      %v3550 = vrot.slane %v3418, %v3549
      %v3551 = vsel %vm3536, %v3550, %v3526
      %vm3552 = vcmp.eq.s32.totalorder %v128, 2
      %3553 = vset.pattern.permute.xlu0 0
      %3554 = vperm.xlu0 %3553, %v3420
      %v3555 = vpop.permute.xlu0 %3554
      %v3556 = vsel %vm3552, %v3555, %v3531
      %3557 = vset.pattern.permute.xlu0 0
      %3558 = vperm.xlu0 %3557, %v3422
      %v3559 = vpop.permute.xlu0 %3558
      %v3560 = vsel %vm3552, %v3559, %v3535
      %vm3561 = vcmp.eq.s32.totalorder %v131, 3
      %v3562 = vlaneseq
      %v3563 = vshrl.u32 %v3562, 7
      %v3564 = vsub.s32 3, %v3563
      %v3565 = vrot.slane %v3478, %v3564
      %v3566 = vsel %vm3561, %v3565, %v3541
      %v3567 = vlaneseq
      %v3568 = vshrl.u32 %v3567, 7
      %v3569 = vsub.s32 3, %v3568
      %v3570 = vrot.slane %v3480, %v3569
      %v3571 = vsel %vm3561, %v3570, %v3546
      %v3572 = vlaneseq
      %v3573 = vshrl.u32 %v3572, 7
      %v3574 = vsub.s32 3, %v3573
      %v3575 = vrot.slane %v3476, %v3574
      %v3576 = vsel %vm3561, %v3575, %v3551
      %vm3577 = vcmp.eq.s32.totalorder %v128, 3
      %3578 = vset.pattern.permute.xlu0 0
      %3579 = vperm.xlu0 %3578, %v3478
      %v3580 = vpop.permute.xlu0 %3579
      %v3581 = vsel %vm3577, %v3580, %v3556
      %3582 = vset.pattern.permute.xlu0 0
      %3583 = vperm.xlu0 %3582, %v3480
      %v3584 = vpop.permute.xlu0 %3583
      %v3585 = vsel %vm3577, %v3584, %v3560
      %vm3586 = vcmp.eq.s32.totalorder %v131, 4
      %v3587 = vlaneseq
      %v3588 = vshrl.u32 %v3587, 7
      %v3589 = vsub.s32 7, %v3588
      %v3590 = vrot.slane %v3304, %v3589
      %v3591 = vsel %vm3586, %v3590, %v3566
      %v3592 = vlaneseq
      %v3593 = vshrl.u32 %v3592, 7
      %v3594 = vsub.s32 7, %v3593
      %v3595 = vrot.slane %v3321, %v3594
      %v3596 = vsel %vm3586, %v3595, %v3571
      %v3597 = vlaneseq
      %v3598 = vshrl.u32 %v3597, 7
      %v3599 = vsub.s32 7, %v3598
      %v3600 = vrot.slane %v3302, %v3599
      %v3601 = vsel %vm3586, %v3600, %v3576
      %vm3602 = vcmp.eq.s32.totalorder %v128, 4
      %v3603 = vrot.slane %v3581, 4
      %v3604 = vsel %vm3602, %v3505, %v3603
      %3605 = vset.pattern.permute.xlu0 0
      %3606 = vperm.xlu0 %3605, %v3321
      %v3607 = vpop.permute.xlu0 %3606
      %v3608 = vrot.slane %v3585, 4
      %v3609 = vsel %vm3602, %v3607, %v3608
      %vm3610 = vcmp.eq.s32.totalorder %v131, 5
      %v3611 = vlaneseq
      %v3612 = vshrl.u32 %v3611, 7
      %v3613 = vsub.s32 7, %v3612
      %v3614 = vrot.slane %v3362, %v3613
      %v3615 = vsel %vm3610, %v3614, %v3591
      %v3616 = vlaneseq
      %v3617 = vshrl.u32 %v3616, 7
      %v3618 = vsub.s32 7, %v3617
      %v3619 = vrot.slane %v3379, %v3618
      %v3620 = vsel %vm3610, %v3619, %v3596
      %v3621 = vlaneseq
      %v3622 = vshrl.u32 %v3621, 7
      %v3623 = vsub.s32 7, %v3622
      %v3624 = vrot.slane %v3360, %v3623
      %v3625 = vsel %vm3610, %v3624, %v3601
      %vm3626 = vcmp.eq.s32.totalorder %v128, 5
      %v3627 = vsel %vm3626, %v3530, %v3604
      %3628 = vset.pattern.permute.xlu0 0
      %3629 = vperm.xlu0 %3628, %v3379
      %v3630 = vpop.permute.xlu0 %3629
      %v3631 = vsel %vm3626, %v3630, %v3609
      %vm3632 = vcmp.eq.s32.totalorder %v131, 6
      %v3633 = vlaneseq
      %v3634 = vshrl.u32 %v3633, 7
      %v3635 = vsub.s32 7, %v3634
      %v3636 = vrot.slane %v3420, %v3635
      %v3637 = vsel %vm3632, %v3636, %v3615
      %v3638 = vlaneseq
      %v3639 = vshrl.u32 %v3638, 7
      %v3640 = vsub.s32 7, %v3639
      %v3641 = vrot.slane %v3437, %v3640
      %v3642 = vsel %vm3632, %v3641, %v3620
      %v3643 = vlaneseq
      %v3644 = vshrl.u32 %v3643, 7
      %v3645 = vsub.s32 7, %v3644
      %v3646 = vrot.slane %v3418, %v3645
      %v3647 = vsel %vm3632, %v3646, %v3625
      %vm3648 = vcmp.eq.s32.totalorder %v128, 6
      %v3649 = vsel %vm3648, %v3555, %v3627
      %3650 = vset.pattern.permute.xlu0 0
      %3651 = vperm.xlu0 %3650, %v3437
      %v3652 = vpop.permute.xlu0 %3651
      %v3653 = vsel %vm3648, %v3652, %v3631
      %vm3654 = vcmp.eq.s32.totalorder %v131, 7
      %v3655 = vlaneseq
      %v3656 = vshrl.u32 %v3655, 7
      %v3657 = vsub.s32 7, %v3656
      %v3658 = vrot.slane %v3478, %v3657
      %v3659 = vsel %vm3654, %v3658, %v3637
      %v3660 = vlaneseq
      %v3661 = vshrl.u32 %v3660, 7
      %v3662 = vsub.s32 7, %v3661
      %v3663 = vrot.slane %v3485, %v3662
      %v3664 = vsel %vm3654, %v3663, %v3642
      %v3665 = vlaneseq
      %v3666 = vshrl.u32 %v3665, 7
      %v3667 = vsub.s32 7, %v3666
      %v3668 = vrot.slane %v3476, %v3667
      %v3669 = vsel %vm3654, %v3668, %v3647
      %vm3670 = vcmp.eq.s32.totalorder %v128, 7
      %v3671 = vsel %vm3670, %v3580, %v3649
      %3672 = vset.pattern.permute.xlu0 0
      %3673 = vperm.xlu0 %3672, %v3485
      %v3674 = vpop.permute.xlu0 %3673
      %v3675 = vsel %vm3670, %v3674, %v3653
      %vm3676 = vcmp.eq.s32.totalorder %v3664, 0
      %v3677 = vsel %vm3676, 1, 0
      %3678 = vset.pattern.permute.xlu0 0
      %3679 = vperm.xlu0 %3678, %v3677
      %v3680 = vpop.permute.xlu0 %3679
      %vm3681 = vcmp.eq.s32.totalorder %v3680, 1
      %v3682 = vlaneseq
      %v3683 = vshrl.u32 %v3682, 7
      %v3684 = vsub.s32 0, %v3683
      %v3685 = vrot.slane %v3135, %v3684
      %v3686 = vsel %vm3681, %v3685, 0.0
      %v3687 = vadd.f32 %v3686, 0.0
      %v3688 = vlaneseq
      %v3689 = vshrl.u32 %v3688, 7
      %v3690 = vsub.s32 0, %v3689
      %v3691 = vrot.slane %v3133, %v3690
      %v3692 = vsel %vm3681, %v3691, 0.0
      %v3693 = vadd.f32 %v3692, 0.0
      %vm3694 = vcmp.eq.s32.totalorder %v3664, 1
      %v3695 = vsel %vm3694, 1, 0
      %3696 = vset.pattern.permute.xlu0 0
      %3697 = vperm.xlu0 %3696, %v3695
      %v3698 = vpop.permute.xlu0 %3697
      %vm3699 = vcmp.eq.s32.totalorder %v3698, 1
      %v3700 = vlaneseq
      %v3701 = vshrl.u32 %v3700, 7
      %v3702 = vsub.s32 1, %v3701
      %v3703 = vrot.slane %v3135, %v3702
      %v3704 = vsel %vm3699, %v3703, 0.0
      %v3705 = vadd.f32 %v3687, %v3704
      %v3706 = vlaneseq
      %v3707 = vshrl.u32 %v3706, 7
      %v3708 = vsub.s32 1, %v3707
      %v3709 = vrot.slane %v3133, %v3708
      %v3710 = vsel %vm3699, %v3709, 0.0
      %v3711 = vadd.f32 %v3693, %v3710
      %vm3712 = vcmp.eq.s32.totalorder %v3664, 2
      %v3713 = vsel %vm3712, 1, 0
      %3714 = vset.pattern.permute.xlu0 0
      %3715 = vperm.xlu0 %3714, %v3713
      %v3716 = vpop.permute.xlu0 %3715
      %vm3717 = vcmp.eq.s32.totalorder %v3716, 1
      %v3718 = vlaneseq
      %v3719 = vshrl.u32 %v3718, 7
      %v3720 = vsub.s32 2, %v3719
      %v3721 = vrot.slane %v3135, %v3720
      %v3722 = vsel %vm3717, %v3721, 0.0
      %v3723 = vadd.f32 %v3705, %v3722
      %v3724 = vlaneseq
      %v3725 = vshrl.u32 %v3724, 7
      %v3726 = vsub.s32 2, %v3725
      %v3727 = vrot.slane %v3133, %v3726
      %v3728 = vsel %vm3717, %v3727, 0.0
      %v3729 = vadd.f32 %v3711, %v3728
      %vm3730 = vcmp.eq.s32.totalorder %v3664, 3
      %v3731 = vsel %vm3730, 1, 0
      %3732 = vset.pattern.permute.xlu0 0
      %3733 = vperm.xlu0 %3732, %v3731
      %v3734 = vpop.permute.xlu0 %3733
      %vm3735 = vcmp.eq.s32.totalorder %v3734, 1
      %v3736 = vlaneseq
      %v3737 = vshrl.u32 %v3736, 7
      %v3738 = vsub.s32 3, %v3737
      %v3739 = vrot.slane %v3135, %v3738
      %v3740 = vsel %vm3735, %v3739, 0.0
      %v3741 = vadd.f32 %v3723, %v3740
      %v3742 = vlaneseq
      %v3743 = vshrl.u32 %v3742, 7
      %v3744 = vsub.s32 3, %v3743
      %v3745 = vrot.slane %v3133, %v3744
      %v3746 = vsel %vm3735, %v3745, 0.0
      %v3747 = vadd.f32 %v3729, %v3746
      %vm3748 = vcmp.eq.s32.totalorder %v3664, 4
      %v3749 = vsel %vm3748, 1, 0
      %3750 = vset.pattern.permute.xlu0 0
      %3751 = vperm.xlu0 %3750, %v3749
      %v3752 = vpop.permute.xlu0 %3751
      %vm3753 = vcmp.eq.s32.totalorder %v3752, 1
      %v3754 = vlaneseq
      %v3755 = vshrl.u32 %v3754, 7
      %v3756 = vsub.s32 4, %v3755
      %v3757 = vrot.slane %v3135, %v3756
      %v3758 = vsel %vm3753, %v3757, 0.0
      %v3759 = vadd.f32 %v3741, %v3758
      %v3760 = vlaneseq
      %v3761 = vshrl.u32 %v3760, 7
      %v3762 = vsub.s32 4, %v3761
      %v3763 = vrot.slane %v3133, %v3762
      %v3764 = vsel %vm3753, %v3763, 0.0
      %v3765 = vadd.f32 %v3747, %v3764
      %vm3766 = vcmp.eq.s32.totalorder %v3664, 5
      %v3767 = vsel %vm3766, 1, 0
      %3768 = vset.pattern.permute.xlu0 0
      %3769 = vperm.xlu0 %3768, %v3767
      %v3770 = vpop.permute.xlu0 %3769
      %vm3771 = vcmp.eq.s32.totalorder %v3770, 1
      %v3772 = vlaneseq
      %v3773 = vshrl.u32 %v3772, 7
      %v3774 = vsub.s32 5, %v3773
      %v3775 = vrot.slane %v3135, %v3774
      %v3776 = vsel %vm3771, %v3775, 0.0
      %v3777 = vadd.f32 %v3759, %v3776
      %v3778 = vlaneseq
      %v3779 = vshrl.u32 %v3778, 7
      %v3780 = vsub.s32 5, %v3779
      %v3781 = vrot.slane %v3133, %v3780
      %v3782 = vsel %vm3771, %v3781, 0.0
      %v3783 = vadd.f32 %v3765, %v3782
      %vm3784 = vcmp.eq.s32.totalorder %v3664, 6
      %v3785 = vsel %vm3784, 1, 0
      %3786 = vset.pattern.permute.xlu0 0
      %3787 = vperm.xlu0 %3786, %v3785
      %v3788 = vpop.permute.xlu0 %3787
      %vm3789 = vcmp.eq.s32.totalorder %v3788, 1
      %v3790 = vlaneseq
      %v3791 = vshrl.u32 %v3790, 7
      %v3792 = vsub.s32 6, %v3791
      %v3793 = vrot.slane %v3135, %v3792
      %v3794 = vsel %vm3789, %v3793, 0.0
      %v3795 = vadd.f32 %v3777, %v3794
      %v3796 = vlaneseq
      %v3797 = vshrl.u32 %v3796, 7
      %v3798 = vsub.s32 6, %v3797
      %v3799 = vrot.slane %v3133, %v3798
      %v3800 = vsel %vm3789, %v3799, 0.0
      %v3801 = vadd.f32 %v3783, %v3800
      %vm3802 = vcmp.eq.s32.totalorder %v3664, 7
      %v3803 = vsel %vm3802, 1, 0
      %3804 = vset.pattern.permute.xlu0 0
      %3805 = vperm.xlu0 %3804, %v3803
      %v3806 = vpop.permute.xlu0 %3805
      %vm3807 = vcmp.eq.s32.totalorder %v3806, 1
      %v3808 = vlaneseq
      %v3809 = vshrl.u32 %v3808, 7
      %v3810 = vsub.s32 7, %v3809
      %v3811 = vrot.slane %v3135, %v3810
      %v3812 = vsel %vm3807, %v3811, 0.0
      %v3813 = vadd.f32 %v3795, %v3812
      %v3814 = vlaneseq
      %v3815 = vshrl.u32 %v3814, 7
      %v3816 = vsub.s32 7, %v3815
      %v3817 = vrot.slane %v3133, %v3816
      %v3818 = vsel %vm3807, %v3817, 0.0
      %v3819 = vadd.f32 %v3801, %v3818
      %3820 = vst [vmem:[#allocation2] sm:$0xff] %v3813
      %3821 = vst [vmem:[#allocation3] sm:$0xff] %v3819
      %3822 = vst.msk [vmem:[#allocation4] sm:$0xff] %vm124, %v3659
      %3823 = vst.msk [vmem:[#allocation5] sm:$0xff] %vm124, %v3669
      %s3824 = scalar_lea.vmem [#allocation18], %s145
      %vm3825 = vcmask 64519
      %3826 = vst.msk [vmem:[%s3824 - $0x7] sm:$0x80] %vm3825, %v3671
      %s3827 = scalar_lea.vmem [#allocation19], %s145
      %3828 = vst.msk [vmem:[%s3827 - $0x7] sm:$0x80] %vm3825, %v3675
    $region70: #{tpu_custom_call.1} parent=1 // loop_footer
      %s149 = sadd.s32 1, %s145
    $region71: #{tpu_custom_call.1} parent=1 // loop_footer_branch
      %144 = sbr.rel target = $region67
    $region72: #{tpu_custom_call.1} parent=1 // loop_exit
      _
    // Predicated region
    $region73: #{tpu_custom_call.1} parent=1 // pred_check
      _
    $region74: #{tpu_custom_call.1} parent=1 // pred_check_branch
      %3830 = sbr.rel (0) target = $region76
    $region75: #{tpu_custom_call.1} parent=1 // pred_region
      %s3832 = ssub.s32 128, 128
      %3833 = vsyncadd [#allocation9], %s3832
      %s3835 = sshll.u32 [#allocation18], 4
      %s3836 = int_to_ptr.vmem [resolvable:$true] %s3835
      %3838 = dma.vmem_to_hbm [thread:$0]  %s3836, 128, %s10, [#allocation9]
    $region76: #{tpu_custom_call.1} parent=1 // pred_fallthru
      _
    // Predicated region
    $region77: #{tpu_custom_call.1} parent=1 // pred_check
      _
    $region78: #{tpu_custom_call.1} parent=1 // pred_check_branch
      %3840 = sbr.rel (0) target = $region80
    $region79: #{tpu_custom_call.1} parent=1 // pred_region
      %s3842 = ssub.s32 128, 128
      %3843 = vsyncadd [#allocation20], %s3842
      %s3845 = sshll.u32 [#allocation19], 4
      %s3846 = int_to_ptr.vmem [resolvable:$true] %s3845
      %3848 = dma.vmem_to_hbm [thread:$0]  %s3846, 128, %s11, [#allocation20]
    $region80: #{tpu_custom_call.1} parent=1 // pred_fallthru
      _
    // Predicated region
    $region81: #{tpu_custom_call.1} parent=1 // pred_check
      _
    $region82: #{tpu_custom_call.1} parent=1 // pred_check_branch
      %3850 = sbr.rel (0) target = $region84
    $region83: #{tpu_custom_call.1} parent=1 // pred_region
      %3851 = dma.done [#allocation9], 128
    $region84: #{tpu_custom_call.1} parent=1 // pred_fallthru
      _
    // Predicated region
    $region85: #{tpu_custom_call.1} parent=1 // pred_check
      _
    $region86: #{tpu_custom_call.1} parent=1 // pred_check_branch
      %3853 = sbr.rel (0) target = $region88
    $region87: #{tpu_custom_call.1} parent=1 // pred_region
      %3854 = dma.done [#allocation20], 128
    $region88: #{tpu_custom_call.1} parent=1 // pred_fallthru
      _
    %3855 = vsyncpa [#allocation8], 1
    %3856 = vsyncpa [#allocation11], 1
    %3857 = vsyncpa [#allocation14], 1
    %3858 = vsyncpa [#allocation17], 1
    %3859 = vsyncpa [#allocation9], 1
    %3860 = vsyncpa [#allocation20], 1

</llo_original>
